<compile_context>
chip_gen: v5e
topology: v5e:2x2
jax: 0.10.0
libtpu: 0.0.40
codegen_flags: <defaults>
</compile_context>

<pallas_src>
import functools

import jax
import jax.numpy as jnp
from jax.experimental import pallas as pl
from jax.experimental.pallas import tpu as pltpu

LANE = 128          # TPU lane width; channels are padded to this
SUB = 8             # sublane tile
_EPS = 1e-5


def _sign(v):
    # torch.sign semantics: sign(0) == 0.
    return jnp.where(v > 0, 1.0, jnp.where(v < 0, -1.0, 0.0))


# ----------------------------------------------------------------------------
# Fused block kernel: one grid step == one batch image.  All channel axes are
# padded to LANE so every tensor in the kernel is lane-dense.
# ----------------------------------------------------------------------------
def _fused_block_kernel(*refs, H, W, C, KH, KW, downsample):
    if downsample:
        (x_ref, s1_ref, b1_ref, w1_ref, s2_ref, b2_ref, w2_ref,
         sd_ref, bd_ref, wd_ref, o_ref) = refs
    else:
        (x_ref, s1_ref, b1_ref, w1_ref, s2_ref, b2_ref, w2_ref,
         o_ref) = refs

    x = x_ref[0]                                     # (H, W, C) f32

    def binarize(v, s_ref, b_ref):
        # Eval-mode BatchNorm folded into scale/shift, then sign(); padded
        # lanes stay exactly 0 (scale = shift = 0 there).
        return _sign(v * s_ref[...] + b_ref[...]).astype(jnp.bfloat16)

    def conv3x3(xb, w_ref):
        # xb: (H, W, C) bf16 binarised activations.
        # Zero halo built with tile-aligned concats only: the H halo lives on
        # the untiled leading dim, the W halo uses 8-wide (sublane-aligned)
        # zero blocks, so no masked/unaligned concat is ever needed.
        zrow = jnp.zeros((KH // 2, W, C), jnp.bfloat16)
        xh = jnp.concatenate([zrow, xb, zrow], axis=0)           # (H+2, W, C)
        zcol = jnp.zeros((H + KH - 1, SUB, C), jnp.bfloat16)
        xp = jnp.concatenate([zcol, xh, zcol], axis=1)           # (H+2, W+16, C)

        # Three W-shifted views (static slices at sublane offsets 7/8/9); the
        # H shifts are free slices along the untiled leading dim.
        off = SUB - KW // 2
        shifted = [xp[:, off + kw: off + kw + W, :] for kw in range(KW)]
        taps = [shifted[kw][kh:kh + H]
                for kh in range(KH) for kw in range(KW)]         # kh-major order
        patches = jnp.concatenate(taps, axis=-1).reshape(H * W, KH * KW * C)
        # Single im2col matmul on the MXU, f32 accumulation.
        return jnp.dot(patches, w_ref[...], preferred_element_type=jnp.float32)

    # conv1: BN -> sign -> 3x3 conv (stride 1, pad 1) -> ReLU
    xb1 = binarize(x, s1_ref, b1_ref)
    h1 = jnp.maximum(conv3x3(xb1, w1_ref), 0.0).reshape(H, W, C)

    # conv2: BN -> sign -> 3x3 conv (stride 1, pad 1), no activation
    xb2 = binarize(h1, s2_ref, b2_ref)
    h2 = conv3x3(xb2, w2_ref)                        # (H*W, C) f32

    # identity branch: BN -> sign -> 1x1 conv (downsample) or raw input
    if downsample:
        xbd = binarize(x, sd_ref, bd_ref)
        ident = jnp.dot(xbd.reshape(H * W, C), wd_ref[...],
                        preferred_element_type=jnp.float32)
    else:
        ident = x.reshape(H * W, C)

    # residual add + final ReLU in f32; lane-dense (C = 128) store.
    o_ref[0] = jnp.maximum(h2 + ident, 0.0).reshape(H, W, C)


# ----------------------------------------------------------------------------
# Parameter construction (synthetic, deterministic) and kernel-ready packing.
# ----------------------------------------------------------------------------
def make_params(key, in_ch, out_ch, downsample):
    """Synthetic parameters in PyTorch layouts (OIHW weights, per-channel BN)."""
    ks = jax.random.split(key, 20)
    p = {}

    def bn(i, c):
        gamma = 1.0 + 0.1 * jax.random.normal(ks[i + 0], (c,), jnp.float32)
        beta = 0.1 * jax.random.normal(ks[i + 1], (c,), jnp.float32)
        mean = 0.1 * jax.random.normal(ks[i + 2], (c,), jnp.float32)
        var = jnp.abs(1.0 + 0.1 * jax.random.normal(ks[i + 3], (c,), jnp.float32))
        return gamma, beta, mean, var

    p["w1_oihw"] = 0.1 * jax.random.normal(ks[16], (out_ch, in_ch, 3, 3), jnp.float32)
    p["w2_oihw"] = 0.1 * jax.random.normal(ks[17], (out_ch, out_ch, 3, 3), jnp.float32)
    p["bn1"] = bn(0, in_ch)
    p["bn2"] = bn(4, out_ch)
    if downsample:
        p["wd_oihw"] = 0.1 * jax.random.normal(ks[18], (out_ch, in_ch, 1, 1), jnp.float32)
        p["bnd"] = bn(8, in_ch)
    return p


def _bn_scale_shift(gamma, beta, mean, var):
    scale = gamma / jnp.sqrt(var + _EPS)
    shift = beta - mean * scale
    return scale, shift


def _pad_last(a, target):
    pads = [(0, 0)] * (a.ndim - 1) + [(0, target - a.shape[-1])]
    return jnp.pad(a, pads)


def _prep_bn(bn_tuple):
    scale, shift = _bn_scale_shift(*bn_tuple)
    return (_pad_last(scale, LANE).reshape(1, LANE).astype(jnp.float32),
            _pad_last(shift, LANE).reshape(1, LANE).astype(jnp.float32))


def _prep_conv_w(w_oihw):
    # OIHW -> HWIO, pad Cin/Cout to LANE, flatten to (KH*KW*LANE, LANE), bf16.
    w = jnp.transpose(w_oihw, (2, 3, 1, 0))
    kh, kw, cin, cout = w.shape
    w = jnp.pad(w, ((0, 0), (0, 0), (0, LANE - cin), (0, LANE - cout)))
    return w.reshape(kh * kw * LANE, LANE).astype(jnp.bfloat16)


def prepare_params(p, downsample):
    """One-time conversion to the padded / bf16 layouts the kernel consumes."""
    out = {
        "w1": _prep_conv_w(p["w1_oihw"]),
        "w2": _prep_conv_w(p["w2_oihw"]),
    }
    out["s1"], out["b1"] = _prep_bn(p["bn1"])
    out["s2"], out["b2"] = _prep_bn(p["bn2"])
    if downsample:
        out["wd"] = _prep_conv_w(p["wd_oihw"])
        out["sd"], out["bd"] = _prep_bn(p["bnd"])
    return out


# ----------------------------------------------------------------------------
# Forward pass: one pallas_call for the whole block.
# ----------------------------------------------------------------------------
@functools.partial(jax.jit, static_argnames=("out_ch", "downsample"))
def bin_basic_block_forward(x_nchw, prepared, out_ch, downsample):
    N, _, H, W = x_nchw.shape
    KH = KW = 3  # module defaults: kernel_size=3, stride=1, padding=1

    # NCHW -> NHWC, single cast, pad channels to the 128-lane width.
    x = jnp.transpose(x_nchw.astype(jnp.float32), (0, 2, 3, 1))
    x = _pad_last(x, LANE)                           # (N, H, W, 128)

    vec_spec = pl.BlockSpec((1, LANE), lambda n: (0, 0))
    w3_spec = pl.BlockSpec((KH * KW * LANE, LANE), lambda n: (0, 0))
    args = [x, prepared["s1"], prepared["b1"], prepared["w1"],
            prepared["s2"], prepared["b2"], prepared["w2"]]
    in_specs = [
        pl.BlockSpec((1, H, W, LANE), lambda n: (n, 0, 0, 0)),
        vec_spec, vec_spec, w3_spec, vec_spec, vec_spec, w3_spec,
    ]
    if downsample:
        args += [prepared["sd"], prepared["bd"], prepared["wd"]]
        in_specs += [vec_spec, vec_spec,
                     pl.BlockSpec((LANE, LANE), lambda n: (0, 0))]

    kernel = functools.partial(_fused_block_kernel, H=H, W=W, C=LANE,
                               KH=KH, KW=KW, downsample=downsample)

    out = pl.pallas_call(
        kernel,
        out_shape=jax.ShapeDtypeStruct((N, H, W, LANE), jnp.float32),
        grid_spec=pltpu.PrefetchScalarGridSpec(
            num_scalar_prefetch=0,
            # TODO(synk): for ResNet-scale H/W, add an H-tile grid axis with a
            # (KH-1) halo so v7x's 64 MiB VMEM and 2 TensorCores stay fed; at
            # these small shapes one image per step already fits easily.
            grid=(N,),
            in_specs=in_specs,
            out_specs=pl.BlockSpec((1, H, W, LANE), lambda n: (n, 0, 0, 0)),
        ),
        compiler_params=pltpu.CompilerParams(
            dimension_semantics=("parallel",),
            vmem_limit_bytes=32 * 1024 * 1024),
    )(*args)

    # Drop channel padding, NHWC -> NCHW (matching the PyTorch module output).
    return jnp.transpose(out[..., :out_ch], (0, 3, 1, 2))


if __name__ == "__main__":
    key = jax.random.PRNGKey(0)
    k_x, k_p, k_p2 = jax.random.split(key, 3)

    N, IN_CH, OUT_CH, H, W = 2, 4, 8, 16, 16

    # Downsample variant (1x1 projection on the identity branch, stride=1).
    x = jax.random.normal(k_x, (N, IN_CH, H, W), jnp.float32)
    params = make_params(k_p, IN_CH, OUT_CH, downsample=True)
    prepared = prepare_params(params, downsample=True)
    y = bin_basic_block_forward(x, prepared, out_ch=OUT_CH, downsample=True)
    y = jax.block_until_ready(y)
    assert y.shape == (N, OUT_CH, H, W)
    assert bool(jnp.all(y >= 0.0))           # final ReLU
    assert bool(jnp.all(jnp.isfinite(y)))

    # Identity variant (in_ch == out_ch, no projection).
    x2 = jax.random.normal(k_x, (N, OUT_CH, H, W), jnp.float32)
    params2 = make_params(k_p2, OUT_CH, OUT_CH, downsample=False)
    prepared2 = prepare_params(params2, downsample=False)
    y2 = bin_basic_block_forward(x2, prepared2, out_ch=OUT_CH, downsample=False)
    y2 = jax.block_until_ready(y2)
    assert y2.shape == (N, OUT_CH, H, W)
    assert bool(jnp.all(y2 >= 0.0))

    print("KERNEL_OK")
</pallas_src>

<mosaic_0001>
module attributes {stable_mosaic.version = 11 : i64} {
  func.func @_fused_block_kernel(%arg0: i32, %arg1: memref<1x16x16x128xf32, #tpu.memory_space<vmem>>, %arg2: memref<1x128xf32, #tpu.memory_space<vmem>>, %arg3: memref<1x128xf32, #tpu.memory_space<vmem>>, %arg4: memref<1152x128xbf16, #tpu.memory_space<vmem>>, %arg5: memref<1x128xf32, #tpu.memory_space<vmem>>, %arg6: memref<1x128xf32, #tpu.memory_space<vmem>>, %arg7: memref<1152x128xbf16, #tpu.memory_space<vmem>>, %arg8: memref<1x128xf32, #tpu.memory_space<vmem>>, %arg9: memref<1x128xf32, #tpu.memory_space<vmem>>, %arg10: memref<128x128xbf16, #tpu.memory_space<vmem>>, %arg11: memref<1x16x16x128xf32, #tpu.memory_space<vmem>>) attributes {dimension_semantics = [#tpu.dimension_semantics<parallel>], iteration_bounds = array<i64: 2>, scalar_prefetch = 0 : i64, scratch_operands = 0 : i64, tpu.core_type = #tpu.core_type<tc>, window_params = [{transform_indices = @transform_0, window_bounds = array<i64: 1, 16, 16, 128>}, {pipeline_mode = #tpu.pipeline_mode<synchronous>, transform_indices = @transform_1, window_bounds = array<i64: 1, 128>}, {pipeline_mode = #tpu.pipeline_mode<synchronous>, transform_indices = @transform_2, window_bounds = array<i64: 1, 128>}, {pipeline_mode = #tpu.pipeline_mode<synchronous>, transform_indices = @transform_3, window_bounds = array<i64: 1152, 128>}, {pipeline_mode = #tpu.pipeline_mode<synchronous>, transform_indices = @transform_4, window_bounds = array<i64: 1, 128>}, {pipeline_mode = #tpu.pipeline_mode<synchronous>, transform_indices = @transform_5, window_bounds = array<i64: 1, 128>}, {pipeline_mode = #tpu.pipeline_mode<synchronous>, transform_indices = @transform_6, window_bounds = array<i64: 1152, 128>}, {pipeline_mode = #tpu.pipeline_mode<synchronous>, transform_indices = @transform_7, window_bounds = array<i64: 1, 128>}, {pipeline_mode = #tpu.pipeline_mode<synchronous>, transform_indices = @transform_8, window_bounds = array<i64: 1, 128>}, {pipeline_mode = #tpu.pipeline_mode<synchronous>, transform_indices = @transform_9, window_bounds = array<i64: 128, 128>}, {transform_indices = @transform_10, window_bounds = array<i64: 1, 16, 16, 128>}]} {
    %c0 = arith.constant 0 : index
    %c0_0 = arith.constant 0 : index
    %c0_1 = arith.constant 0 : index
    %c0_2 = arith.constant 0 : index
    %0 = vector.load %arg1[%c0, %c0_0, %c0_1, %c0_2] : memref<1x16x16x128xf32, #tpu.memory_space<vmem>>, vector<1x16x16x128xf32>
    %1 = vector.shape_cast %0 : vector<1x16x16x128xf32> to vector<16x16x128xf32>
    %c0_3 = arith.constant 0 : index
    %c0_4 = arith.constant 0 : index
    %2 = vector.load %arg2[%c0_3, %c0_4] : memref<1x128xf32, #tpu.memory_space<vmem>>, vector<1x128xf32>
    %3 = vector.shape_cast %2 : vector<1x128xf32> to vector<1x1x128xf32>
    %4 = vector.broadcast %3 : vector<1x1x128xf32> to vector<16x16x128xf32>
    %5 = arith.mulf %1, %4 : vector<16x16x128xf32>
    %c0_5 = arith.constant 0 : index
    %c0_6 = arith.constant 0 : index
    %6 = vector.load %arg3[%c0_5, %c0_6] : memref<1x128xf32, #tpu.memory_space<vmem>>, vector<1x128xf32>
    %7 = vector.shape_cast %6 : vector<1x128xf32> to vector<1x1x128xf32>
    %8 = vector.broadcast %7 : vector<1x1x128xf32> to vector<16x16x128xf32>
    %9 = arith.addf %5, %8 : vector<16x16x128xf32>
    %cst = arith.constant 0.000000e+00 : f32
    %10 = vector.broadcast %cst : f32 to vector<16x16x128xf32>
    %11 = arith.cmpf ogt, %9, %10 : vector<16x16x128xf32>
    %cst_7 = arith.constant 0.000000e+00 : f32
    %12 = vector.broadcast %cst_7 : f32 to vector<16x16x128xf32>
    %13 = arith.cmpf olt, %9, %12 : vector<16x16x128xf32>
    %cst_8 = arith.constant -1.000000e+00 : f32
    %cst_9 = arith.constant 0.000000e+00 : f32
    %14 = vector.broadcast %cst_8 : f32 to vector<16x16x128xf32>
    %15 = vector.broadcast %cst_9 : f32 to vector<16x16x128xf32>
    %16 = arith.select %13, %14, %15 : vector<16x16x128xi1>, vector<16x16x128xf32>
    %cst_10 = arith.constant 1.000000e+00 : f32
    %17 = vector.broadcast %cst_10 : f32 to vector<16x16x128xf32>
    %18 = arith.select %11, %17, %16 : vector<16x16x128xi1>, vector<16x16x128xf32>
    %19 = arith.truncf %18 : vector<16x16x128xf32> to vector<16x16x128xbf16>
    %cst_11 = arith.constant 0.000000e+00 : bf16
    %20 = vector.broadcast %cst_11 : bf16 to vector<1x16x128xbf16>
    %21 = tpu.concatenate %20, %19, %20 in 0 : vector<1x16x128xbf16>, vector<16x16x128xbf16>, vector<1x16x128xbf16> -> vector<18x16x128xbf16>
    %cst_12 = arith.constant 0.000000e+00 : bf16
    %22 = vector.broadcast %cst_12 : bf16 to vector<18x8x128xbf16>
    %23 = tpu.concatenate %22, %21, %22 in 1 : vector<18x8x128xbf16>, vector<18x16x128xbf16>, vector<18x8x128xbf16> -> vector<18x32x128xbf16>
    %24 = vector.extract_strided_slice %23 {offsets = [0, 7, 0], sizes = [18, 16, 128], strides = [1, 1, 1]} : vector<18x32x128xbf16> to vector<18x16x128xbf16>
    %25 = vector.extract_strided_slice %23 {offsets = [0, 8, 0], sizes = [18, 16, 128], strides = [1, 1, 1]} : vector<18x32x128xbf16> to vector<18x16x128xbf16>
    %26 = vector.extract_strided_slice %23 {offsets = [0, 9, 0], sizes = [18, 16, 128], strides = [1, 1, 1]} : vector<18x32x128xbf16> to vector<18x16x128xbf16>
    %27 = vector.extract_strided_slice %24 {offsets = [0, 0, 0], sizes = [16, 16, 128], strides = [1, 1, 1]} : vector<18x16x128xbf16> to vector<16x16x128xbf16>
    %28 = vector.extract_strided_slice %25 {offsets = [0, 0, 0], sizes = [16, 16, 128], strides = [1, 1, 1]} : vector<18x16x128xbf16> to vector<16x16x128xbf16>
    %29 = vector.extract_strided_slice %26 {offsets = [0, 0, 0], sizes = [16, 16, 128], strides = [1, 1, 1]} : vector<18x16x128xbf16> to vector<16x16x128xbf16>
    %30 = vector.extract_strided_slice %24 {offsets = [1, 0, 0], sizes = [16, 16, 128], strides = [1, 1, 1]} : vector<18x16x128xbf16> to vector<16x16x128xbf16>
    %31 = vector.extract_strided_slice %25 {offsets = [1, 0, 0], sizes = [16, 16, 128], strides = [1, 1, 1]} : vector<18x16x128xbf16> to vector<16x16x128xbf16>
    %32 = vector.extract_strided_slice %26 {offsets = [1, 0, 0], sizes = [16, 16, 128], strides = [1, 1, 1]} : vector<18x16x128xbf16> to vector<16x16x128xbf16>
    %33 = vector.extract_strided_slice %24 {offsets = [2, 0, 0], sizes = [16, 16, 128], strides = [1, 1, 1]} : vector<18x16x128xbf16> to vector<16x16x128xbf16>
    %34 = vector.extract_strided_slice %25 {offsets = [2, 0, 0], sizes = [16, 16, 128], strides = [1, 1, 1]} : vector<18x16x128xbf16> to vector<16x16x128xbf16>
    %35 = vector.extract_strided_slice %26 {offsets = [2, 0, 0], sizes = [16, 16, 128], strides = [1, 1, 1]} : vector<18x16x128xbf16> to vector<16x16x128xbf16>
    %36 = tpu.concatenate %27, %28, %29, %30, %31, %32, %33, %34, %35 in 2 : vector<16x16x128xbf16>, vector<16x16x128xbf16>, vector<16x16x128xbf16>, vector<16x16x128xbf16>, vector<16x16x128xbf16>, vector<16x16x128xbf16>, vector<16x16x128xbf16>, vector<16x16x128xbf16>, vector<16x16x128xbf16> -> vector<16x16x1152xbf16>
    %37 = vector.shape_cast %36 : vector<16x16x1152xbf16> to vector<256x1152xbf16>
    %c0_13 = arith.constant 0 : index
    %c0_14 = arith.constant 0 : index
    %38 = vector.load %arg4[%c0_13, %c0_14] : memref<1152x128xbf16, #tpu.memory_space<vmem>>, vector<1152x128xbf16>
    %cst_15 = arith.constant dense<0.000000e+00> : vector<256x128xf32>
    %39 = tpu.matmul %37, %38, %cst_15 {dimension_numbers = #tpu.dot_dimension_numbers<[1], [0], [0], [1], [0, 0, 1, 1], [], []>} : vector<256x1152xbf16>, vector<1152x128xbf16>, vector<256x128xf32> -> vector<256x128xf32>
    %cst_16 = arith.constant 0.000000e+00 : f32
    %40 = vector.broadcast %cst_16 : f32 to vector<256x128xf32>
    %41 = arith.maximumf %39, %40 : vector<256x128xf32>
    %42 = vector.shape_cast %41 : vector<256x128xf32> to vector<16x16x128xf32>
    %c0_17 = arith.constant 0 : index
    %c0_18 = arith.constant 0 : index
    %43 = vector.load %arg5[%c0_17, %c0_18] : memref<1x128xf32, #tpu.memory_space<vmem>>, vector<1x128xf32>
    %44 = vector.shape_cast %43 : vector<1x128xf32> to vector<1x1x128xf32>
    %45 = vector.broadcast %44 : vector<1x1x128xf32> to vector<16x16x128xf32>
    %46 = arith.mulf %42, %45 : vector<16x16x128xf32>
    %c0_19 = arith.constant 0 : index
    %c0_20 = arith.constant 0 : index
    %47 = vector.load %arg6[%c0_19, %c0_20] : memref<1x128xf32, #tpu.memory_space<vmem>>, vector<1x128xf32>
    %48 = vector.shape_cast %47 : vector<1x128xf32> to vector<1x1x128xf32>
    %49 = vector.broadcast %48 : vector<1x1x128xf32> to vector<16x16x128xf32>
    %50 = arith.addf %46, %49 : vector<16x16x128xf32>
    %cst_21 = arith.constant 0.000000e+00 : f32
    %51 = vector.broadcast %cst_21 : f32 to vector<16x16x128xf32>
    %52 = arith.cmpf ogt, %50, %51 : vector<16x16x128xf32>
    %cst_22 = arith.constant 0.000000e+00 : f32
    %53 = vector.broadcast %cst_22 : f32 to vector<16x16x128xf32>
    %54 = arith.cmpf olt, %50, %53 : vector<16x16x128xf32>
    %cst_23 = arith.constant -1.000000e+00 : f32
    %cst_24 = arith.constant 0.000000e+00 : f32
    %55 = vector.broadcast %cst_23 : f32 to vector<16x16x128xf32>
    %56 = vector.broadcast %cst_24 : f32 to vector<16x16x128xf32>
    %57 = arith.select %54, %55, %56 : vector<16x16x128xi1>, vector<16x16x128xf32>
    %cst_25 = arith.constant 1.000000e+00 : f32
    %58 = vector.broadcast %cst_25 : f32 to vector<16x16x128xf32>
    %59 = arith.select %52, %58, %57 : vector<16x16x128xi1>, vector<16x16x128xf32>
    %60 = arith.truncf %59 : vector<16x16x128xf32> to vector<16x16x128xbf16>
    %cst_26 = arith.constant 0.000000e+00 : bf16
    %61 = vector.broadcast %cst_26 : bf16 to vector<1x16x128xbf16>
    %62 = tpu.concatenate %61, %60, %61 in 0 : vector<1x16x128xbf16>, vector<16x16x128xbf16>, vector<1x16x128xbf16> -> vector<18x16x128xbf16>
    %cst_27 = arith.constant 0.000000e+00 : bf16
    %63 = vector.broadcast %cst_27 : bf16 to vector<18x8x128xbf16>
    %64 = tpu.concatenate %63, %62, %63 in 1 : vector<18x8x128xbf16>, vector<18x16x128xbf16>, vector<18x8x128xbf16> -> vector<18x32x128xbf16>
    %65 = vector.extract_strided_slice %64 {offsets = [0, 7, 0], sizes = [18, 16, 128], strides = [1, 1, 1]} : vector<18x32x128xbf16> to vector<18x16x128xbf16>
    %66 = vector.extract_strided_slice %64 {offsets = [0, 8, 0], sizes = [18, 16, 128], strides = [1, 1, 1]} : vector<18x32x128xbf16> to vector<18x16x128xbf16>
    %67 = vector.extract_strided_slice %64 {offsets = [0, 9, 0], sizes = [18, 16, 128], strides = [1, 1, 1]} : vector<18x32x128xbf16> to vector<18x16x128xbf16>
    %68 = vector.extract_strided_slice %65 {offsets = [0, 0, 0], sizes = [16, 16, 128], strides = [1, 1, 1]} : vector<18x16x128xbf16> to vector<16x16x128xbf16>
    %69 = vector.extract_strided_slice %66 {offsets = [0, 0, 0], sizes = [16, 16, 128], strides = [1, 1, 1]} : vector<18x16x128xbf16> to vector<16x16x128xbf16>
    %70 = vector.extract_strided_slice %67 {offsets = [0, 0, 0], sizes = [16, 16, 128], strides = [1, 1, 1]} : vector<18x16x128xbf16> to vector<16x16x128xbf16>
    %71 = vector.extract_strided_slice %65 {offsets = [1, 0, 0], sizes = [16, 16, 128], strides = [1, 1, 1]} : vector<18x16x128xbf16> to vector<16x16x128xbf16>
    %72 = vector.extract_strided_slice %66 {offsets = [1, 0, 0], sizes = [16, 16, 128], strides = [1, 1, 1]} : vector<18x16x128xbf16> to vector<16x16x128xbf16>
    %73 = vector.extract_strided_slice %67 {offsets = [1, 0, 0], sizes = [16, 16, 128], strides = [1, 1, 1]} : vector<18x16x128xbf16> to vector<16x16x128xbf16>
    %74 = vector.extract_strided_slice %65 {offsets = [2, 0, 0], sizes = [16, 16, 128], strides = [1, 1, 1]} : vector<18x16x128xbf16> to vector<16x16x128xbf16>
    %75 = vector.extract_strided_slice %66 {offsets = [2, 0, 0], sizes = [16, 16, 128], strides = [1, 1, 1]} : vector<18x16x128xbf16> to vector<16x16x128xbf16>
    %76 = vector.extract_strided_slice %67 {offsets = [2, 0, 0], sizes = [16, 16, 128], strides = [1, 1, 1]} : vector<18x16x128xbf16> to vector<16x16x128xbf16>
    %77 = tpu.concatenate %68, %69, %70, %71, %72, %73, %74, %75, %76 in 2 : vector<16x16x128xbf16>, vector<16x16x128xbf16>, vector<16x16x128xbf16>, vector<16x16x128xbf16>, vector<16x16x128xbf16>, vector<16x16x128xbf16>, vector<16x16x128xbf16>, vector<16x16x128xbf16>, vector<16x16x128xbf16> -> vector<16x16x1152xbf16>
    %78 = vector.shape_cast %77 : vector<16x16x1152xbf16> to vector<256x1152xbf16>
    %c0_28 = arith.constant 0 : index
    %c0_29 = arith.constant 0 : index
    %79 = vector.load %arg7[%c0_28, %c0_29] : memref<1152x128xbf16, #tpu.memory_space<vmem>>, vector<1152x128xbf16>
    %cst_30 = arith.constant dense<0.000000e+00> : vector<256x128xf32>
    %80 = tpu.matmul %78, %79, %cst_30 {dimension_numbers = #tpu.dot_dimension_numbers<[1], [0], [0], [1], [0, 0, 1, 1], [], []>} : vector<256x1152xbf16>, vector<1152x128xbf16>, vector<256x128xf32> -> vector<256x128xf32>
    %c0_31 = arith.constant 0 : index
    %c0_32 = arith.constant 0 : index
    %81 = vector.load %arg8[%c0_31, %c0_32] : memref<1x128xf32, #tpu.memory_space<vmem>>, vector<1x128xf32>
    %82 = vector.shape_cast %81 : vector<1x128xf32> to vector<1x1x128xf32>
    %83 = vector.broadcast %82 : vector<1x1x128xf32> to vector<16x16x128xf32>
    %84 = arith.mulf %1, %83 : vector<16x16x128xf32>
    %c0_33 = arith.constant 0 : index
    %c0_34 = arith.constant 0 : index
    %85 = vector.load %arg9[%c0_33, %c0_34] : memref<1x128xf32, #tpu.memory_space<vmem>>, vector<1x128xf32>
    %86 = vector.shape_cast %85 : vector<1x128xf32> to vector<1x1x128xf32>
    %87 = vector.broadcast %86 : vector<1x1x128xf32> to vector<16x16x128xf32>
    %88 = arith.addf %84, %87 : vector<16x16x128xf32>
    %cst_35 = arith.constant 0.000000e+00 : f32
    %89 = vector.broadcast %cst_35 : f32 to vector<16x16x128xf32>
    %90 = arith.cmpf ogt, %88, %89 : vector<16x16x128xf32>
    %cst_36 = arith.constant 0.000000e+00 : f32
    %91 = vector.broadcast %cst_36 : f32 to vector<16x16x128xf32>
    %92 = arith.cmpf olt, %88, %91 : vector<16x16x128xf32>
    %cst_37 = arith.constant -1.000000e+00 : f32
    %cst_38 = arith.constant 0.000000e+00 : f32
    %93 = vector.broadcast %cst_37 : f32 to vector<16x16x128xf32>
    %94 = vector.broadcast %cst_38 : f32 to vector<16x16x128xf32>
    %95 = arith.select %92, %93, %94 : vector<16x16x128xi1>, vector<16x16x128xf32>
    %cst_39 = arith.constant 1.000000e+00 : f32
    %96 = vector.broadcast %cst_39 : f32 to vector<16x16x128xf32>
    %97 = arith.select %90, %96, %95 : vector<16x16x128xi1>, vector<16x16x128xf32>
    %98 = arith.truncf %97 : vector<16x16x128xf32> to vector<16x16x128xbf16>
    %99 = vector.shape_cast %98 : vector<16x16x128xbf16> to vector<256x128xbf16>
    %c0_40 = arith.constant 0 : index
    %c0_41 = arith.constant 0 : index
    %100 = vector.load %arg10[%c0_40, %c0_41] : memref<128x128xbf16, #tpu.memory_space<vmem>>, vector<128x128xbf16>
    %cst_42 = arith.constant dense<0.000000e+00> : vector<256x128xf32>
    %101 = tpu.matmul %99, %100, %cst_42 {dimension_numbers = #tpu.dot_dimension_numbers<[1], [0], [0], [1], [0, 0, 1, 1], [], []>} : vector<256x128xbf16>, vector<128x128xbf16>, vector<256x128xf32> -> vector<256x128xf32>
    %102 = arith.addf %80, %101 : vector<256x128xf32>
    %cst_43 = arith.constant 0.000000e+00 : f32
    %103 = vector.broadcast %cst_43 : f32 to vector<256x128xf32>
    %104 = arith.maximumf %102, %103 : vector<256x128xf32>
    %105 = vector.shape_cast %104 : vector<256x128xf32> to vector<16x16x128xf32>
    %c0_44 = arith.constant 0 : index
    %c0_45 = arith.constant 0 : index
    %c0_46 = arith.constant 0 : index
    %c0_47 = arith.constant 0 : index
    %106 = vector.load %arg11[%c0_44, %c0_45, %c0_46, %c0_47] : memref<1x16x16x128xf32, #tpu.memory_space<vmem>>, vector<1x16x16x128xf32>
    %107 = vector.shape_cast %106 : vector<1x16x16x128xf32> to vector<16x16x128xf32>
    %108 = vector.shape_cast %105 : vector<16x16x128xf32> to vector<1x16x16x128xf32>
    tpu.vector_store %arg11[%c0_44, %c0_45, %c0_46, %c0_47], %108 {strides = array<i32>} : memref<1x16x16x128xf32, #tpu.memory_space<vmem>>, vector<1x16x16x128xf32>,
    return
  }
  func.func @transform_0(%arg0: i32) -> (i32, i32, i32, i32) {
    %c0_i32 = arith.constant 0 : i32
    %c0_i32_0 = arith.constant 0 : i32
    %c0_i32_1 = arith.constant 0 : i32
    %c0_i32_2 = arith.constant 0 : i32
    return %arg0, %c0_i32, %c0_i32_0, %c0_i32_1 : i32, i32, i32, i32
  }
  func.func @transform_1(%arg0: i32) -> (i32, i32) {
    %c0_i32 = arith.constant 0 : i32
    %c0_i32_0 = arith.constant 0 : i32
    %c0_i32_1 = arith.constant 0 : i32
    return %c0_i32, %c0_i32_0 : i32, i32
  }
  func.func @transform_2(%arg0: i32) -> (i32, i32) {
    %c0_i32 = arith.constant 0 : i32
    %c0_i32_0 = arith.constant 0 : i32
    %c0_i32_1 = arith.constant 0 : i32
    return %c0_i32, %c0_i32_0 : i32, i32
  }
  func.func @transform_3(%arg0: i32) -> (i32, i32) {
    %c0_i32 = arith.constant 0 : i32
    %c0_i32_0 = arith.constant 0 : i32
    %c0_i32_1 = arith.constant 0 : i32
    return %c0_i32, %c0_i32_0 : i32, i32
  }
  func.func @transform_4(%arg0: i32) -> (i32, i32) {
    %c0_i32 = arith.constant 0 : i32
    %c0_i32_0 = arith.constant 0 : i32
    %c0_i32_1 = arith.constant 0 : i32
    return %c0_i32, %c0_i32_0 : i32, i32
  }
  func.func @transform_5(%arg0: i32) -> (i32, i32) {
    %c0_i32 = arith.constant 0 : i32
    %c0_i32_0 = arith.constant 0 : i32
    %c0_i32_1 = arith.constant 0 : i32
    return %c0_i32, %c0_i32_0 : i32, i32
  }
  func.func @transform_6(%arg0: i32) -> (i32, i32) {
    %c0_i32 = arith.constant 0 : i32
    %c0_i32_0 = arith.constant 0 : i32
    %c0_i32_1 = arith.constant 0 : i32
    return %c0_i32, %c0_i32_0 : i32, i32
  }
  func.func @transform_7(%arg0: i32) -> (i32, i32) {
    %c0_i32 = arith.constant 0 : i32
    %c0_i32_0 = arith.constant 0 : i32
    %c0_i32_1 = arith.constant 0 : i32
    return %c0_i32, %c0_i32_0 : i32, i32
  }
  func.func @transform_8(%arg0: i32) -> (i32, i32) {
    %c0_i32 = arith.constant 0 : i32
    %c0_i32_0 = arith.constant 0 : i32
    %c0_i32_1 = arith.constant 0 : i32
    return %c0_i32, %c0_i32_0 : i32, i32
  }
  func.func @transform_9(%arg0: i32) -> (i32, i32) {
    %c0_i32 = arith.constant 0 : i32
    %c0_i32_0 = arith.constant 0 : i32
    %c0_i32_1 = arith.constant 0 : i32
    return %c0_i32, %c0_i32_0 : i32, i32
  }
  func.func @transform_10(%arg0: i32) -> (i32, i32, i32, i32) {
    %c0_i32 = arith.constant 0 : i32
    %c0_i32_0 = arith.constant 0 : i32
    %c0_i32_1 = arith.constant 0 : i32
    %c0_i32_2 = arith.constant 0 : i32
    return %arg0, %c0_i32, %c0_i32_0, %c0_i32_1 : i32, i32, i32, i32
  }
}

</mosaic_0001>

<llo_original>
// kernel: bin_basic_block_forward.1
$region0: #{bin_basic_block_forward.1}
  #allocation0 [shape = 'u32[]', space=smem, size = 0x4, offset = 0x4, fixed_abs, tag = 'smem constant byte address 0x4 - core index']
  #allocation1 [shape = 'u32[72,128]{1,0:T(1,128)}', space=vmem, size = 0x9000, scoped, tag = 'internal scratch']
  %s0 = inlined_call_operand.vmem [shape: f32[2,16,16,128], index: 0, kind: input, shape index: {}]
  %s1 = inlined_call_operand.vmem [shape: f32[1,128], index: 1, kind: input, shape index: {}]
  %s2 = inlined_call_operand.vmem [shape: f32[1,128], index: 2, kind: input, shape index: {}]
  %s3 = inlined_call_operand.vmem [shape: bf16[1152,128], index: 3, kind: input, shape index: {}]
  %s4 = inlined_call_operand.vmem [shape: f32[1,128], index: 4, kind: input, shape index: {}]
  %s5 = inlined_call_operand.vmem [shape: f32[1,128], index: 5, kind: input, shape index: {}]
  %s6 = inlined_call_operand.vmem [shape: bf16[1152,128], index: 6, kind: input, shape index: {}]
  %s7 = inlined_call_operand.vmem [shape: f32[1,128], index: 7, kind: input, shape index: {}]
  %s8 = inlined_call_operand.vmem [shape: f32[1,128], index: 8, kind: input, shape index: {}]
  %s9 = inlined_call_operand.vmem [shape: bf16[128,128], index: 9, kind: input, shape index: {}]
  %s10 = inlined_call_operand.vmem [shape: f32[2,16,16,128], index: 10, kind: output, shape index: {}]
  %s11 = sld [smem:[#allocation0]]
  $region73: #{bin_basic_block_forward.1} parent=0
    _
  %s13 = ssub.s32 1, %s11
  %s14 = scalar_select 0, %s13, %s11
  loop: start=0, step=1, limit=4
  $region2: #{bin_basic_block_forward.1} parent=0 // loop_pre_header
    _
  $region3: #{bin_basic_block_forward.1} parent=0 // loop_header
    %s16 = sphi 0, %s20
    %p17 = scmp.ge.s32.totalorder %s16, 4
    %s26 = sphi 0, %s28
    %s29 = sphi 0, %s26
    %s30 = sphi 0, %s29
    %s46 = sphi 0, %s30
    %s50 = sphi 0, %s50
    %s52 = sphi 0, %s50
    %s53 = sphi 0, %s52
    %s67 = sphi 0, %s53
    %s71 = sphi 0, %s71
    %s73 = sphi 0, %s71
    %s74 = sphi 0, %s73
    %s88 = sphi 0, %s74
    %s92 = sphi 0, %s92
    %s94 = sphi 0, %s92
    %s95 = sphi 0, %s94
    %s109 = sphi 0, %s95
    %s113 = sphi 0, %s113
    %s115 = sphi 0, %s113
    %s116 = sphi 0, %s115
    %s130 = sphi 0, %s116
    %s134 = sphi 0, %s134
    %s136 = sphi 0, %s134
    %s137 = sphi 0, %s136
    %s151 = sphi 0, %s137
    %s155 = sphi 0, %s155
    %s157 = sphi 0, %s155
    %s158 = sphi 0, %s157
    %s172 = sphi 0, %s158
    %s176 = sphi 0, %s176
    %s178 = sphi 0, %s176
    %s179 = sphi 0, %s178
    %s193 = sphi 0, %s179
    %s197 = sphi 0, %s197
    %s199 = sphi 0, %s197
    %s200 = sphi 0, %s199
    %s214 = sphi 0, %s200
    %s218 = sphi 0, %s218
    %s220 = sphi 0, %s218
    %s221 = sphi 0, %s220
    %s235 = sphi 0, %s221
    %s241 = sphi 0, %s243
    %s244 = sphi 0, %s241
    %s245 = sphi 0, %s244
    %s261 = sphi 0, %s245
  $region4: #{bin_basic_block_forward.1} parent=0 // loop_header_branch
    %19 = sbr.rel (%p17) target = $region8
  $region5: #{bin_basic_block_forward.1} parent=0 // loop_body
    %s21 = ssub.s32 %s16, 1
    %s22 = ssub.s32 %s16, 2
    %s23 = sadd.s32 %s16, 1
    %s24 = ssub.s32 %s16, %s23
    %p25 = scmp.eq.s32.totalorder %s24, 0
    %s27 = sadd.s32 %s26, 1
    %s28 = scalar_select %p25, %s26, %s27
    %p31 = pneg %p25
    %p32 = scmp.eq.s32.totalorder %s16, 1
    %p33 = por %p31, %p32
    %p34 = scmp.ne.s32.totalorder %s26, %s29
    %p35 = scmp.eq.s32.totalorder %s16, 0
    %p36 = por %p34, %p35
    %p37 = scmp.ne.s32.totalorder %s26, %s29
    %p38 = scmp.eq.s32.totalorder %s21, 1
    %p39 = por %p37, %p38
    %p40 = scmp.ne.s32.totalorder %s29, %s30
    %p41 = scmp.eq.s32.totalorder %s21, 0
    %p42 = por %p40, %p41
    %p43 = scmp.ne.s32.totalorder %s29, %s30
    %p44 = scmp.eq.s32.totalorder %s22, 1
    %p45 = por %p43, %p44
    %p47 = scmp.ne.s32.totalorder %s30, %s46
    %p48 = scmp.eq.s32.totalorder %s22, 0
    %p49 = por %p47, %p48
    %s51 = sadd.s32 %s50, 1
    %p54 = scmp.eq.s32.totalorder %s16, 1
    %p55 = scmp.ne.s32.totalorder %s50, %s52
    %p56 = scmp.eq.s32.totalorder %s16, 0
    %p57 = por %p55, %p56
    %p58 = scmp.ne.s32.totalorder %s50, %s52
    %p59 = scmp.eq.s32.totalorder %s21, 1
    %p60 = por %p58, %p59
    %p61 = scmp.ne.s32.totalorder %s52, %s53
    %p62 = scmp.eq.s32.totalorder %s21, 0
    %p63 = por %p61, %p62
    %p64 = scmp.ne.s32.totalorder %s52, %s53
    %p65 = scmp.eq.s32.totalorder %s22, 1
    %p66 = por %p64, %p65
    %p68 = scmp.ne.s32.totalorder %s53, %s67
    %p69 = scmp.eq.s32.totalorder %s22, 0
    %p70 = por %p68, %p69
    %s72 = sadd.s32 %s71, 1
    %p75 = scmp.eq.s32.totalorder %s16, 1
    %p76 = scmp.ne.s32.totalorder %s71, %s73
    %p77 = scmp.eq.s32.totalorder %s16, 0
    %p78 = por %p76, %p77
    %p79 = scmp.ne.s32.totalorder %s71, %s73
    %p80 = scmp.eq.s32.totalorder %s21, 1
    %p81 = por %p79, %p80
    %p82 = scmp.ne.s32.totalorder %s73, %s74
    %p83 = scmp.eq.s32.totalorder %s21, 0
    %p84 = por %p82, %p83
    %p85 = scmp.ne.s32.totalorder %s73, %s74
    %p86 = scmp.eq.s32.totalorder %s22, 1
    %p87 = por %p85, %p86
    %p89 = scmp.ne.s32.totalorder %s74, %s88
    %p90 = scmp.eq.s32.totalorder %s22, 0
    %p91 = por %p89, %p90
    %s93 = sadd.s32 %s92, 1
    %p96 = scmp.eq.s32.totalorder %s16, 1
    %p97 = scmp.ne.s32.totalorder %s92, %s94
    %p98 = scmp.eq.s32.totalorder %s16, 0
    %p99 = por %p97, %p98
    %p100 = scmp.ne.s32.totalorder %s92, %s94
    %p101 = scmp.eq.s32.totalorder %s21, 1
    %p102 = por %p100, %p101
    %p103 = scmp.ne.s32.totalorder %s94, %s95
    %p104 = scmp.eq.s32.totalorder %s21, 0
    %p105 = por %p103, %p104
    %p106 = scmp.ne.s32.totalorder %s94, %s95
    %p107 = scmp.eq.s32.totalorder %s22, 1
    %p108 = por %p106, %p107
    %p110 = scmp.ne.s32.totalorder %s95, %s109
    %p111 = scmp.eq.s32.totalorder %s22, 0
    %p112 = por %p110, %p111
    %s114 = sadd.s32 %s113, 1
    %p117 = scmp.eq.s32.totalorder %s16, 1
    %p118 = scmp.ne.s32.totalorder %s113, %s115
    %p119 = scmp.eq.s32.totalorder %s16, 0
    %p120 = por %p118, %p119
    %p121 = scmp.ne.s32.totalorder %s113, %s115
    %p122 = scmp.eq.s32.totalorder %s21, 1
    %p123 = por %p121, %p122
    %p124 = scmp.ne.s32.totalorder %s115, %s116
    %p125 = scmp.eq.s32.totalorder %s21, 0
    %p126 = por %p124, %p125
    %p127 = scmp.ne.s32.totalorder %s115, %s116
    %p128 = scmp.eq.s32.totalorder %s22, 1
    %p129 = por %p127, %p128
    %p131 = scmp.ne.s32.totalorder %s116, %s130
    %p132 = scmp.eq.s32.totalorder %s22, 0
    %p133 = por %p131, %p132
    %s135 = sadd.s32 %s134, 1
    %p138 = scmp.eq.s32.totalorder %s16, 1
    %p139 = scmp.ne.s32.totalorder %s134, %s136
    %p140 = scmp.eq.s32.totalorder %s16, 0
    %p141 = por %p139, %p140
    %p142 = scmp.ne.s32.totalorder %s134, %s136
    %p143 = scmp.eq.s32.totalorder %s21, 1
    %p144 = por %p142, %p143
    %p145 = scmp.ne.s32.totalorder %s136, %s137
    %p146 = scmp.eq.s32.totalorder %s21, 0
    %p147 = por %p145, %p146
    %p148 = scmp.ne.s32.totalorder %s136, %s137
    %p149 = scmp.eq.s32.totalorder %s22, 1
    %p150 = por %p148, %p149
    %p152 = scmp.ne.s32.totalorder %s137, %s151
    %p153 = scmp.eq.s32.totalorder %s22, 0
    %p154 = por %p152, %p153
    %s156 = sadd.s32 %s155, 1
    %p159 = scmp.eq.s32.totalorder %s16, 1
    %p160 = scmp.ne.s32.totalorder %s155, %s157
    %p161 = scmp.eq.s32.totalorder %s16, 0
    %p162 = por %p160, %p161
    %p163 = scmp.ne.s32.totalorder %s155, %s157
    %p164 = scmp.eq.s32.totalorder %s21, 1
    %p165 = por %p163, %p164
    %p166 = scmp.ne.s32.totalorder %s157, %s158
    %p167 = scmp.eq.s32.totalorder %s21, 0
    %p168 = por %p166, %p167
    %p169 = scmp.ne.s32.totalorder %s157, %s158
    %p170 = scmp.eq.s32.totalorder %s22, 1
    %p171 = por %p169, %p170
    %p173 = scmp.ne.s32.totalorder %s158, %s172
    %p174 = scmp.eq.s32.totalorder %s22, 0
    %p175 = por %p173, %p174
    %s177 = sadd.s32 %s176, 1
    %p180 = scmp.eq.s32.totalorder %s16, 1
    %p181 = scmp.ne.s32.totalorder %s176, %s178
    %p182 = scmp.eq.s32.totalorder %s16, 0
    %p183 = por %p181, %p182
    %p184 = scmp.ne.s32.totalorder %s176, %s178
    %p185 = scmp.eq.s32.totalorder %s21, 1
    %p186 = por %p184, %p185
    %p187 = scmp.ne.s32.totalorder %s178, %s179
    %p188 = scmp.eq.s32.totalorder %s21, 0
    %p189 = por %p187, %p188
    %p190 = scmp.ne.s32.totalorder %s178, %s179
    %p191 = scmp.eq.s32.totalorder %s22, 1
    %p192 = por %p190, %p191
    %p194 = scmp.ne.s32.totalorder %s179, %s193
    %p195 = scmp.eq.s32.totalorder %s22, 0
    %p196 = por %p194, %p195
    %s198 = sadd.s32 %s197, 1
    %p201 = scmp.eq.s32.totalorder %s16, 1
    %p202 = scmp.ne.s32.totalorder %s197, %s199
    %p203 = scmp.eq.s32.totalorder %s16, 0
    %p204 = por %p202, %p203
    %p205 = scmp.ne.s32.totalorder %s197, %s199
    %p206 = scmp.eq.s32.totalorder %s21, 1
    %p207 = por %p205, %p206
    %p208 = scmp.ne.s32.totalorder %s199, %s200
    %p209 = scmp.eq.s32.totalorder %s21, 0
    %p210 = por %p208, %p209
    %p211 = scmp.ne.s32.totalorder %s199, %s200
    %p212 = scmp.eq.s32.totalorder %s22, 1
    %p213 = por %p211, %p212
    %p215 = scmp.ne.s32.totalorder %s200, %s214
    %p216 = scmp.eq.s32.totalorder %s22, 0
    %p217 = por %p215, %p216
    %s219 = sadd.s32 %s218, 1
    %p222 = scmp.eq.s32.totalorder %s16, 1
    %p223 = scmp.ne.s32.totalorder %s218, %s220
    %p224 = scmp.eq.s32.totalorder %s16, 0
    %p225 = por %p223, %p224
    %p226 = scmp.ne.s32.totalorder %s218, %s220
    %p227 = scmp.eq.s32.totalorder %s21, 1
    %p228 = por %p226, %p227
    %p229 = scmp.ne.s32.totalorder %s220, %s221
    %p230 = scmp.eq.s32.totalorder %s21, 0
    %p231 = por %p229, %p230
    %p232 = scmp.ne.s32.totalorder %s220, %s221
    %p233 = scmp.eq.s32.totalorder %s22, 1
    %p234 = por %p232, %p233
    %p236 = scmp.ne.s32.totalorder %s221, %s235
    %p237 = scmp.eq.s32.totalorder %s22, 0
    %p238 = por %p236, %p237
    %s239 = ssub.s32 %s16, %s23
    %p240 = scmp.eq.s32.totalorder %s239, 0
    %s242 = sadd.s32 %s241, 1
    %s243 = scalar_select %p240, %s241, %s242
    %p246 = pneg %p240
    %p247 = scmp.eq.s32.totalorder %s16, 1
    %p248 = por %p246, %p247
    %p249 = scmp.ne.s32.totalorder %s241, %s244
    %p250 = scmp.eq.s32.totalorder %s16, 0
    %p251 = por %p249, %p250
    %p252 = scmp.ne.s32.totalorder %s241, %s244
    %p253 = scmp.eq.s32.totalorder %s21, 1
    %p254 = por %p252, %p253
    %p255 = scmp.ne.s32.totalorder %s244, %s245
    %p256 = scmp.eq.s32.totalorder %s21, 0
    %p257 = por %p255, %p256
    %p258 = scmp.ne.s32.totalorder %s244, %s245
    %p259 = scmp.eq.s32.totalorder %s22, 1
    %p260 = por %p258, %p259
    %p262 = scmp.ne.s32.totalorder %s245, %s261
    %p263 = scmp.eq.s32.totalorder %s22, 0
    %p264 = por %p262, %p263
    %p265 = scmp.le.s32.totalorder 1, %s16
    %p266 = scmp.lt.s32.totalorder %s16, 3
    %p267 = pnand %p265, %p266
    %p268 = pneg %p267
    // Predicated region
    $region9: #{bin_basic_block_forward.1} parent=5 // pred_check
      _
    $region10: #{bin_basic_block_forward.1} parent=5 // pred_check_branch
      %270 = sbr.rel (%p267) target = $region12
    $region11: #{bin_basic_block_forward.1} parent=5 // pred_region
      %s271 = ssub.s32 %s16, 1
      // Predicated region
      $region13: #{bin_basic_block_forward.1} parent=11 // pred_check
        %p272 = pneg %p63
      $region14: #{bin_basic_block_forward.1} parent=11 // pred_check_branch
        %274 = sbr.rel (%p272) target = $region16
      $region15: #{bin_basic_block_forward.1} parent=11 // pred_region
        _
      $region16: #{bin_basic_block_forward.1} parent=11 // pred_fallthru
        _
      // Predicated region
      $region17: #{bin_basic_block_forward.1} parent=11 // pred_check
        %p275 = pneg %p84
      $region18: #{bin_basic_block_forward.1} parent=11 // pred_check_branch
        %277 = sbr.rel (%p275) target = $region20
      $region19: #{bin_basic_block_forward.1} parent=11 // pred_region
        _
      $region20: #{bin_basic_block_forward.1} parent=11 // pred_fallthru
        _
      // Predicated region
      $region21: #{bin_basic_block_forward.1} parent=11 // pred_check
        %p278 = pneg %p105
      $region22: #{bin_basic_block_forward.1} parent=11 // pred_check_branch
        %280 = sbr.rel (%p278) target = $region24
      $region23: #{bin_basic_block_forward.1} parent=11 // pred_region
        _
      $region24: #{bin_basic_block_forward.1} parent=11 // pred_fallthru
        _
      // Predicated region
      $region25: #{bin_basic_block_forward.1} parent=11 // pred_check
        %p281 = pneg %p126
      $region26: #{bin_basic_block_forward.1} parent=11 // pred_check_branch
        %283 = sbr.rel (%p281) target = $region28
      $region27: #{bin_basic_block_forward.1} parent=11 // pred_region
        _
      $region28: #{bin_basic_block_forward.1} parent=11 // pred_fallthru
        _
      // Predicated region
      $region29: #{bin_basic_block_forward.1} parent=11 // pred_check
        %p284 = pneg %p147
      $region30: #{bin_basic_block_forward.1} parent=11 // pred_check_branch
        %286 = sbr.rel (%p284) target = $region32
      $region31: #{bin_basic_block_forward.1} parent=11 // pred_region
        _
      $region32: #{bin_basic_block_forward.1} parent=11 // pred_fallthru
        _
      // Predicated region
      $region33: #{bin_basic_block_forward.1} parent=11 // pred_check
        %p287 = pneg %p168
      $region34: #{bin_basic_block_forward.1} parent=11 // pred_check_branch
        %289 = sbr.rel (%p287) target = $region36
      $region35: #{bin_basic_block_forward.1} parent=11 // pred_region
        _
      $region36: #{bin_basic_block_forward.1} parent=11 // pred_fallthru
        _
      // Predicated region
      $region37: #{bin_basic_block_forward.1} parent=11 // pred_check
        %p290 = pneg %p189
      $region38: #{bin_basic_block_forward.1} parent=11 // pred_check_branch
        %292 = sbr.rel (%p290) target = $region40
      $region39: #{bin_basic_block_forward.1} parent=11 // pred_region
        _
      $region40: #{bin_basic_block_forward.1} parent=11 // pred_fallthru
        _
      // Predicated region
      $region41: #{bin_basic_block_forward.1} parent=11 // pred_check
        %p293 = pneg %p210
      $region42: #{bin_basic_block_forward.1} parent=11 // pred_check_branch
        %295 = sbr.rel (%p293) target = $region44
      $region43: #{bin_basic_block_forward.1} parent=11 // pred_region
        _
      $region44: #{bin_basic_block_forward.1} parent=11 // pred_fallthru
        _
      // Predicated region
      $region45: #{bin_basic_block_forward.1} parent=11 // pred_check
        %p296 = pneg %p231
      $region46: #{bin_basic_block_forward.1} parent=11 // pred_check_branch
        %298 = sbr.rel (%p296) target = $region48
      $region47: #{bin_basic_block_forward.1} parent=11 // pred_region
        _
      $region48: #{bin_basic_block_forward.1} parent=11 // pred_fallthru
        _
    $region12: #{bin_basic_block_forward.1} parent=5 // pred_fallthru
      _
    %p299 = scmp.lt.s32.totalorder %s16, 2
    // Predicated region
    $region49: #{bin_basic_block_forward.1} parent=5 // pred_check
      %p300 = pneg %p299
    $region50: #{bin_basic_block_forward.1} parent=5 // pred_check_branch
      %302 = sbr.rel (%p300) target = $region52
    $region51: #{bin_basic_block_forward.1} parent=5 // pred_region
      // Predicated region
      $region53: #{bin_basic_block_forward.1} parent=51 // pred_check
        %p303 = pneg %p36
      $region54: #{bin_basic_block_forward.1} parent=51 // pred_check_branch
        %305 = sbr.rel (%p303) target = $region56
      $region55: #{bin_basic_block_forward.1} parent=51 // pred_region
        %p306 = scmp.lt.s32.totalorder %s16, 1
        %s307 = scalar_select %p306, %s16, 1
        %s308 = smul.addr %s307, 32
        %s309 = smul.addr %s308, 8
        %s310 = scalar_lea.vmem %s0, %s309
      $region56: #{bin_basic_block_forward.1} parent=51 // pred_fallthru
        _
    $region52: #{bin_basic_block_forward.1} parent=5 // pred_fallthru
      _
    %p311 = scmp.le.s32.totalorder 1, %s16
    %p312 = scmp.lt.s32.totalorder %s16, 3
    %p313 = pnand %p311, %p312
    %p314 = pneg %p313
    // Predicated region
    $region57: #{bin_basic_block_forward.1} parent=5 // pred_check
      _
    $region58: #{bin_basic_block_forward.1} parent=5 // pred_check_branch
      %316 = sbr.rel (%p313) target = $region60
    $region59: #{bin_basic_block_forward.1} parent=5 // pred_region
      %s317 = ssub.s32 %s16, 1
      %p318 = scmp.lt.s32.totalorder %s21, 1
      %s319 = scalar_select %p318, %s21, 1
      %s320 = smul.addr %s319, 32
      %s321 = smul.addr %s320, 8
      %s322 = scalar_lea.vmem %s0, %s321
      %p323 = pneg %p42
      %p324 = pneg %p39
      %p325 = pneg %p63
      %p326 = pneg %p60
      %p327 = pneg %p84
      %p328 = pneg %p81
      %p329 = pneg %p105
      %p330 = pneg %p102
      %p331 = pneg %p126
      %p332 = pneg %p123
      %p333 = pneg %p147
      %p334 = pneg %p144
      %p335 = pneg %p168
      %p336 = pneg %p165
      %p337 = pneg %p189
      %p338 = pneg %p186
      %p339 = pneg %p210
      %p340 = pneg %p207
      %p341 = pneg %p231
      %p342 = pneg %p228
      %p343 = pneg %p257
      %p344 = pneg %p254
      %p345 = scmp.lt.s32.totalorder %s21, 1
      %s346 = scalar_select %p345, %s21, 1
      %s347 = smul.addr %s346, 32
      %s348 = smul.addr %s347, 8
      %s349 = scalar_lea.vmem %s10, %s348
      %p350 = scmp.lt.s32.totalorder %s21, 1
      %s351 = scalar_select %p350, %s21, 1
      %s352 = smul.addr %s351, 32
      %s353 = smul.addr %s352, 8
      %s354 = scalar_lea.vmem %s0, %s353
      %p355 = scmp.lt.s32.totalorder %s21, 1
      %s356 = scalar_select %p355, %s21, 1
      %s357 = smul.addr %s356, 32
      %s358 = smul.addr %s357, 8
      %s359 = scalar_lea.vmem %s10, %s358
      %v361 = vld [vmem:[%s354] sm:$0xff]
      %v362 = vld [vmem:[%s354 + $0x8] sm:$0xff]
      %v363 = vld [vmem:[%s354 + $0x10] sm:$0xff]
      %v364 = vld [vmem:[%s354 + $0x18] sm:$0xff]
      %v365 = vld [vmem:[%s354 + $0x20] sm:$0xff]
      %v366 = vld [vmem:[%s354 + $0x28] sm:$0xff]
      %v367 = vld [vmem:[%s354 + $0x30] sm:$0xff]
      %v368 = vld [vmem:[%s354 + $0x38] sm:$0xff]
      %v369 = vld [vmem:[%s354 + $0x40] sm:$0xff]
      %v370 = vld [vmem:[%s354 + $0x48] sm:$0xff]
      %v371 = vld [vmem:[%s354 + $0x50] sm:$0xff]
      %v372 = vld [vmem:[%s354 + $0x58] sm:$0xff]
      %v373 = vld [vmem:[%s354 + $0x60] sm:$0xff]
      %v374 = vld [vmem:[%s354 + $0x68] sm:$0xff]
      %v375 = vld [vmem:[%s354 + $0x70] sm:$0xff]
      %v376 = vld [vmem:[%s354 + $0x78] sm:$0xff]
      %v377 = vld [vmem:[%s354 + $0x80] sm:$0xff]
      %v378 = vld [vmem:[%s354 + $0x88] sm:$0xff]
      %v379 = vld [vmem:[%s354 + $0x90] sm:$0xff]
      %v380 = vld [vmem:[%s354 + $0x98] sm:$0xff]
      %v381 = vld [vmem:[%s354 + $0xa0] sm:$0xff]
      %v382 = vld [vmem:[%s354 + $0xa8] sm:$0xff]
      %v383 = vld [vmem:[%s354 + $0xb0] sm:$0xff]
      %v384 = vld [vmem:[%s354 + $0xb8] sm:$0xff]
      %v385 = vld [vmem:[%s354 + $0xc0] sm:$0xff]
      %v386 = vld [vmem:[%s354 + $0xc8] sm:$0xff]
      %v387 = vld [vmem:[%s354 + $0xd0] sm:$0xff]
      %v388 = vld [vmem:[%s354 + $0xd8] sm:$0xff]
      %v389 = vld [vmem:[%s354 + $0xe0] sm:$0xff]
      %v390 = vld [vmem:[%s354 + $0xe8] sm:$0xff]
      %v391 = vld [vmem:[%s354 + $0xf0] sm:$0xff]
      %v392 = vld [vmem:[%s354 + $0xf8] sm:$0xff]
      %v393 = vld [vmem:[%s1] sm:$0x1]
      %v395 = vperm.slane %v393, 0
      %v397 = vmul.f32 %v361, %v395
      %v398 = vmul.f32 %v362, %v395
      %v399 = vmul.f32 %v363, %v395
      %v400 = vmul.f32 %v364, %v395
      %v401 = vmul.f32 %v365, %v395
      %v402 = vmul.f32 %v366, %v395
      %v403 = vmul.f32 %v367, %v395
      %v404 = vmul.f32 %v368, %v395
      %v405 = vmul.f32 %v369, %v395
      %v406 = vmul.f32 %v370, %v395
      %v407 = vmul.f32 %v371, %v395
      %v408 = vmul.f32 %v372, %v395
      %v409 = vmul.f32 %v373, %v395
      %v410 = vmul.f32 %v374, %v395
      %v411 = vmul.f32 %v375, %v395
      %v412 = vmul.f32 %v376, %v395
      %v413 = vmul.f32 %v377, %v395
      %v414 = vmul.f32 %v378, %v395
      %v415 = vmul.f32 %v379, %v395
      %v416 = vmul.f32 %v380, %v395
      %v417 = vmul.f32 %v381, %v395
      %v418 = vmul.f32 %v382, %v395
      %v419 = vmul.f32 %v383, %v395
      %v420 = vmul.f32 %v384, %v395
      %v421 = vmul.f32 %v385, %v395
      %v422 = vmul.f32 %v386, %v395
      %v423 = vmul.f32 %v387, %v395
      %v424 = vmul.f32 %v388, %v395
      %v425 = vmul.f32 %v389, %v395
      %v426 = vmul.f32 %v390, %v395
      %v427 = vmul.f32 %v391, %v395
      %v428 = vmul.f32 %v392, %v395
      %v429 = vld [vmem:[%s2] sm:$0x1]
      %v431 = vperm.slane %v429, 0
      %v433 = vadd.f32 %v397, %v431
      %v434 = vadd.f32 %v398, %v431
      %v435 = vadd.f32 %v399, %v431
      %v436 = vadd.f32 %v400, %v431
      %v437 = vadd.f32 %v401, %v431
      %v438 = vadd.f32 %v402, %v431
      %v439 = vadd.f32 %v403, %v431
      %v440 = vadd.f32 %v404, %v431
      %v441 = vadd.f32 %v405, %v431
      %v442 = vadd.f32 %v406, %v431
      %v443 = vadd.f32 %v407, %v431
      %v444 = vadd.f32 %v408, %v431
      %v445 = vadd.f32 %v409, %v431
      %v446 = vadd.f32 %v410, %v431
      %v447 = vadd.f32 %v411, %v431
      %v448 = vadd.f32 %v412, %v431
      %v449 = vadd.f32 %v413, %v431
      %v450 = vadd.f32 %v414, %v431
      %v451 = vadd.f32 %v415, %v431
      %v452 = vadd.f32 %v416, %v431
      %v453 = vadd.f32 %v417, %v431
      %v454 = vadd.f32 %v418, %v431
      %v455 = vadd.f32 %v419, %v431
      %v456 = vadd.f32 %v420, %v431
      %v457 = vadd.f32 %v421, %v431
      %v458 = vadd.f32 %v422, %v431
      %v459 = vadd.f32 %v423, %v431
      %v460 = vadd.f32 %v424, %v431
      %v461 = vadd.f32 %v425, %v431
      %v462 = vadd.f32 %v426, %v431
      %v463 = vadd.f32 %v427, %v431
      %v464 = vadd.f32 %v428, %v431
      %vm465 = vcmp.gt.f32.partialorder %v433, 0.0
      %vm466 = vcmp.gt.f32.partialorder %v434, 0.0
      %vm467 = vcmp.gt.f32.partialorder %v435, 0.0
      %vm468 = vcmp.gt.f32.partialorder %v436, 0.0
      %vm469 = vcmp.gt.f32.partialorder %v437, 0.0
      %vm470 = vcmp.gt.f32.partialorder %v438, 0.0
      %vm471 = vcmp.gt.f32.partialorder %v439, 0.0
      %vm472 = vcmp.gt.f32.partialorder %v440, 0.0
      %vm473 = vcmp.gt.f32.partialorder %v441, 0.0
      %vm474 = vcmp.gt.f32.partialorder %v442, 0.0
      %vm475 = vcmp.gt.f32.partialorder %v443, 0.0
      %vm476 = vcmp.gt.f32.partialorder %v444, 0.0
      %vm477 = vcmp.gt.f32.partialorder %v445, 0.0
      %vm478 = vcmp.gt.f32.partialorder %v446, 0.0
      %vm479 = vcmp.gt.f32.partialorder %v447, 0.0
      %vm480 = vcmp.gt.f32.partialorder %v448, 0.0
      %vm481 = vcmp.gt.f32.partialorder %v449, 0.0
      %vm482 = vcmp.gt.f32.partialorder %v450, 0.0
      %vm483 = vcmp.gt.f32.partialorder %v451, 0.0
      %vm484 = vcmp.gt.f32.partialorder %v452, 0.0
      %vm485 = vcmp.gt.f32.partialorder %v453, 0.0
      %vm486 = vcmp.gt.f32.partialorder %v454, 0.0
      %vm487 = vcmp.gt.f32.partialorder %v455, 0.0
      %vm488 = vcmp.gt.f32.partialorder %v456, 0.0
      %vm489 = vcmp.gt.f32.partialorder %v457, 0.0
      %vm490 = vcmp.gt.f32.partialorder %v458, 0.0
      %vm491 = vcmp.gt.f32.partialorder %v459, 0.0
      %vm492 = vcmp.gt.f32.partialorder %v460, 0.0
      %vm493 = vcmp.gt.f32.partialorder %v461, 0.0
      %vm494 = vcmp.gt.f32.partialorder %v462, 0.0
      %vm495 = vcmp.gt.f32.partialorder %v463, 0.0
      %vm496 = vcmp.gt.f32.partialorder %v464, 0.0
      %vm497 = vcmp.lt.f32.partialorder %v433, 0.0
      %vm498 = vcmp.lt.f32.partialorder %v434, 0.0
      %vm499 = vcmp.lt.f32.partialorder %v435, 0.0
      %vm500 = vcmp.lt.f32.partialorder %v436, 0.0
      %vm501 = vcmp.lt.f32.partialorder %v437, 0.0
      %vm502 = vcmp.lt.f32.partialorder %v438, 0.0
      %vm503 = vcmp.lt.f32.partialorder %v439, 0.0
      %vm504 = vcmp.lt.f32.partialorder %v440, 0.0
      %vm505 = vcmp.lt.f32.partialorder %v441, 0.0
      %vm506 = vcmp.lt.f32.partialorder %v442, 0.0
      %vm507 = vcmp.lt.f32.partialorder %v443, 0.0
      %vm508 = vcmp.lt.f32.partialorder %v444, 0.0
      %vm509 = vcmp.lt.f32.partialorder %v445, 0.0
      %vm510 = vcmp.lt.f32.partialorder %v446, 0.0
      %vm511 = vcmp.lt.f32.partialorder %v447, 0.0
      %vm512 = vcmp.lt.f32.partialorder %v448, 0.0
      %vm513 = vcmp.lt.f32.partialorder %v449, 0.0
      %vm514 = vcmp.lt.f32.partialorder %v450, 0.0
      %vm515 = vcmp.lt.f32.partialorder %v451, 0.0
      %vm516 = vcmp.lt.f32.partialorder %v452, 0.0
      %vm517 = vcmp.lt.f32.partialorder %v453, 0.0
      %vm518 = vcmp.lt.f32.partialorder %v454, 0.0
      %vm519 = vcmp.lt.f32.partialorder %v455, 0.0
      %vm520 = vcmp.lt.f32.partialorder %v456, 0.0
      %vm521 = vcmp.lt.f32.partialorder %v457, 0.0
      %vm522 = vcmp.lt.f32.partialorder %v458, 0.0
      %vm523 = vcmp.lt.f32.partialorder %v459, 0.0
      %vm524 = vcmp.lt.f32.partialorder %v460, 0.0
      %vm525 = vcmp.lt.f32.partialorder %v461, 0.0
      %vm526 = vcmp.lt.f32.partialorder %v462, 0.0
      %vm527 = vcmp.lt.f32.partialorder %v463, 0.0
      %vm528 = vcmp.lt.f32.partialorder %v464, 0.0
      %v529 = vsel %vm497, -1.0, 0.0
      %v530 = vsel %vm498, -1.0, 0.0
      %v531 = vsel %vm499, -1.0, 0.0
      %v532 = vsel %vm500, -1.0, 0.0
      %v533 = vsel %vm501, -1.0, 0.0
      %v534 = vsel %vm502, -1.0, 0.0
      %v535 = vsel %vm503, -1.0, 0.0
      %v536 = vsel %vm504, -1.0, 0.0
      %v537 = vsel %vm505, -1.0, 0.0
      %v538 = vsel %vm506, -1.0, 0.0
      %v539 = vsel %vm507, -1.0, 0.0
      %v540 = vsel %vm508, -1.0, 0.0
      %v541 = vsel %vm509, -1.0, 0.0
      %v542 = vsel %vm510, -1.0, 0.0
      %v543 = vsel %vm511, -1.0, 0.0
      %v544 = vsel %vm512, -1.0, 0.0
      %v545 = vsel %vm513, -1.0, 0.0
      %v546 = vsel %vm514, -1.0, 0.0
      %v547 = vsel %vm515, -1.0, 0.0
      %v548 = vsel %vm516, -1.0, 0.0
      %v549 = vsel %vm517, -1.0, 0.0
      %v550 = vsel %vm518, -1.0, 0.0
      %v551 = vsel %vm519, -1.0, 0.0
      %v552 = vsel %vm520, -1.0, 0.0
      %v553 = vsel %vm521, -1.0, 0.0
      %v554 = vsel %vm522, -1.0, 0.0
      %v555 = vsel %vm523, -1.0, 0.0
      %v556 = vsel %vm524, -1.0, 0.0
      %v557 = vsel %vm525, -1.0, 0.0
      %v558 = vsel %vm526, -1.0, 0.0
      %v559 = vsel %vm527, -1.0, 0.0
      %v560 = vsel %vm528, -1.0, 0.0
      %v561 = vsel %vm465, 1.0, %v529
      %v562 = vsel %vm466, 1.0, %v530
      %v563 = vsel %vm467, 1.0, %v531
      %v564 = vsel %vm468, 1.0, %v532
      %v565 = vsel %vm469, 1.0, %v533
      %v566 = vsel %vm470, 1.0, %v534
      %v567 = vsel %vm471, 1.0, %v535
      %v568 = vsel %vm472, 1.0, %v536
      %v569 = vsel %vm473, 1.0, %v537
      %v570 = vsel %vm474, 1.0, %v538
      %v571 = vsel %vm475, 1.0, %v539
      %v572 = vsel %vm476, 1.0, %v540
      %v573 = vsel %vm477, 1.0, %v541
      %v574 = vsel %vm478, 1.0, %v542
      %v575 = vsel %vm479, 1.0, %v543
      %v576 = vsel %vm480, 1.0, %v544
      %v577 = vsel %vm481, 1.0, %v545
      %v578 = vsel %vm482, 1.0, %v546
      %v579 = vsel %vm483, 1.0, %v547
      %v580 = vsel %vm484, 1.0, %v548
      %v581 = vsel %vm485, 1.0, %v549
      %v582 = vsel %vm486, 1.0, %v550
      %v583 = vsel %vm487, 1.0, %v551
      %v584 = vsel %vm488, 1.0, %v552
      %v585 = vsel %vm489, 1.0, %v553
      %v586 = vsel %vm490, 1.0, %v554
      %v587 = vsel %vm491, 1.0, %v555
      %v588 = vsel %vm492, 1.0, %v556
      %v589 = vsel %vm493, 1.0, %v557
      %v590 = vsel %vm494, 1.0, %v558
      %v591 = vsel %vm495, 1.0, %v559
      %v592 = vsel %vm496, 1.0, %v560
      %v593 = vpack.c.bf16 %v561, %v561
      %v594 = vpack.c.bf16 %v562, %v562
      %v595 = vpack.c.bf16 %v563, %v563
      %v596 = vpack.c.bf16 %v564, %v564
      %v597 = vpack.c.bf16 %v565, %v565
      %v598 = vpack.c.bf16 %v566, %v566
      %v599 = vpack.c.bf16 %v567, %v567
      %v600 = vpack.c.bf16 %v568, %v568
      %v601 = vpack.c.bf16 %v569, %v569
      %v602 = vpack.c.bf16 %v570, %v570
      %v603 = vpack.c.bf16 %v571, %v571
      %v604 = vpack.c.bf16 %v572, %v572
      %v605 = vpack.c.bf16 %v573, %v573
      %v606 = vpack.c.bf16 %v574, %v574
      %v607 = vpack.c.bf16 %v575, %v575
      %v608 = vpack.c.bf16 %v576, %v576
      %v609 = vpack.c.bf16 %v577, %v577
      %v610 = vpack.c.bf16 %v578, %v578
      %v611 = vpack.c.bf16 %v579, %v579
      %v612 = vpack.c.bf16 %v580, %v580
      %v613 = vpack.c.bf16 %v581, %v581
      %v614 = vpack.c.bf16 %v582, %v582
      %v615 = vpack.c.bf16 %v583, %v583
      %v616 = vpack.c.bf16 %v584, %v584
      %v617 = vpack.c.bf16 %v585, %v585
      %v618 = vpack.c.bf16 %v586, %v586
      %v619 = vpack.c.bf16 %v587, %v587
      %v620 = vpack.c.bf16 %v588, %v588
      %v621 = vpack.c.bf16 %v589, %v589
      %v622 = vpack.c.bf16 %v590, %v590
      %v623 = vpack.c.bf16 %v591, %v591
      %v624 = vpack.c.bf16 %v592, %v592
      %v657 = vunpack.c.l.b16 %v593
      %v658 = vunpack.c.l.b16 %v594
      %v659 = vunpack.c.l.b16 %v595
      %v660 = vunpack.c.l.b16 %v596
      %v661 = vunpack.c.l.b16 %v597
      %v662 = vunpack.c.l.b16 %v598
      %v663 = vunpack.c.l.b16 %v599
      %v664 = vunpack.c.l.b16 %v600
      %v665 = vunpack.c.l.b16 %v601
      %v666 = vunpack.c.l.b16 %v602
      %v667 = vunpack.c.l.b16 %v603
      %v668 = vunpack.c.l.b16 %v604
      %v669 = vunpack.c.l.b16 %v605
      %v670 = vunpack.c.l.b16 %v606
      %v671 = vunpack.c.l.b16 %v607
      %v672 = vunpack.c.l.b16 %v608
      %v673 = vunpack.c.l.b16 %v609
      %v674 = vunpack.c.l.b16 %v610
      %v675 = vunpack.c.l.b16 %v611
      %v676 = vunpack.c.l.b16 %v612
      %v677 = vunpack.c.l.b16 %v613
      %v678 = vunpack.c.l.b16 %v614
      %v679 = vunpack.c.l.b16 %v615
      %v680 = vunpack.c.l.b16 %v616
      %v681 = vunpack.c.l.b16 %v617
      %v682 = vunpack.c.l.b16 %v618
      %v683 = vunpack.c.l.b16 %v619
      %v684 = vunpack.c.l.b16 %v620
      %v685 = vunpack.c.l.b16 %v621
      %v686 = vunpack.c.l.b16 %v622
      %v687 = vunpack.c.l.b16 %v623
      %v688 = vunpack.c.l.b16 %v624
      %v689 = vpack.c.b16 %v658, %v657
      %v690 = vpack.c.b16 %v660, %v659
      %v691 = vpack.c.b16 %v662, %v661
      %v692 = vpack.c.b16 %v664, %v663
      %v693 = vpack.c.b16 %v666, %v665
      %v694 = vpack.c.b16 %v668, %v667
      %v695 = vpack.c.b16 %v670, %v669
      %v696 = vpack.c.b16 %v672, %v671
      %v697 = vpack.c.b16 %v674, %v673
      %v698 = vpack.c.b16 %v676, %v675
      %v699 = vpack.c.b16 %v678, %v677
      %v700 = vpack.c.b16 %v680, %v679
      %v701 = vpack.c.b16 %v682, %v681
      %v702 = vpack.c.b16 %v684, %v683
      %v703 = vpack.c.b16 %v686, %v685
      %v704 = vpack.c.b16 %v688, %v687
      %v706 = vrot.slane 0, 4
      %v707 = vrot.slane %v689, 4
      %v708 = vrot.slane %v690, 4
      %v709 = vrot.slane %v691, 4
      %v710 = vrot.slane %v692, 4
      %v711 = vrot.slane %v693, 4
      %v712 = vrot.slane %v694, 4
      %v713 = vrot.slane %v695, 4
      %v714 = vrot.slane %v696, 4
      %v715 = vrot.slane %v697, 4
      %v716 = vrot.slane %v698, 4
      %v717 = vrot.slane %v699, 4
      %v718 = vrot.slane %v700, 4
      %v719 = vrot.slane %v701, 4
      %v720 = vrot.slane %v702, 4
      %v721 = vrot.slane %v703, 4
      %v722 = vrot.slane %v704, 4
      %vm723 = vcmask 1043456
      %v726 = vsel %vm723, 0, %v706
      %v728 = vsel %vm723, 0, %v707
      %v730 = vsel %vm723, 0, %v708
      %v732 = vsel %vm723, 0, %v709
      %v734 = vsel %vm723, 0, %v710
      %v736 = vsel %vm723, 0, %v711
      %v738 = vsel %vm723, 0, %v712
      %v740 = vsel %vm723, 0, %v713
      %v742 = vsel %vm723, 0, %v714
      %v744 = vsel %vm723, 0, %v715
      %v746 = vsel %vm723, 0, %v716
      %v748 = vsel %vm723, 0, %v717
      %v750 = vsel %vm723, 0, %v718
      %v752 = vsel %vm723, 0, %v719
      %v754 = vsel %vm723, 0, %v720
      %v756 = vsel %vm723, 0, %v721
      %v758 = vsel %vm723, 0, %v722
      %v759 = vsel %vm723, %v706, 0
      %v760 = vsel %vm723, %v707, 0
      %v761 = vsel %vm723, %v708, 0
      %v762 = vsel %vm723, %v709, 0
      %v763 = vsel %vm723, %v710, 0
      %v764 = vsel %vm723, %v711, 0
      %v765 = vsel %vm723, %v712, 0
      %v766 = vsel %vm723, %v713, 0
      %v767 = vsel %vm723, %v714, 0
      %v768 = vsel %vm723, %v715, 0
      %v769 = vsel %vm723, %v716, 0
      %v770 = vsel %vm723, %v717, 0
      %v771 = vsel %vm723, %v718, 0
      %v772 = vsel %vm723, %v719, 0
      %v773 = vsel %vm723, %v720, 0
      %v774 = vsel %vm723, %v721, 0
      %v775 = vsel %vm723, %v722, 0
      %vm776 = vsmask.f32 7424
      %v777 = vshrl.u32 %v726, 16
      %v779 = vshll.u32 %v726, 16
      %v781 = vrot.slane %v779, 1
      %v782 = vor.u32 %v777, %v781
      %v783 = vshll.u32 %v759, 16
      %v785 = vrot.slane %v783, 1
      %v786 = vsel %vm776, %v782, %v785
      %v787 = vshrl.u32 %v759, 16
      %v789 = vor.u32 %v787, %v785
      %v790 = vshrl.u32 %v728, 16
      %v792 = vshll.u32 %v728, 16
      %v794 = vrot.slane %v792, 1
      %v795 = vor.u32 %v790, %v794
      %v796 = vshll.u32 %v760, 16
      %v798 = vrot.slane %v796, 1
      %v799 = vsel %vm776, %v795, %v798
      %v800 = vshrl.u32 %v760, 16
      %v802 = vor.u32 %v800, %v798
      %v803 = vshrl.u32 %v730, 16
      %v805 = vshll.u32 %v730, 16
      %v807 = vrot.slane %v805, 1
      %v808 = vor.u32 %v803, %v807
      %v809 = vshll.u32 %v761, 16
      %v811 = vrot.slane %v809, 1
      %v812 = vsel %vm776, %v808, %v811
      %v813 = vshrl.u32 %v761, 16
      %v815 = vor.u32 %v813, %v811
      %v816 = vshrl.u32 %v732, 16
      %v818 = vshll.u32 %v732, 16
      %v820 = vrot.slane %v818, 1
      %v821 = vor.u32 %v816, %v820
      %v822 = vshll.u32 %v762, 16
      %v824 = vrot.slane %v822, 1
      %v825 = vsel %vm776, %v821, %v824
      %v826 = vshrl.u32 %v762, 16
      %v828 = vor.u32 %v826, %v824
      %v829 = vshrl.u32 %v734, 16
      %v831 = vshll.u32 %v734, 16
      %v833 = vrot.slane %v831, 1
      %v834 = vor.u32 %v829, %v833
      %v835 = vshll.u32 %v763, 16
      %v837 = vrot.slane %v835, 1
      %v838 = vsel %vm776, %v834, %v837
      %v839 = vshrl.u32 %v763, 16
      %v841 = vor.u32 %v839, %v837
      %v842 = vshrl.u32 %v736, 16
      %v844 = vshll.u32 %v736, 16
      %v846 = vrot.slane %v844, 1
      %v847 = vor.u32 %v842, %v846
      %v848 = vshll.u32 %v764, 16
      %v850 = vrot.slane %v848, 1
      %v851 = vsel %vm776, %v847, %v850
      %v852 = vshrl.u32 %v764, 16
      %v854 = vor.u32 %v852, %v850
      %v855 = vshrl.u32 %v738, 16
      %v857 = vshll.u32 %v738, 16
      %v859 = vrot.slane %v857, 1
      %v860 = vor.u32 %v855, %v859
      %v861 = vshll.u32 %v765, 16
      %v863 = vrot.slane %v861, 1
      %v864 = vsel %vm776, %v860, %v863
      %v865 = vshrl.u32 %v765, 16
      %v867 = vor.u32 %v865, %v863
      %v868 = vshrl.u32 %v740, 16
      %v870 = vshll.u32 %v740, 16
      %v872 = vrot.slane %v870, 1
      %v873 = vor.u32 %v868, %v872
      %v874 = vshll.u32 %v766, 16
      %v876 = vrot.slane %v874, 1
      %v877 = vsel %vm776, %v873, %v876
      %v878 = vshrl.u32 %v766, 16
      %v880 = vor.u32 %v878, %v876
      %v881 = vshrl.u32 %v742, 16
      %v883 = vshll.u32 %v742, 16
      %v885 = vrot.slane %v883, 1
      %v886 = vor.u32 %v881, %v885
      %v887 = vshll.u32 %v767, 16
      %v889 = vrot.slane %v887, 1
      %v890 = vsel %vm776, %v886, %v889
      %v891 = vshrl.u32 %v767, 16
      %v893 = vor.u32 %v891, %v889
      %v894 = vshrl.u32 %v744, 16
      %v896 = vshll.u32 %v744, 16
      %v898 = vrot.slane %v896, 1
      %v899 = vor.u32 %v894, %v898
      %v900 = vshll.u32 %v768, 16
      %v902 = vrot.slane %v900, 1
      %v903 = vsel %vm776, %v899, %v902
      %v904 = vshrl.u32 %v768, 16
      %v906 = vor.u32 %v904, %v902
      %v907 = vshrl.u32 %v746, 16
      %v909 = vshll.u32 %v746, 16
      %v911 = vrot.slane %v909, 1
      %v912 = vor.u32 %v907, %v911
      %v913 = vshll.u32 %v769, 16
      %v915 = vrot.slane %v913, 1
      %v916 = vsel %vm776, %v912, %v915
      %v917 = vshrl.u32 %v769, 16
      %v919 = vor.u32 %v917, %v915
      %v920 = vshrl.u32 %v748, 16
      %v922 = vshll.u32 %v748, 16
      %v924 = vrot.slane %v922, 1
      %v925 = vor.u32 %v920, %v924
      %v926 = vshll.u32 %v770, 16
      %v928 = vrot.slane %v926, 1
      %v929 = vsel %vm776, %v925, %v928
      %v930 = vshrl.u32 %v770, 16
      %v932 = vor.u32 %v930, %v928
      %v933 = vshrl.u32 %v750, 16
      %v935 = vshll.u32 %v750, 16
      %v937 = vrot.slane %v935, 1
      %v938 = vor.u32 %v933, %v937
      %v939 = vshll.u32 %v771, 16
      %v941 = vrot.slane %v939, 1
      %v942 = vsel %vm776, %v938, %v941
      %v943 = vshrl.u32 %v771, 16
      %v945 = vor.u32 %v943, %v941
      %v946 = vshrl.u32 %v752, 16
      %v948 = vshll.u32 %v752, 16
      %v950 = vrot.slane %v948, 1
      %v951 = vor.u32 %v946, %v950
      %v952 = vshll.u32 %v772, 16
      %v954 = vrot.slane %v952, 1
      %v955 = vsel %vm776, %v951, %v954
      %v956 = vshrl.u32 %v772, 16
      %v958 = vor.u32 %v956, %v954
      %v959 = vshrl.u32 %v754, 16
      %v961 = vshll.u32 %v754, 16
      %v963 = vrot.slane %v961, 1
      %v964 = vor.u32 %v959, %v963
      %v965 = vshll.u32 %v773, 16
      %v967 = vrot.slane %v965, 1
      %v968 = vsel %vm776, %v964, %v967
      %v969 = vshrl.u32 %v773, 16
      %v971 = vor.u32 %v969, %v967
      %v972 = vshrl.u32 %v756, 16
      %v974 = vshll.u32 %v756, 16
      %v976 = vrot.slane %v974, 1
      %v977 = vor.u32 %v972, %v976
      %v978 = vshll.u32 %v774, 16
      %v980 = vrot.slane %v978, 1
      %v981 = vsel %vm776, %v977, %v980
      %v982 = vshrl.u32 %v774, 16
      %v984 = vor.u32 %v982, %v980
      %vm1017 = vcmask 1046528
      %v1018 = vrot.slane %v726, 1
      %v1019 = vrot.slane %v759, 1
      %v1020 = vsel %vm1017, %v1018, %v1019
      %v1021 = vrot.slane %v728, 1
      %v1022 = vrot.slane %v760, 1
      %v1023 = vsel %vm1017, %v1021, %v1022
      %v1024 = vrot.slane %v730, 1
      %v1025 = vrot.slane %v761, 1
      %v1026 = vsel %vm1017, %v1024, %v1025
      %v1027 = vrot.slane %v732, 1
      %v1028 = vrot.slane %v762, 1
      %v1029 = vsel %vm1017, %v1027, %v1028
      %v1030 = vrot.slane %v734, 1
      %v1031 = vrot.slane %v763, 1
      %v1032 = vsel %vm1017, %v1030, %v1031
      %v1033 = vrot.slane %v736, 1
      %v1034 = vrot.slane %v764, 1
      %v1035 = vsel %vm1017, %v1033, %v1034
      %v1036 = vrot.slane %v738, 1
      %v1037 = vrot.slane %v765, 1
      %v1038 = vsel %vm1017, %v1036, %v1037
      %v1039 = vrot.slane %v740, 1
      %v1040 = vrot.slane %v766, 1
      %v1041 = vsel %vm1017, %v1039, %v1040
      %v1042 = vrot.slane %v742, 1
      %v1043 = vrot.slane %v767, 1
      %v1044 = vsel %vm1017, %v1042, %v1043
      %v1045 = vrot.slane %v744, 1
      %v1046 = vrot.slane %v768, 1
      %v1047 = vsel %vm1017, %v1045, %v1046
      %v1048 = vrot.slane %v746, 1
      %v1049 = vrot.slane %v769, 1
      %v1050 = vsel %vm1017, %v1048, %v1049
      %v1051 = vrot.slane %v748, 1
      %v1052 = vrot.slane %v770, 1
      %v1053 = vsel %vm1017, %v1051, %v1052
      %v1054 = vrot.slane %v750, 1
      %v1055 = vrot.slane %v771, 1
      %v1056 = vsel %vm1017, %v1054, %v1055
      %v1057 = vrot.slane %v752, 1
      %v1058 = vrot.slane %v772, 1
      %v1059 = vsel %vm1017, %v1057, %v1058
      %v1060 = vrot.slane %v754, 1
      %v1061 = vrot.slane %v773, 1
      %v1062 = vsel %vm1017, %v1060, %v1061
      %v1063 = vrot.slane %v756, 1
      %v1064 = vrot.slane %v774, 1
      %v1065 = vsel %vm1017, %v1063, %v1064
      %v1066 = vshrl.u32 %v758, 16
      %v1068 = vshll.u32 %v758, 16
      %v1070 = vrot.slane %v1068, 1
      %v1071 = vor.u32 %v1066, %v1070
      %v1072 = vshll.u32 %v775, 16
      %v1074 = vrot.slane %v1072, 1
      %v1075 = vsel %vm776, %v1071, %v1074
      %v1076 = vshrl.u32 %v775, 16
      %v1078 = vor.u32 %v1076, %v1074
      %v1081 = vrot.slane %v758, 1
      %v1082 = vrot.slane %v775, 1
      %v1083 = vsel %vm1017, %v1081, %v1082
      %vm1084 = vsmask.f32 4352
      %v1085 = vrot.slane %v777, 3
      %v1086 = vrot.slane %v779, 4
      %v1087 = vor.u32 %v1085, %v1086
      %v1088 = vrot.slane %v787, 3
      %v1089 = vrot.slane %v783, 4
      %v1090 = vor.u32 %v1088, %v1089
      %v1091 = vsel %vm1084, %v1087, %v1090
      %v1093 = vshrl.u32 %v786, 16
      %v1095 = vrot.slane %v1093, 3
      %v1096 = vshll.u32 %v786, 16
      %v1098 = vrot.slane %v1096, 4
      %v1099 = vor.u32 %v1095, %v1098
      %v1101 = vshrl.u32 %v789, 16
      %v1103 = vrot.slane %v1101, 3
      %v1104 = vshll.u32 %v789, 16
      %v1106 = vrot.slane %v1104, 4
      %v1107 = vor.u32 %v1103, %v1106
      %v1108 = vsel %vm1084, %v1099, %v1107
      %v1110 = vshrl.u32 %v1020, 16
      %v1112 = vrot.slane %v1110, 3
      %v1113 = vshll.u32 %v1020, 16
      %v1115 = vrot.slane %v1113, 4
      %v1116 = vor.u32 %v1112, %v1115
      %v1118 = vshrl.u32 %v1019, 16
      %v1120 = vrot.slane %v1118, 3
      %v1121 = vshll.u32 %v1019, 16
      %v1123 = vrot.slane %v1121, 4
      %v1124 = vor.u32 %v1120, %v1123
      %v1125 = vsel %vm1084, %v1116, %v1124
      %v1126 = vrot.slane %v790, 3
      %v1127 = vrot.slane %v792, 4
      %v1128 = vor.u32 %v1126, %v1127
      %v1129 = vrot.slane %v800, 3
      %v1130 = vrot.slane %v796, 4
      %v1131 = vor.u32 %v1129, %v1130
      %v1132 = vsel %vm1084, %v1128, %v1131
      %v1134 = vshrl.u32 %v799, 16
      %v1136 = vrot.slane %v1134, 3
      %v1137 = vshll.u32 %v799, 16
      %v1139 = vrot.slane %v1137, 4
      %v1140 = vor.u32 %v1136, %v1139
      %v1142 = vshrl.u32 %v802, 16
      %v1144 = vrot.slane %v1142, 3
      %v1145 = vshll.u32 %v802, 16
      %v1147 = vrot.slane %v1145, 4
      %v1148 = vor.u32 %v1144, %v1147
      %v1149 = vsel %vm1084, %v1140, %v1148
      %v1151 = vshrl.u32 %v1023, 16
      %v1153 = vrot.slane %v1151, 3
      %v1154 = vshll.u32 %v1023, 16
      %v1156 = vrot.slane %v1154, 4
      %v1157 = vor.u32 %v1153, %v1156
      %v1159 = vshrl.u32 %v1022, 16
      %v1161 = vrot.slane %v1159, 3
      %v1162 = vshll.u32 %v1022, 16
      %v1164 = vrot.slane %v1162, 4
      %v1165 = vor.u32 %v1161, %v1164
      %v1166 = vsel %vm1084, %v1157, %v1165
      %v1167 = vrot.slane %v803, 3
      %v1168 = vrot.slane %v805, 4
      %v1169 = vor.u32 %v1167, %v1168
      %v1170 = vrot.slane %v813, 3
      %v1171 = vrot.slane %v809, 4
      %v1172 = vor.u32 %v1170, %v1171
      %v1173 = vsel %vm1084, %v1169, %v1172
      %v1175 = vshrl.u32 %v812, 16
      %v1177 = vrot.slane %v1175, 3
      %v1178 = vshll.u32 %v812, 16
      %v1180 = vrot.slane %v1178, 4
      %v1181 = vor.u32 %v1177, %v1180
      %v1183 = vshrl.u32 %v815, 16
      %v1185 = vrot.slane %v1183, 3
      %v1186 = vshll.u32 %v815, 16
      %v1188 = vrot.slane %v1186, 4
      %v1189 = vor.u32 %v1185, %v1188
      %v1190 = vsel %vm1084, %v1181, %v1189
      %v1192 = vshrl.u32 %v1026, 16
      %v1194 = vrot.slane %v1192, 3
      %v1195 = vshll.u32 %v1026, 16
      %v1197 = vrot.slane %v1195, 4
      %v1198 = vor.u32 %v1194, %v1197
      %v1200 = vshrl.u32 %v1025, 16
      %v1202 = vrot.slane %v1200, 3
      %v1203 = vshll.u32 %v1025, 16
      %v1205 = vrot.slane %v1203, 4
      %v1206 = vor.u32 %v1202, %v1205
      %v1207 = vsel %vm1084, %v1198, %v1206
      %v1208 = vrot.slane %v816, 3
      %v1209 = vrot.slane %v818, 4
      %v1210 = vor.u32 %v1208, %v1209
      %v1211 = vrot.slane %v826, 3
      %v1212 = vrot.slane %v822, 4
      %v1213 = vor.u32 %v1211, %v1212
      %v1214 = vsel %vm1084, %v1210, %v1213
      %v1216 = vshrl.u32 %v825, 16
      %v1218 = vrot.slane %v1216, 3
      %v1219 = vshll.u32 %v825, 16
      %v1221 = vrot.slane %v1219, 4
      %v1222 = vor.u32 %v1218, %v1221
      %v1224 = vshrl.u32 %v828, 16
      %v1226 = vrot.slane %v1224, 3
      %v1227 = vshll.u32 %v828, 16
      %v1229 = vrot.slane %v1227, 4
      %v1230 = vor.u32 %v1226, %v1229
      %v1231 = vsel %vm1084, %v1222, %v1230
      %v1233 = vshrl.u32 %v1029, 16
      %v1235 = vrot.slane %v1233, 3
      %v1236 = vshll.u32 %v1029, 16
      %v1238 = vrot.slane %v1236, 4
      %v1239 = vor.u32 %v1235, %v1238
      %v1241 = vshrl.u32 %v1028, 16
      %v1243 = vrot.slane %v1241, 3
      %v1244 = vshll.u32 %v1028, 16
      %v1246 = vrot.slane %v1244, 4
      %v1247 = vor.u32 %v1243, %v1246
      %v1248 = vsel %vm1084, %v1239, %v1247
      %v1249 = vrot.slane %v829, 3
      %v1250 = vrot.slane %v831, 4
      %v1251 = vor.u32 %v1249, %v1250
      %v1252 = vrot.slane %v839, 3
      %v1253 = vrot.slane %v835, 4
      %v1254 = vor.u32 %v1252, %v1253
      %v1255 = vsel %vm1084, %v1251, %v1254
      %v1257 = vshrl.u32 %v838, 16
      %v1259 = vrot.slane %v1257, 3
      %v1260 = vshll.u32 %v838, 16
      %v1262 = vrot.slane %v1260, 4
      %v1263 = vor.u32 %v1259, %v1262
      %v1265 = vshrl.u32 %v841, 16
      %v1267 = vrot.slane %v1265, 3
      %v1268 = vshll.u32 %v841, 16
      %v1270 = vrot.slane %v1268, 4
      %v1271 = vor.u32 %v1267, %v1270
      %v1272 = vsel %vm1084, %v1263, %v1271
      %v1274 = vshrl.u32 %v1032, 16
      %v1276 = vrot.slane %v1274, 3
      %v1277 = vshll.u32 %v1032, 16
      %v1279 = vrot.slane %v1277, 4
      %v1280 = vor.u32 %v1276, %v1279
      %v1282 = vshrl.u32 %v1031, 16
      %v1284 = vrot.slane %v1282, 3
      %v1285 = vshll.u32 %v1031, 16
      %v1287 = vrot.slane %v1285, 4
      %v1288 = vor.u32 %v1284, %v1287
      %v1289 = vsel %vm1084, %v1280, %v1288
      %v1290 = vrot.slane %v842, 3
      %v1291 = vrot.slane %v844, 4
      %v1292 = vor.u32 %v1290, %v1291
      %v1293 = vrot.slane %v852, 3
      %v1294 = vrot.slane %v848, 4
      %v1295 = vor.u32 %v1293, %v1294
      %v1296 = vsel %vm1084, %v1292, %v1295
      %v1298 = vshrl.u32 %v851, 16
      %v1300 = vrot.slane %v1298, 3
      %v1301 = vshll.u32 %v851, 16
      %v1303 = vrot.slane %v1301, 4
      %v1304 = vor.u32 %v1300, %v1303
      %v1306 = vshrl.u32 %v854, 16
      %v1308 = vrot.slane %v1306, 3
      %v1309 = vshll.u32 %v854, 16
      %v1311 = vrot.slane %v1309, 4
      %v1312 = vor.u32 %v1308, %v1311
      %v1313 = vsel %vm1084, %v1304, %v1312
      %v1315 = vshrl.u32 %v1035, 16
      %v1317 = vrot.slane %v1315, 3
      %v1318 = vshll.u32 %v1035, 16
      %v1320 = vrot.slane %v1318, 4
      %v1321 = vor.u32 %v1317, %v1320
      %v1323 = vshrl.u32 %v1034, 16
      %v1325 = vrot.slane %v1323, 3
      %v1326 = vshll.u32 %v1034, 16
      %v1328 = vrot.slane %v1326, 4
      %v1329 = vor.u32 %v1325, %v1328
      %v1330 = vsel %vm1084, %v1321, %v1329
      %v1331 = vrot.slane %v855, 3
      %v1332 = vrot.slane %v857, 4
      %v1333 = vor.u32 %v1331, %v1332
      %v1334 = vrot.slane %v865, 3
      %v1335 = vrot.slane %v861, 4
      %v1336 = vor.u32 %v1334, %v1335
      %v1337 = vsel %vm1084, %v1333, %v1336
      %v1339 = vshrl.u32 %v864, 16
      %v1341 = vrot.slane %v1339, 3
      %v1342 = vshll.u32 %v864, 16
      %v1344 = vrot.slane %v1342, 4
      %v1345 = vor.u32 %v1341, %v1344
      %v1347 = vshrl.u32 %v867, 16
      %v1349 = vrot.slane %v1347, 3
      %v1350 = vshll.u32 %v867, 16
      %v1352 = vrot.slane %v1350, 4
      %v1353 = vor.u32 %v1349, %v1352
      %v1354 = vsel %vm1084, %v1345, %v1353
      %v1356 = vshrl.u32 %v1038, 16
      %v1358 = vrot.slane %v1356, 3
      %v1359 = vshll.u32 %v1038, 16
      %v1361 = vrot.slane %v1359, 4
      %v1362 = vor.u32 %v1358, %v1361
      %v1364 = vshrl.u32 %v1037, 16
      %v1366 = vrot.slane %v1364, 3
      %v1367 = vshll.u32 %v1037, 16
      %v1369 = vrot.slane %v1367, 4
      %v1370 = vor.u32 %v1366, %v1369
      %v1371 = vsel %vm1084, %v1362, %v1370
      %v1372 = vrot.slane %v868, 3
      %v1373 = vrot.slane %v870, 4
      %v1374 = vor.u32 %v1372, %v1373
      %v1375 = vrot.slane %v878, 3
      %v1376 = vrot.slane %v874, 4
      %v1377 = vor.u32 %v1375, %v1376
      %v1378 = vsel %vm1084, %v1374, %v1377
      %v1380 = vshrl.u32 %v877, 16
      %v1382 = vrot.slane %v1380, 3
      %v1383 = vshll.u32 %v877, 16
      %v1385 = vrot.slane %v1383, 4
      %v1386 = vor.u32 %v1382, %v1385
      %v1388 = vshrl.u32 %v880, 16
      %v1390 = vrot.slane %v1388, 3
      %v1391 = vshll.u32 %v880, 16
      %v1393 = vrot.slane %v1391, 4
      %v1394 = vor.u32 %v1390, %v1393
      %v1395 = vsel %vm1084, %v1386, %v1394
      %v1397 = vshrl.u32 %v1041, 16
      %v1399 = vrot.slane %v1397, 3
      %v1400 = vshll.u32 %v1041, 16
      %v1402 = vrot.slane %v1400, 4
      %v1403 = vor.u32 %v1399, %v1402
      %v1405 = vshrl.u32 %v1040, 16
      %v1407 = vrot.slane %v1405, 3
      %v1408 = vshll.u32 %v1040, 16
      %v1410 = vrot.slane %v1408, 4
      %v1411 = vor.u32 %v1407, %v1410
      %v1412 = vsel %vm1084, %v1403, %v1411
      %v1413 = vrot.slane %v881, 3
      %v1414 = vrot.slane %v883, 4
      %v1415 = vor.u32 %v1413, %v1414
      %v1416 = vrot.slane %v891, 3
      %v1417 = vrot.slane %v887, 4
      %v1418 = vor.u32 %v1416, %v1417
      %v1419 = vsel %vm1084, %v1415, %v1418
      %v1421 = vshrl.u32 %v890, 16
      %v1423 = vrot.slane %v1421, 3
      %v1424 = vshll.u32 %v890, 16
      %v1426 = vrot.slane %v1424, 4
      %v1427 = vor.u32 %v1423, %v1426
      %v1429 = vshrl.u32 %v893, 16
      %v1431 = vrot.slane %v1429, 3
      %v1432 = vshll.u32 %v893, 16
      %v1434 = vrot.slane %v1432, 4
      %v1435 = vor.u32 %v1431, %v1434
      %v1436 = vsel %vm1084, %v1427, %v1435
      %v1438 = vshrl.u32 %v1044, 16
      %v1440 = vrot.slane %v1438, 3
      %v1441 = vshll.u32 %v1044, 16
      %v1443 = vrot.slane %v1441, 4
      %v1444 = vor.u32 %v1440, %v1443
      %v1446 = vshrl.u32 %v1043, 16
      %v1448 = vrot.slane %v1446, 3
      %v1449 = vshll.u32 %v1043, 16
      %v1451 = vrot.slane %v1449, 4
      %v1452 = vor.u32 %v1448, %v1451
      %v1453 = vsel %vm1084, %v1444, %v1452
      %v1454 = vrot.slane %v894, 3
      %v1455 = vrot.slane %v896, 4
      %v1456 = vor.u32 %v1454, %v1455
      %v1457 = vrot.slane %v904, 3
      %v1458 = vrot.slane %v900, 4
      %v1459 = vor.u32 %v1457, %v1458
      %v1460 = vsel %vm1084, %v1456, %v1459
      %v1462 = vshrl.u32 %v903, 16
      %v1464 = vrot.slane %v1462, 3
      %v1465 = vshll.u32 %v903, 16
      %v1467 = vrot.slane %v1465, 4
      %v1468 = vor.u32 %v1464, %v1467
      %v1470 = vshrl.u32 %v906, 16
      %v1472 = vrot.slane %v1470, 3
      %v1473 = vshll.u32 %v906, 16
      %v1475 = vrot.slane %v1473, 4
      %v1476 = vor.u32 %v1472, %v1475
      %v1477 = vsel %vm1084, %v1468, %v1476
      %v1479 = vshrl.u32 %v1047, 16
      %v1481 = vrot.slane %v1479, 3
      %v1482 = vshll.u32 %v1047, 16
      %v1484 = vrot.slane %v1482, 4
      %v1485 = vor.u32 %v1481, %v1484
      %v1487 = vshrl.u32 %v1046, 16
      %v1489 = vrot.slane %v1487, 3
      %v1490 = vshll.u32 %v1046, 16
      %v1492 = vrot.slane %v1490, 4
      %v1493 = vor.u32 %v1489, %v1492
      %v1494 = vsel %vm1084, %v1485, %v1493
      %v1495 = vrot.slane %v907, 3
      %v1496 = vrot.slane %v909, 4
      %v1497 = vor.u32 %v1495, %v1496
      %v1498 = vrot.slane %v917, 3
      %v1499 = vrot.slane %v913, 4
      %v1500 = vor.u32 %v1498, %v1499
      %v1501 = vsel %vm1084, %v1497, %v1500
      %v1503 = vshrl.u32 %v916, 16
      %v1505 = vrot.slane %v1503, 3
      %v1506 = vshll.u32 %v916, 16
      %v1508 = vrot.slane %v1506, 4
      %v1509 = vor.u32 %v1505, %v1508
      %v1511 = vshrl.u32 %v919, 16
      %v1513 = vrot.slane %v1511, 3
      %v1514 = vshll.u32 %v919, 16
      %v1516 = vrot.slane %v1514, 4
      %v1517 = vor.u32 %v1513, %v1516
      %v1518 = vsel %vm1084, %v1509, %v1517
      %v1520 = vshrl.u32 %v1050, 16
      %v1522 = vrot.slane %v1520, 3
      %v1523 = vshll.u32 %v1050, 16
      %v1525 = vrot.slane %v1523, 4
      %v1526 = vor.u32 %v1522, %v1525
      %v1528 = vshrl.u32 %v1049, 16
      %v1530 = vrot.slane %v1528, 3
      %v1531 = vshll.u32 %v1049, 16
      %v1533 = vrot.slane %v1531, 4
      %v1534 = vor.u32 %v1530, %v1533
      %v1535 = vsel %vm1084, %v1526, %v1534
      %v1536 = vrot.slane %v920, 3
      %v1537 = vrot.slane %v922, 4
      %v1538 = vor.u32 %v1536, %v1537
      %v1539 = vrot.slane %v930, 3
      %v1540 = vrot.slane %v926, 4
      %v1541 = vor.u32 %v1539, %v1540
      %v1542 = vsel %vm1084, %v1538, %v1541
      %v1544 = vshrl.u32 %v929, 16
      %v1546 = vrot.slane %v1544, 3
      %v1547 = vshll.u32 %v929, 16
      %v1549 = vrot.slane %v1547, 4
      %v1550 = vor.u32 %v1546, %v1549
      %v1552 = vshrl.u32 %v932, 16
      %v1554 = vrot.slane %v1552, 3
      %v1555 = vshll.u32 %v932, 16
      %v1557 = vrot.slane %v1555, 4
      %v1558 = vor.u32 %v1554, %v1557
      %v1559 = vsel %vm1084, %v1550, %v1558
      %v1561 = vshrl.u32 %v1053, 16
      %v1563 = vrot.slane %v1561, 3
      %v1564 = vshll.u32 %v1053, 16
      %v1566 = vrot.slane %v1564, 4
      %v1567 = vor.u32 %v1563, %v1566
      %v1569 = vshrl.u32 %v1052, 16
      %v1571 = vrot.slane %v1569, 3
      %v1572 = vshll.u32 %v1052, 16
      %v1574 = vrot.slane %v1572, 4
      %v1575 = vor.u32 %v1571, %v1574
      %v1576 = vsel %vm1084, %v1567, %v1575
      %v1577 = vrot.slane %v933, 3
      %v1578 = vrot.slane %v935, 4
      %v1579 = vor.u32 %v1577, %v1578
      %v1580 = vrot.slane %v943, 3
      %v1581 = vrot.slane %v939, 4
      %v1582 = vor.u32 %v1580, %v1581
      %v1583 = vsel %vm1084, %v1579, %v1582
      %v1585 = vshrl.u32 %v942, 16
      %v1587 = vrot.slane %v1585, 3
      %v1588 = vshll.u32 %v942, 16
      %v1590 = vrot.slane %v1588, 4
      %v1591 = vor.u32 %v1587, %v1590
      %v1593 = vshrl.u32 %v945, 16
      %v1595 = vrot.slane %v1593, 3
      %v1596 = vshll.u32 %v945, 16
      %v1598 = vrot.slane %v1596, 4
      %v1599 = vor.u32 %v1595, %v1598
      %v1600 = vsel %vm1084, %v1591, %v1599
      %v1602 = vshrl.u32 %v1056, 16
      %v1604 = vrot.slane %v1602, 3
      %v1605 = vshll.u32 %v1056, 16
      %v1607 = vrot.slane %v1605, 4
      %v1608 = vor.u32 %v1604, %v1607
      %v1610 = vshrl.u32 %v1055, 16
      %v1612 = vrot.slane %v1610, 3
      %v1613 = vshll.u32 %v1055, 16
      %v1615 = vrot.slane %v1613, 4
      %v1616 = vor.u32 %v1612, %v1615
      %v1617 = vsel %vm1084, %v1608, %v1616
      %v1618 = vrot.slane %v946, 3
      %v1619 = vrot.slane %v948, 4
      %v1620 = vor.u32 %v1618, %v1619
      %v1621 = vrot.slane %v956, 3
      %v1622 = vrot.slane %v952, 4
      %v1623 = vor.u32 %v1621, %v1622
      %v1624 = vsel %vm1084, %v1620, %v1623
      %v1626 = vshrl.u32 %v955, 16
      %v1628 = vrot.slane %v1626, 3
      %v1629 = vshll.u32 %v955, 16
      %v1631 = vrot.slane %v1629, 4
      %v1632 = vor.u32 %v1628, %v1631
      %v1634 = vshrl.u32 %v958, 16
      %v1636 = vrot.slane %v1634, 3
      %v1637 = vshll.u32 %v958, 16
      %v1639 = vrot.slane %v1637, 4
      %v1640 = vor.u32 %v1636, %v1639
      %v1641 = vsel %vm1084, %v1632, %v1640
      %v1643 = vshrl.u32 %v1059, 16
      %v1645 = vrot.slane %v1643, 3
      %v1646 = vshll.u32 %v1059, 16
      %v1648 = vrot.slane %v1646, 4
      %v1649 = vor.u32 %v1645, %v1648
      %v1651 = vshrl.u32 %v1058, 16
      %v1653 = vrot.slane %v1651, 3
      %v1654 = vshll.u32 %v1058, 16
      %v1656 = vrot.slane %v1654, 4
      %v1657 = vor.u32 %v1653, %v1656
      %v1658 = vsel %vm1084, %v1649, %v1657
      %v1659 = vrot.slane %v959, 3
      %v1660 = vrot.slane %v961, 4
      %v1661 = vor.u32 %v1659, %v1660
      %v1662 = vrot.slane %v969, 3
      %v1663 = vrot.slane %v965, 4
      %v1664 = vor.u32 %v1662, %v1663
      %v1665 = vsel %vm1084, %v1661, %v1664
      %v1667 = vshrl.u32 %v968, 16
      %v1669 = vrot.slane %v1667, 3
      %v1670 = vshll.u32 %v968, 16
      %v1672 = vrot.slane %v1670, 4
      %v1673 = vor.u32 %v1669, %v1672
      %v1675 = vshrl.u32 %v971, 16
      %v1677 = vrot.slane %v1675, 3
      %v1678 = vshll.u32 %v971, 16
      %v1680 = vrot.slane %v1678, 4
      %v1681 = vor.u32 %v1677, %v1680
      %v1682 = vsel %vm1084, %v1673, %v1681
      %v1684 = vshrl.u32 %v1062, 16
      %v1686 = vrot.slane %v1684, 3
      %v1687 = vshll.u32 %v1062, 16
      %v1689 = vrot.slane %v1687, 4
      %v1690 = vor.u32 %v1686, %v1689
      %v1692 = vshrl.u32 %v1061, 16
      %v1694 = vrot.slane %v1692, 3
      %v1695 = vshll.u32 %v1061, 16
      %v1697 = vrot.slane %v1695, 4
      %v1698 = vor.u32 %v1694, %v1697
      %v1699 = vsel %vm1084, %v1690, %v1698
      %v1700 = vrot.slane %v972, 3
      %v1701 = vrot.slane %v974, 4
      %v1702 = vor.u32 %v1700, %v1701
      %v1703 = vrot.slane %v982, 3
      %v1704 = vrot.slane %v978, 4
      %v1705 = vor.u32 %v1703, %v1704
      %v1706 = vsel %vm1084, %v1702, %v1705
      %v1708 = vshrl.u32 %v981, 16
      %v1710 = vrot.slane %v1708, 3
      %v1711 = vshll.u32 %v981, 16
      %v1713 = vrot.slane %v1711, 4
      %v1714 = vor.u32 %v1710, %v1713
      %v1716 = vshrl.u32 %v984, 16
      %v1718 = vrot.slane %v1716, 3
      %v1719 = vshll.u32 %v984, 16
      %v1721 = vrot.slane %v1719, 4
      %v1722 = vor.u32 %v1718, %v1721
      %v1723 = vsel %vm1084, %v1714, %v1722
      %v1725 = vshrl.u32 %v1065, 16
      %v1727 = vrot.slane %v1725, 3
      %v1728 = vshll.u32 %v1065, 16
      %v1730 = vrot.slane %v1728, 4
      %v1731 = vor.u32 %v1727, %v1730
      %v1733 = vshrl.u32 %v1064, 16
      %v1735 = vrot.slane %v1733, 3
      %v1736 = vshll.u32 %v1064, 16
      %v1738 = vrot.slane %v1736, 4
      %v1739 = vor.u32 %v1735, %v1738
      %v1740 = vsel %vm1084, %v1731, %v1739
      %v1741 = vrot.slane %v1066, 3
      %v1742 = vrot.slane %v1068, 4
      %v1743 = vor.u32 %v1741, %v1742
      %v1744 = vrot.slane %v1076, 3
      %v1745 = vrot.slane %v1072, 4
      %v1746 = vor.u32 %v1744, %v1745
      %v1747 = vsel %vm1084, %v1743, %v1746
      %v1749 = vshrl.u32 %v1075, 16
      %v1751 = vrot.slane %v1749, 3
      %v1752 = vshll.u32 %v1075, 16
      %v1754 = vrot.slane %v1752, 4
      %v1755 = vor.u32 %v1751, %v1754
      %v1757 = vshrl.u32 %v1078, 16
      %v1759 = vrot.slane %v1757, 3
      %v1760 = vshll.u32 %v1078, 16
      %v1762 = vrot.slane %v1760, 4
      %v1763 = vor.u32 %v1759, %v1762
      %v1764 = vsel %vm1084, %v1755, %v1763
      %v1766 = vshrl.u32 %v1083, 16
      %v1768 = vrot.slane %v1766, 3
      %v1769 = vshll.u32 %v1083, 16
      %v1771 = vrot.slane %v1769, 4
      %v1772 = vor.u32 %v1768, %v1771
      %v1774 = vshrl.u32 %v1082, 16
      %v1776 = vrot.slane %v1774, 3
      %v1777 = vshll.u32 %v1082, 16
      %v1779 = vrot.slane %v1777, 4
      %v1780 = vor.u32 %v1776, %v1779
      %v1781 = vsel %vm1084, %v1772, %v1780
      %v1833 = vld [vmem:[%s3] sm:$0xf]
      %v1834 = vld [vmem:[%s3 + $0x4] sm:$0xf]
      %v1835 = vld [vmem:[%s3 + $0x8] sm:$0xf]
      %v1836 = vld [vmem:[%s3 + $0xc] sm:$0xf]
      %v1837 = vld [vmem:[%s3 + $0x10] sm:$0xf]
      %v1838 = vld [vmem:[%s3 + $0x14] sm:$0xf]
      %v1839 = vld [vmem:[%s3 + $0x18] sm:$0xf]
      %v1840 = vld [vmem:[%s3 + $0x1c] sm:$0xf]
      %v1841 = vld [vmem:[%s3 + $0x20] sm:$0xf]
      %v1842 = vld [vmem:[%s3 + $0x24] sm:$0xf]
      %v1843 = vld [vmem:[%s3 + $0x28] sm:$0xf]
      %v1844 = vld [vmem:[%s3 + $0x2c] sm:$0xf]
      %v1845 = vld [vmem:[%s3 + $0x30] sm:$0xf]
      %v1846 = vld [vmem:[%s3 + $0x34] sm:$0xf]
      %v1847 = vld [vmem:[%s3 + $0x38] sm:$0xf]
      %v1848 = vld [vmem:[%s3 + $0x3c] sm:$0xf]
      %v1849 = vld [vmem:[%s3 + $0x40] sm:$0xf]
      %v1850 = vld [vmem:[%s3 + $0x44] sm:$0xf]
      %v1851 = vld [vmem:[%s3 + $0x48] sm:$0xf]
      %v1852 = vld [vmem:[%s3 + $0x4c] sm:$0xf]
      %v1853 = vld [vmem:[%s3 + $0x50] sm:$0xf]
      %v1854 = vld [vmem:[%s3 + $0x54] sm:$0xf]
      %v1855 = vld [vmem:[%s3 + $0x58] sm:$0xf]
      %v1856 = vld [vmem:[%s3 + $0x5c] sm:$0xf]
      %v1857 = vld [vmem:[%s3 + $0x60] sm:$0xf]
      %v1858 = vld [vmem:[%s3 + $0x64] sm:$0xf]
      %v1859 = vld [vmem:[%s3 + $0x68] sm:$0xf]
      %v1860 = vld [vmem:[%s3 + $0x6c] sm:$0xf]
      %v1861 = vld [vmem:[%s3 + $0x70] sm:$0xf]
      %v1862 = vld [vmem:[%s3 + $0x74] sm:$0xf]
      %v1863 = vld [vmem:[%s3 + $0x78] sm:$0xf]
      %v1864 = vld [vmem:[%s3 + $0x7c] sm:$0xf]
      %v1865 = vld [vmem:[%s3 + $0x80] sm:$0xf]
      %v1866 = vld [vmem:[%s3 + $0x84] sm:$0xf]
      %v1867 = vld [vmem:[%s3 + $0x88] sm:$0xf]
      %v1868 = vld [vmem:[%s3 + $0x8c] sm:$0xf]
      %v1869 = vld [vmem:[%s3 + $0x90] sm:$0xf]
      %v1870 = vld [vmem:[%s3 + $0x94] sm:$0xf]
      %v1871 = vld [vmem:[%s3 + $0x98] sm:$0xf]
      %v1872 = vld [vmem:[%s3 + $0x9c] sm:$0xf]
      %v1873 = vld [vmem:[%s3 + $0xa0] sm:$0xf]
      %v1874 = vld [vmem:[%s3 + $0xa4] sm:$0xf]
      %v1875 = vld [vmem:[%s3 + $0xa8] sm:$0xf]
      %v1876 = vld [vmem:[%s3 + $0xac] sm:$0xf]
      %v1877 = vld [vmem:[%s3 + $0xb0] sm:$0xf]
      %v1878 = vld [vmem:[%s3 + $0xb4] sm:$0xf]
      %v1879 = vld [vmem:[%s3 + $0xb8] sm:$0xf]
      %v1880 = vld [vmem:[%s3 + $0xbc] sm:$0xf]
      %v1881 = vld [vmem:[%s3 + $0xc0] sm:$0xf]
      %v1882 = vld [vmem:[%s3 + $0xc4] sm:$0xf]
      %v1883 = vld [vmem:[%s3 + $0xc8] sm:$0xf]
      %v1884 = vld [vmem:[%s3 + $0xcc] sm:$0xf]
      %v1885 = vld [vmem:[%s3 + $0xd0] sm:$0xf]
      %v1886 = vld [vmem:[%s3 + $0xd4] sm:$0xf]
      %v1887 = vld [vmem:[%s3 + $0xd8] sm:$0xf]
      %v1888 = vld [vmem:[%s3 + $0xdc] sm:$0xf]
      %v1889 = vld [vmem:[%s3 + $0xe0] sm:$0xf]
      %v1890 = vld [vmem:[%s3 + $0xe4] sm:$0xf]
      %v1891 = vld [vmem:[%s3 + $0xe8] sm:$0xf]
      %v1892 = vld [vmem:[%s3 + $0xec] sm:$0xf]
      %v1893 = vld [vmem:[%s3 + $0xf0] sm:$0xf]
      %v1894 = vld [vmem:[%s3 + $0xf4] sm:$0xf]
      %v1895 = vld [vmem:[%s3 + $0xf8] sm:$0xf]
      %v1896 = vld [vmem:[%s3 + $0xfc] sm:$0xf]
      %v1897 = vld [vmem:[%s3 + $0x100] sm:$0xf]
      %v1898 = vld [vmem:[%s3 + $0x104] sm:$0xf]
      %v1899 = vld [vmem:[%s3 + $0x108] sm:$0xf]
      %v1900 = vld [vmem:[%s3 + $0x10c] sm:$0xf]
      %v1901 = vld [vmem:[%s3 + $0x110] sm:$0xf]
      %v1902 = vld [vmem:[%s3 + $0x114] sm:$0xf]
      %v1903 = vld [vmem:[%s3 + $0x118] sm:$0xf]
      %v1904 = vld [vmem:[%s3 + $0x11c] sm:$0xf]
      %v1905 = vld [vmem:[%s3 + $0x120] sm:$0xf]
      %v1906 = vld [vmem:[%s3 + $0x124] sm:$0xf]
      %v1907 = vld [vmem:[%s3 + $0x128] sm:$0xf]
      %v1908 = vld [vmem:[%s3 + $0x12c] sm:$0xf]
      %v1909 = vld [vmem:[%s3 + $0x130] sm:$0xf]
      %v1910 = vld [vmem:[%s3 + $0x134] sm:$0xf]
      %v1911 = vld [vmem:[%s3 + $0x138] sm:$0xf]
      %v1912 = vld [vmem:[%s3 + $0x13c] sm:$0xf]
      %v1913 = vld [vmem:[%s3 + $0x140] sm:$0xf]
      %v1914 = vld [vmem:[%s3 + $0x144] sm:$0xf]
      %v1915 = vld [vmem:[%s3 + $0x148] sm:$0xf]
      %v1916 = vld [vmem:[%s3 + $0x14c] sm:$0xf]
      %v1917 = vld [vmem:[%s3 + $0x150] sm:$0xf]
      %v1918 = vld [vmem:[%s3 + $0x154] sm:$0xf]
      %v1919 = vld [vmem:[%s3 + $0x158] sm:$0xf]
      %v1920 = vld [vmem:[%s3 + $0x15c] sm:$0xf]
      %v1921 = vld [vmem:[%s3 + $0x160] sm:$0xf]
      %v1922 = vld [vmem:[%s3 + $0x164] sm:$0xf]
      %v1923 = vld [vmem:[%s3 + $0x168] sm:$0xf]
      %v1924 = vld [vmem:[%s3 + $0x16c] sm:$0xf]
      %v1925 = vld [vmem:[%s3 + $0x170] sm:$0xf]
      %v1926 = vld [vmem:[%s3 + $0x174] sm:$0xf]
      %v1927 = vld [vmem:[%s3 + $0x178] sm:$0xf]
      %v1928 = vld [vmem:[%s3 + $0x17c] sm:$0xf]
      %v1929 = vld [vmem:[%s3 + $0x180] sm:$0xf]
      %v1930 = vld [vmem:[%s3 + $0x184] sm:$0xf]
      %v1931 = vld [vmem:[%s3 + $0x188] sm:$0xf]
      %v1932 = vld [vmem:[%s3 + $0x18c] sm:$0xf]
      %v1933 = vld [vmem:[%s3 + $0x190] sm:$0xf]
      %v1934 = vld [vmem:[%s3 + $0x194] sm:$0xf]
      %v1935 = vld [vmem:[%s3 + $0x198] sm:$0xf]
      %v1936 = vld [vmem:[%s3 + $0x19c] sm:$0xf]
      %v1937 = vld [vmem:[%s3 + $0x1a0] sm:$0xf]
      %v1938 = vld [vmem:[%s3 + $0x1a4] sm:$0xf]
      %v1939 = vld [vmem:[%s3 + $0x1a8] sm:$0xf]
      %v1940 = vld [vmem:[%s3 + $0x1ac] sm:$0xf]
      %v1941 = vld [vmem:[%s3 + $0x1b0] sm:$0xf]
      %v1942 = vld [vmem:[%s3 + $0x1b4] sm:$0xf]
      %v1943 = vld [vmem:[%s3 + $0x1b8] sm:$0xf]
      %v1944 = vld [vmem:[%s3 + $0x1bc] sm:$0xf]
      %v1945 = vld [vmem:[%s3 + $0x1c0] sm:$0xf]
      %v1946 = vld [vmem:[%s3 + $0x1c4] sm:$0xf]
      %v1947 = vld [vmem:[%s3 + $0x1c8] sm:$0xf]
      %v1948 = vld [vmem:[%s3 + $0x1cc] sm:$0xf]
      %v1949 = vld [vmem:[%s3 + $0x1d0] sm:$0xf]
      %v1950 = vld [vmem:[%s3 + $0x1d4] sm:$0xf]
      %v1951 = vld [vmem:[%s3 + $0x1d8] sm:$0xf]
      %v1952 = vld [vmem:[%s3 + $0x1dc] sm:$0xf]
      %v1953 = vld [vmem:[%s3 + $0x1e0] sm:$0xf]
      %v1954 = vld [vmem:[%s3 + $0x1e4] sm:$0xf]
      %v1955 = vld [vmem:[%s3 + $0x1e8] sm:$0xf]
      %v1956 = vld [vmem:[%s3 + $0x1ec] sm:$0xf]
      %v1957 = vld [vmem:[%s3 + $0x1f0] sm:$0xf]
      %v1958 = vld [vmem:[%s3 + $0x1f4] sm:$0xf]
      %v1959 = vld [vmem:[%s3 + $0x1f8] sm:$0xf]
      %v1960 = vld [vmem:[%s3 + $0x1fc] sm:$0xf]
      %v1961 = vld [vmem:[%s3 + $0x200] sm:$0xf]
      %v1962 = vld [vmem:[%s3 + $0x204] sm:$0xf]
      %v1963 = vld [vmem:[%s3 + $0x208] sm:$0xf]
      %v1964 = vld [vmem:[%s3 + $0x20c] sm:$0xf]
      %v1965 = vld [vmem:[%s3 + $0x210] sm:$0xf]
      %v1966 = vld [vmem:[%s3 + $0x214] sm:$0xf]
      %v1967 = vld [vmem:[%s3 + $0x218] sm:$0xf]
      %v1968 = vld [vmem:[%s3 + $0x21c] sm:$0xf]
      %v1969 = vld [vmem:[%s3 + $0x220] sm:$0xf]
      %v1970 = vld [vmem:[%s3 + $0x224] sm:$0xf]
      %v1971 = vld [vmem:[%s3 + $0x228] sm:$0xf]
      %v1972 = vld [vmem:[%s3 + $0x22c] sm:$0xf]
      %v1973 = vld [vmem:[%s3 + $0x230] sm:$0xf]
      %v1974 = vld [vmem:[%s3 + $0x234] sm:$0xf]
      %v1975 = vld [vmem:[%s3 + $0x238] sm:$0xf]
      %v1976 = vld [vmem:[%s3 + $0x23c] sm:$0xf]
      %v2121 = vunpack.c.l.b16 %v1833
      %v2122 = vunpack.c.l.b16 %v1834
      %v2123 = vunpack.c.l.b16 %v1835
      %v2124 = vunpack.c.l.b16 %v1836
      %v2125 = vunpack.c.l.b16 %v1837
      %v2126 = vunpack.c.l.b16 %v1838
      %v2127 = vunpack.c.l.b16 %v1839
      %v2128 = vunpack.c.l.b16 %v1840
      %v2129 = vunpack.c.l.b16 %v1841
      %v2130 = vunpack.c.l.b16 %v1842
      %v2131 = vunpack.c.l.b16 %v1843
      %v2132 = vunpack.c.l.b16 %v1844
      %v2133 = vunpack.c.l.b16 %v1845
      %v2134 = vunpack.c.l.b16 %v1846
      %v2135 = vunpack.c.l.b16 %v1847
      %v2136 = vunpack.c.l.b16 %v1848
      %v2137 = vunpack.c.l.b16 %v1849
      %v2138 = vunpack.c.l.b16 %v1850
      %v2139 = vunpack.c.l.b16 %v1851
      %v2140 = vunpack.c.l.b16 %v1852
      %v2141 = vunpack.c.l.b16 %v1853
      %v2142 = vunpack.c.l.b16 %v1854
      %v2143 = vunpack.c.l.b16 %v1855
      %v2144 = vunpack.c.l.b16 %v1856
      %v2145 = vunpack.c.l.b16 %v1857
      %v2146 = vunpack.c.l.b16 %v1858
      %v2147 = vunpack.c.l.b16 %v1859
      %v2148 = vunpack.c.l.b16 %v1860
      %v2149 = vunpack.c.l.b16 %v1861
      %v2150 = vunpack.c.l.b16 %v1862
      %v2151 = vunpack.c.l.b16 %v1863
      %v2152 = vunpack.c.l.b16 %v1864
      %v2153 = vunpack.c.l.b16 %v1865
      %v2154 = vunpack.c.l.b16 %v1866
      %v2155 = vunpack.c.l.b16 %v1867
      %v2156 = vunpack.c.l.b16 %v1868
      %v2157 = vunpack.c.l.b16 %v1869
      %v2158 = vunpack.c.l.b16 %v1870
      %v2159 = vunpack.c.l.b16 %v1871
      %v2160 = vunpack.c.l.b16 %v1872
      %v2161 = vunpack.c.l.b16 %v1873
      %v2162 = vunpack.c.l.b16 %v1874
      %v2163 = vunpack.c.l.b16 %v1875
      %v2164 = vunpack.c.l.b16 %v1876
      %v2165 = vunpack.c.l.b16 %v1877
      %v2166 = vunpack.c.l.b16 %v1878
      %v2167 = vunpack.c.l.b16 %v1879
      %v2168 = vunpack.c.l.b16 %v1880
      %v2169 = vunpack.c.l.b16 %v1881
      %v2170 = vunpack.c.l.b16 %v1882
      %v2171 = vunpack.c.l.b16 %v1883
      %v2172 = vunpack.c.l.b16 %v1884
      %v2173 = vunpack.c.l.b16 %v1885
      %v2174 = vunpack.c.l.b16 %v1886
      %v2175 = vunpack.c.l.b16 %v1887
      %v2176 = vunpack.c.l.b16 %v1888
      %v2177 = vunpack.c.l.b16 %v1889
      %v2178 = vunpack.c.l.b16 %v1890
      %v2179 = vunpack.c.l.b16 %v1891
      %v2180 = vunpack.c.l.b16 %v1892
      %v2181 = vunpack.c.l.b16 %v1893
      %v2182 = vunpack.c.l.b16 %v1894
      %v2183 = vunpack.c.l.b16 %v1895
      %v2184 = vunpack.c.l.b16 %v1896
      %v2185 = vunpack.c.l.b16 %v1897
      %v2186 = vunpack.c.l.b16 %v1898
      %v2187 = vunpack.c.l.b16 %v1899
      %v2188 = vunpack.c.l.b16 %v1900
      %v2189 = vunpack.c.l.b16 %v1901
      %v2190 = vunpack.c.l.b16 %v1902
      %v2191 = vunpack.c.l.b16 %v1903
      %v2192 = vunpack.c.l.b16 %v1904
      %v2193 = vunpack.c.l.b16 %v1905
      %v2194 = vunpack.c.l.b16 %v1906
      %v2195 = vunpack.c.l.b16 %v1907
      %v2196 = vunpack.c.l.b16 %v1908
      %v2197 = vunpack.c.l.b16 %v1909
      %v2198 = vunpack.c.l.b16 %v1910
      %v2199 = vunpack.c.l.b16 %v1911
      %v2200 = vunpack.c.l.b16 %v1912
      %v2201 = vunpack.c.l.b16 %v1913
      %v2202 = vunpack.c.l.b16 %v1914
      %v2203 = vunpack.c.l.b16 %v1915
      %v2204 = vunpack.c.l.b16 %v1916
      %v2205 = vunpack.c.l.b16 %v1917
      %v2206 = vunpack.c.l.b16 %v1918
      %v2207 = vunpack.c.l.b16 %v1919
      %v2208 = vunpack.c.l.b16 %v1920
      %v2209 = vunpack.c.l.b16 %v1921
      %v2210 = vunpack.c.l.b16 %v1922
      %v2211 = vunpack.c.l.b16 %v1923
      %v2212 = vunpack.c.l.b16 %v1924
      %v2213 = vunpack.c.l.b16 %v1925
      %v2214 = vunpack.c.l.b16 %v1926
      %v2215 = vunpack.c.l.b16 %v1927
      %v2216 = vunpack.c.l.b16 %v1928
      %v2217 = vunpack.c.l.b16 %v1929
      %v2218 = vunpack.c.l.b16 %v1930
      %v2219 = vunpack.c.l.b16 %v1931
      %v2220 = vunpack.c.l.b16 %v1932
      %v2221 = vunpack.c.l.b16 %v1933
      %v2222 = vunpack.c.l.b16 %v1934
      %v2223 = vunpack.c.l.b16 %v1935
      %v2224 = vunpack.c.l.b16 %v1936
      %v2225 = vunpack.c.l.b16 %v1937
      %v2226 = vunpack.c.l.b16 %v1938
      %v2227 = vunpack.c.l.b16 %v1939
      %v2228 = vunpack.c.l.b16 %v1940
      %v2229 = vunpack.c.l.b16 %v1941
      %v2230 = vunpack.c.l.b16 %v1942
      %v2231 = vunpack.c.l.b16 %v1943
      %v2232 = vunpack.c.l.b16 %v1944
      %v2233 = vunpack.c.l.b16 %v1945
      %v2234 = vunpack.c.l.b16 %v1946
      %v2235 = vunpack.c.l.b16 %v1947
      %v2236 = vunpack.c.l.b16 %v1948
      %v2237 = vunpack.c.l.b16 %v1949
      %v2238 = vunpack.c.l.b16 %v1950
      %v2239 = vunpack.c.l.b16 %v1951
      %v2240 = vunpack.c.l.b16 %v1952
      %v2241 = vunpack.c.l.b16 %v1953
      %v2242 = vunpack.c.l.b16 %v1954
      %v2243 = vunpack.c.l.b16 %v1955
      %v2244 = vunpack.c.l.b16 %v1956
      %v2245 = vunpack.c.l.b16 %v1957
      %v2246 = vunpack.c.l.b16 %v1958
      %v2247 = vunpack.c.l.b16 %v1959
      %v2248 = vunpack.c.l.b16 %v1960
      %v2249 = vunpack.c.l.b16 %v1961
      %v2250 = vunpack.c.l.b16 %v1962
      %v2251 = vunpack.c.l.b16 %v1963
      %v2252 = vunpack.c.l.b16 %v1964
      %v2253 = vunpack.c.l.b16 %v1965
      %v2254 = vunpack.c.l.b16 %v1966
      %v2255 = vunpack.c.l.b16 %v1967
      %v2256 = vunpack.c.l.b16 %v1968
      %v2257 = vunpack.c.l.b16 %v1969
      %v2258 = vunpack.c.l.b16 %v1970
      %v2259 = vunpack.c.l.b16 %v1971
      %v2260 = vunpack.c.l.b16 %v1972
      %v2261 = vunpack.c.l.b16 %v1973
      %v2262 = vunpack.c.l.b16 %v1974
      %v2263 = vunpack.c.l.b16 %v1975
      %v2264 = vunpack.c.l.b16 %v1976
      %v2265 = vpack.c.b16 %v2122, %v2121
      %v2266 = vpack.c.b16 %v2124, %v2123
      %v2267 = vpack.c.b16 %v2126, %v2125
      %v2268 = vpack.c.b16 %v2128, %v2127
      %v2269 = vpack.c.b16 %v2130, %v2129
      %v2270 = vpack.c.b16 %v2132, %v2131
      %v2271 = vpack.c.b16 %v2134, %v2133
      %v2272 = vpack.c.b16 %v2136, %v2135
      %v2273 = vpack.c.b16 %v2138, %v2137
      %v2274 = vpack.c.b16 %v2140, %v2139
      %v2275 = vpack.c.b16 %v2142, %v2141
      %v2276 = vpack.c.b16 %v2144, %v2143
      %v2277 = vpack.c.b16 %v2146, %v2145
      %v2278 = vpack.c.b16 %v2148, %v2147
      %v2279 = vpack.c.b16 %v2150, %v2149
      %v2280 = vpack.c.b16 %v2152, %v2151
      %v2281 = vpack.c.b16 %v2154, %v2153
      %v2282 = vpack.c.b16 %v2156, %v2155
      %v2283 = vpack.c.b16 %v2158, %v2157
      %v2284 = vpack.c.b16 %v2160, %v2159
      %v2285 = vpack.c.b16 %v2162, %v2161
      %v2286 = vpack.c.b16 %v2164, %v2163
      %v2287 = vpack.c.b16 %v2166, %v2165
      %v2288 = vpack.c.b16 %v2168, %v2167
      %v2289 = vpack.c.b16 %v2170, %v2169
      %v2290 = vpack.c.b16 %v2172, %v2171
      %v2291 = vpack.c.b16 %v2174, %v2173
      %v2292 = vpack.c.b16 %v2176, %v2175
      %v2293 = vpack.c.b16 %v2178, %v2177
      %v2294 = vpack.c.b16 %v2180, %v2179
      %v2295 = vpack.c.b16 %v2182, %v2181
      %v2296 = vpack.c.b16 %v2184, %v2183
      %v2297 = vpack.c.b16 %v2186, %v2185
      %v2298 = vpack.c.b16 %v2188, %v2187
      %v2299 = vpack.c.b16 %v2190, %v2189
      %v2300 = vpack.c.b16 %v2192, %v2191
      %v2301 = vpack.c.b16 %v2194, %v2193
      %v2302 = vpack.c.b16 %v2196, %v2195
      %v2303 = vpack.c.b16 %v2198, %v2197
      %v2304 = vpack.c.b16 %v2200, %v2199
      %v2305 = vpack.c.b16 %v2202, %v2201
      %v2306 = vpack.c.b16 %v2204, %v2203
      %v2307 = vpack.c.b16 %v2206, %v2205
      %v2308 = vpack.c.b16 %v2208, %v2207
      %v2309 = vpack.c.b16 %v2210, %v2209
      %v2310 = vpack.c.b16 %v2212, %v2211
      %v2311 = vpack.c.b16 %v2214, %v2213
      %v2312 = vpack.c.b16 %v2216, %v2215
      %v2313 = vpack.c.b16 %v2218, %v2217
      %v2314 = vpack.c.b16 %v2220, %v2219
      %v2315 = vpack.c.b16 %v2222, %v2221
      %v2316 = vpack.c.b16 %v2224, %v2223
      %v2317 = vpack.c.b16 %v2226, %v2225
      %v2318 = vpack.c.b16 %v2228, %v2227
      %v2319 = vpack.c.b16 %v2230, %v2229
      %v2320 = vpack.c.b16 %v2232, %v2231
      %v2321 = vpack.c.b16 %v2234, %v2233
      %v2322 = vpack.c.b16 %v2236, %v2235
      %v2323 = vpack.c.b16 %v2238, %v2237
      %v2324 = vpack.c.b16 %v2240, %v2239
      %v2325 = vpack.c.b16 %v2242, %v2241
      %v2326 = vpack.c.b16 %v2244, %v2243
      %v2327 = vpack.c.b16 %v2246, %v2245
      %v2328 = vpack.c.b16 %v2248, %v2247
      %v2329 = vpack.c.b16 %v2250, %v2249
      %v2330 = vpack.c.b16 %v2252, %v2251
      %v2331 = vpack.c.b16 %v2254, %v2253
      %v2332 = vpack.c.b16 %v2256, %v2255
      %v2333 = vpack.c.b16 %v2258, %v2257
      %v2334 = vpack.c.b16 %v2260, %v2259
      %v2335 = vpack.c.b16 %v2262, %v2261
      %v2336 = vpack.c.b16 %v2264, %v2263
      %2409 = vmatpush.bf16.msra.mxu0 %v2272
      %2410 = vmatpush.bf16.msra.mxu0 %v2271
      %2411 = vmatpush.bf16.msra.mxu0 %v2270
      %2412 = vmatpush.bf16.msra.mxu0 %v2269
      %2413 = vmatpush.bf16.msra.mxu0 %v2268
      %2414 = vmatpush.bf16.msra.mxu0 %v2267
      %2415 = vmatpush.bf16.msra.mxu0 %v2266
      %2416 = vmatpush.bf16.msra.mxu0 %v2265
      %2417 = vmatmul.bf16.gmra.mxu0 %v1091
      %v2418 = vpop.f32.mrf.mxu0
      %v2419 = vadd.f32 0.0, %v2418
      %v2420 = vpop.f32.mrf.mxu0
      %v2421 = vadd.f32 0.0, %v2420
      %2422 = vmatmul.bf16.gmra.mxu0 %v1132
      %v2423 = vpop.f32.mrf.mxu0
      %v2424 = vadd.f32 0.0, %v2423
      %v2425 = vpop.f32.mrf.mxu0
      %v2426 = vadd.f32 0.0, %v2425
      %2427 = vmatmul.bf16.gmra.mxu0 %v1173
      %v2428 = vpop.f32.mrf.mxu0
      %v2429 = vadd.f32 0.0, %v2428
      %v2430 = vpop.f32.mrf.mxu0
      %v2431 = vadd.f32 0.0, %v2430
      %2432 = vmatmul.bf16.gmra.mxu0 %v1214
      %v2433 = vpop.f32.mrf.mxu0
      %v2434 = vadd.f32 0.0, %v2433
      %v2435 = vpop.f32.mrf.mxu0
      %v2436 = vadd.f32 0.0, %v2435
      %2437 = vmatmul.bf16.gmra.mxu0 %v1255
      %v2438 = vpop.f32.mrf.mxu0
      %v2439 = vadd.f32 0.0, %v2438
      %v2440 = vpop.f32.mrf.mxu0
      %v2441 = vadd.f32 0.0, %v2440
      %2442 = vmatmul.bf16.gmra.mxu0 %v1296
      %v2443 = vpop.f32.mrf.mxu0
      %v2444 = vadd.f32 0.0, %v2443
      %v2445 = vpop.f32.mrf.mxu0
      %v2446 = vadd.f32 0.0, %v2445
      %2447 = vmatmul.bf16.gmra.mxu0 %v1337
      %v2448 = vpop.f32.mrf.mxu0
      %v2449 = vadd.f32 0.0, %v2448
      %v2450 = vpop.f32.mrf.mxu0
      %v2451 = vadd.f32 0.0, %v2450
      %2452 = vmatmul.bf16.gmra.mxu0 %v1378
      %v2453 = vpop.f32.mrf.mxu0
      %v2454 = vadd.f32 0.0, %v2453
      %v2455 = vpop.f32.mrf.mxu0
      %v2456 = vadd.f32 0.0, %v2455
      %2457 = vmatmul.bf16.gmra.mxu0 %v1419
      %v2458 = vpop.f32.mrf.mxu0
      %v2459 = vadd.f32 0.0, %v2458
      %v2460 = vpop.f32.mrf.mxu0
      %v2461 = vadd.f32 0.0, %v2460
      %2462 = vmatmul.bf16.gmra.mxu0 %v1460
      %v2463 = vpop.f32.mrf.mxu0
      %v2464 = vadd.f32 0.0, %v2463
      %v2465 = vpop.f32.mrf.mxu0
      %v2466 = vadd.f32 0.0, %v2465
      %2467 = vmatmul.bf16.gmra.mxu0 %v1501
      %v2468 = vpop.f32.mrf.mxu0
      %v2469 = vadd.f32 0.0, %v2468
      %v2470 = vpop.f32.mrf.mxu0
      %v2471 = vadd.f32 0.0, %v2470
      %2472 = vmatmul.bf16.gmra.mxu0 %v1542
      %v2473 = vpop.f32.mrf.mxu0
      %v2474 = vadd.f32 0.0, %v2473
      %v2475 = vpop.f32.mrf.mxu0
      %v2476 = vadd.f32 0.0, %v2475
      %2477 = vmatmul.bf16.gmra.mxu0 %v1583
      %v2478 = vpop.f32.mrf.mxu0
      %v2479 = vadd.f32 0.0, %v2478
      %v2480 = vpop.f32.mrf.mxu0
      %v2481 = vadd.f32 0.0, %v2480
      %2482 = vmatmul.bf16.gmra.mxu0 %v1624
      %v2483 = vpop.f32.mrf.mxu0
      %v2484 = vadd.f32 0.0, %v2483
      %v2485 = vpop.f32.mrf.mxu0
      %v2486 = vadd.f32 0.0, %v2485
      %2487 = vmatmul.bf16.gmra.mxu0 %v1665
      %v2488 = vpop.f32.mrf.mxu0
      %v2489 = vadd.f32 0.0, %v2488
      %v2490 = vpop.f32.mrf.mxu0
      %v2491 = vadd.f32 0.0, %v2490
      %2492 = vmatmul.bf16.gmra.mxu0 %v1706
      %v2493 = vpop.f32.mrf.mxu0
      %v2494 = vadd.f32 0.0, %v2493
      %v2495 = vpop.f32.mrf.mxu0
      %v2496 = vadd.f32 0.0, %v2495
      %2497 = vdwg.mxu0
      %2498 = vmatpush.bf16.msra.mxu0 %v2280
      %2499 = vmatpush.bf16.msra.mxu0 %v2279
      %2500 = vmatpush.bf16.msra.mxu0 %v2278
      %2501 = vmatpush.bf16.msra.mxu0 %v2277
      %2502 = vmatpush.bf16.msra.mxu0 %v2276
      %2503 = vmatpush.bf16.msra.mxu0 %v2275
      %2504 = vmatpush.bf16.msra.mxu0 %v2274
      %2505 = vmatpush.bf16.msra.mxu0 %v2273
      %2506 = vmatmul.bf16.gmra.mxu0 %v1108
      %v2507 = vpop.f32.mrf.mxu0
      %v2508 = vadd.f32 %v2419, %v2507
      %v2509 = vpop.f32.mrf.mxu0
      %v2510 = vadd.f32 %v2421, %v2509
      %2511 = vmatmul.bf16.gmra.mxu0 %v1149
      %v2512 = vpop.f32.mrf.mxu0
      %v2513 = vadd.f32 %v2424, %v2512
      %v2514 = vpop.f32.mrf.mxu0
      %v2515 = vadd.f32 %v2426, %v2514
      %2516 = vmatmul.bf16.gmra.mxu0 %v1190
      %v2517 = vpop.f32.mrf.mxu0
      %v2518 = vadd.f32 %v2429, %v2517
      %v2519 = vpop.f32.mrf.mxu0
      %v2520 = vadd.f32 %v2431, %v2519
      %2521 = vmatmul.bf16.gmra.mxu0 %v1231
      %v2522 = vpop.f32.mrf.mxu0
      %v2523 = vadd.f32 %v2434, %v2522
      %v2524 = vpop.f32.mrf.mxu0
      %v2525 = vadd.f32 %v2436, %v2524
      %2526 = vmatmul.bf16.gmra.mxu0 %v1272
      %v2527 = vpop.f32.mrf.mxu0
      %v2528 = vadd.f32 %v2439, %v2527
      %v2529 = vpop.f32.mrf.mxu0
      %v2530 = vadd.f32 %v2441, %v2529
      %2531 = vmatmul.bf16.gmra.mxu0 %v1313
      %v2532 = vpop.f32.mrf.mxu0
      %v2533 = vadd.f32 %v2444, %v2532
      %v2534 = vpop.f32.mrf.mxu0
      %v2535 = vadd.f32 %v2446, %v2534
      %2536 = vmatmul.bf16.gmra.mxu0 %v1354
      %v2537 = vpop.f32.mrf.mxu0
      %v2538 = vadd.f32 %v2449, %v2537
      %v2539 = vpop.f32.mrf.mxu0
      %v2540 = vadd.f32 %v2451, %v2539
      %2541 = vmatmul.bf16.gmra.mxu0 %v1395
      %v2542 = vpop.f32.mrf.mxu0
      %v2543 = vadd.f32 %v2454, %v2542
      %v2544 = vpop.f32.mrf.mxu0
      %v2545 = vadd.f32 %v2456, %v2544
      %2546 = vmatmul.bf16.gmra.mxu0 %v1436
      %v2547 = vpop.f32.mrf.mxu0
      %v2548 = vadd.f32 %v2459, %v2547
      %v2549 = vpop.f32.mrf.mxu0
      %v2550 = vadd.f32 %v2461, %v2549
      %2551 = vmatmul.bf16.gmra.mxu0 %v1477
      %v2552 = vpop.f32.mrf.mxu0
      %v2553 = vadd.f32 %v2464, %v2552
      %v2554 = vpop.f32.mrf.mxu0
      %v2555 = vadd.f32 %v2466, %v2554
      %2556 = vmatmul.bf16.gmra.mxu0 %v1518
      %v2557 = vpop.f32.mrf.mxu0
      %v2558 = vadd.f32 %v2469, %v2557
      %v2559 = vpop.f32.mrf.mxu0
      %v2560 = vadd.f32 %v2471, %v2559
      %2561 = vmatmul.bf16.gmra.mxu0 %v1559
      %v2562 = vpop.f32.mrf.mxu0
      %v2563 = vadd.f32 %v2474, %v2562
      %v2564 = vpop.f32.mrf.mxu0
      %v2565 = vadd.f32 %v2476, %v2564
      %2566 = vmatmul.bf16.gmra.mxu0 %v1600
      %v2567 = vpop.f32.mrf.mxu0
      %v2568 = vadd.f32 %v2479, %v2567
      %v2569 = vpop.f32.mrf.mxu0
      %v2570 = vadd.f32 %v2481, %v2569
      %2571 = vmatmul.bf16.gmra.mxu0 %v1641
      %v2572 = vpop.f32.mrf.mxu0
      %v2573 = vadd.f32 %v2484, %v2572
      %v2574 = vpop.f32.mrf.mxu0
      %v2575 = vadd.f32 %v2486, %v2574
      %2576 = vmatmul.bf16.gmra.mxu0 %v1682
      %v2577 = vpop.f32.mrf.mxu0
      %v2578 = vadd.f32 %v2489, %v2577
      %v2579 = vpop.f32.mrf.mxu0
      %v2580 = vadd.f32 %v2491, %v2579
      %2581 = vmatmul.bf16.gmra.mxu0 %v1723
      %v2582 = vpop.f32.mrf.mxu0
      %v2583 = vadd.f32 %v2494, %v2582
      %v2584 = vpop.f32.mrf.mxu0
      %v2585 = vadd.f32 %v2496, %v2584
      %2586 = vdwg.mxu0
      %2587 = vmatpush.bf16.msra.mxu0 %v2288
      %2588 = vmatpush.bf16.msra.mxu0 %v2287
      %2589 = vmatpush.bf16.msra.mxu0 %v2286
      %2590 = vmatpush.bf16.msra.mxu0 %v2285
      %2591 = vmatpush.bf16.msra.mxu0 %v2284
      %2592 = vmatpush.bf16.msra.mxu0 %v2283
      %2593 = vmatpush.bf16.msra.mxu0 %v2282
      %2594 = vmatpush.bf16.msra.mxu0 %v2281
      %2595 = vmatmul.bf16.gmra.mxu0 %v1125
      %v2596 = vpop.f32.mrf.mxu0
      %v2597 = vadd.f32 %v2508, %v2596
      %v2598 = vpop.f32.mrf.mxu0
      %v2599 = vadd.f32 %v2510, %v2598
      %2600 = vmatmul.bf16.gmra.mxu0 %v1166
      %v2601 = vpop.f32.mrf.mxu0
      %v2602 = vadd.f32 %v2513, %v2601
      %v2603 = vpop.f32.mrf.mxu0
      %v2604 = vadd.f32 %v2515, %v2603
      %2605 = vmatmul.bf16.gmra.mxu0 %v1207
      %v2606 = vpop.f32.mrf.mxu0
      %v2607 = vadd.f32 %v2518, %v2606
      %v2608 = vpop.f32.mrf.mxu0
      %v2609 = vadd.f32 %v2520, %v2608
      %2610 = vmatmul.bf16.gmra.mxu0 %v1248
      %v2611 = vpop.f32.mrf.mxu0
      %v2612 = vadd.f32 %v2523, %v2611
      %v2613 = vpop.f32.mrf.mxu0
      %v2614 = vadd.f32 %v2525, %v2613
      %2615 = vmatmul.bf16.gmra.mxu0 %v1289
      %v2616 = vpop.f32.mrf.mxu0
      %v2617 = vadd.f32 %v2528, %v2616
      %v2618 = vpop.f32.mrf.mxu0
      %v2619 = vadd.f32 %v2530, %v2618
      %2620 = vmatmul.bf16.gmra.mxu0 %v1330
      %v2621 = vpop.f32.mrf.mxu0
      %v2622 = vadd.f32 %v2533, %v2621
      %v2623 = vpop.f32.mrf.mxu0
      %v2624 = vadd.f32 %v2535, %v2623
      %2625 = vmatmul.bf16.gmra.mxu0 %v1371
      %v2626 = vpop.f32.mrf.mxu0
      %v2627 = vadd.f32 %v2538, %v2626
      %v2628 = vpop.f32.mrf.mxu0
      %v2629 = vadd.f32 %v2540, %v2628
      %2630 = vmatmul.bf16.gmra.mxu0 %v1412
      %v2631 = vpop.f32.mrf.mxu0
      %v2632 = vadd.f32 %v2543, %v2631
      %v2633 = vpop.f32.mrf.mxu0
      %v2634 = vadd.f32 %v2545, %v2633
      %2635 = vmatmul.bf16.gmra.mxu0 %v1453
      %v2636 = vpop.f32.mrf.mxu0
      %v2637 = vadd.f32 %v2548, %v2636
      %v2638 = vpop.f32.mrf.mxu0
      %v2639 = vadd.f32 %v2550, %v2638
      %2640 = vmatmul.bf16.gmra.mxu0 %v1494
      %v2641 = vpop.f32.mrf.mxu0
      %v2642 = vadd.f32 %v2553, %v2641
      %v2643 = vpop.f32.mrf.mxu0
      %v2644 = vadd.f32 %v2555, %v2643
      %2645 = vmatmul.bf16.gmra.mxu0 %v1535
      %v2646 = vpop.f32.mrf.mxu0
      %v2647 = vadd.f32 %v2558, %v2646
      %v2648 = vpop.f32.mrf.mxu0
      %v2649 = vadd.f32 %v2560, %v2648
      %2650 = vmatmul.bf16.gmra.mxu0 %v1576
      %v2651 = vpop.f32.mrf.mxu0
      %v2652 = vadd.f32 %v2563, %v2651
      %v2653 = vpop.f32.mrf.mxu0
      %v2654 = vadd.f32 %v2565, %v2653
      %2655 = vmatmul.bf16.gmra.mxu0 %v1617
      %v2656 = vpop.f32.mrf.mxu0
      %v2657 = vadd.f32 %v2568, %v2656
      %v2658 = vpop.f32.mrf.mxu0
      %v2659 = vadd.f32 %v2570, %v2658
      %2660 = vmatmul.bf16.gmra.mxu0 %v1658
      %v2661 = vpop.f32.mrf.mxu0
      %v2662 = vadd.f32 %v2573, %v2661
      %v2663 = vpop.f32.mrf.mxu0
      %v2664 = vadd.f32 %v2575, %v2663
      %2665 = vmatmul.bf16.gmra.mxu0 %v1699
      %v2666 = vpop.f32.mrf.mxu0
      %v2667 = vadd.f32 %v2578, %v2666
      %v2668 = vpop.f32.mrf.mxu0
      %v2669 = vadd.f32 %v2580, %v2668
      %2670 = vmatmul.bf16.gmra.mxu0 %v1740
      %v2671 = vpop.f32.mrf.mxu0
      %v2672 = vadd.f32 %v2583, %v2671
      %v2673 = vpop.f32.mrf.mxu0
      %v2674 = vadd.f32 %v2585, %v2673
      %2675 = vdwg.mxu0
      %2676 = vmatpush.bf16.msra.mxu0 %v2296
      %2677 = vmatpush.bf16.msra.mxu0 %v2295
      %2678 = vmatpush.bf16.msra.mxu0 %v2294
      %2679 = vmatpush.bf16.msra.mxu0 %v2293
      %2680 = vmatpush.bf16.msra.mxu0 %v2292
      %2681 = vmatpush.bf16.msra.mxu0 %v2291
      %2682 = vmatpush.bf16.msra.mxu0 %v2290
      %2683 = vmatpush.bf16.msra.mxu0 %v2289
      %2684 = vmatmul.bf16.gmra.mxu0 %v1132
      %v2685 = vpop.f32.mrf.mxu0
      %v2686 = vadd.f32 %v2597, %v2685
      %v2687 = vpop.f32.mrf.mxu0
      %v2688 = vadd.f32 %v2599, %v2687
      %2689 = vmatmul.bf16.gmra.mxu0 %v1173
      %v2690 = vpop.f32.mrf.mxu0
      %v2691 = vadd.f32 %v2602, %v2690
      %v2692 = vpop.f32.mrf.mxu0
      %v2693 = vadd.f32 %v2604, %v2692
      %2694 = vmatmul.bf16.gmra.mxu0 %v1214
      %v2695 = vpop.f32.mrf.mxu0
      %v2696 = vadd.f32 %v2607, %v2695
      %v2697 = vpop.f32.mrf.mxu0
      %v2698 = vadd.f32 %v2609, %v2697
      %2699 = vmatmul.bf16.gmra.mxu0 %v1255
      %v2700 = vpop.f32.mrf.mxu0
      %v2701 = vadd.f32 %v2612, %v2700
      %v2702 = vpop.f32.mrf.mxu0
      %v2703 = vadd.f32 %v2614, %v2702
      %2704 = vmatmul.bf16.gmra.mxu0 %v1296
      %v2705 = vpop.f32.mrf.mxu0
      %v2706 = vadd.f32 %v2617, %v2705
      %v2707 = vpop.f32.mrf.mxu0
      %v2708 = vadd.f32 %v2619, %v2707
      %2709 = vmatmul.bf16.gmra.mxu0 %v1337
      %v2710 = vpop.f32.mrf.mxu0
      %v2711 = vadd.f32 %v2622, %v2710
      %v2712 = vpop.f32.mrf.mxu0
      %v2713 = vadd.f32 %v2624, %v2712
      %2714 = vmatmul.bf16.gmra.mxu0 %v1378
      %v2715 = vpop.f32.mrf.mxu0
      %v2716 = vadd.f32 %v2627, %v2715
      %v2717 = vpop.f32.mrf.mxu0
      %v2718 = vadd.f32 %v2629, %v2717
      %2719 = vmatmul.bf16.gmra.mxu0 %v1419
      %v2720 = vpop.f32.mrf.mxu0
      %v2721 = vadd.f32 %v2632, %v2720
      %v2722 = vpop.f32.mrf.mxu0
      %v2723 = vadd.f32 %v2634, %v2722
      %2724 = vmatmul.bf16.gmra.mxu0 %v1460
      %v2725 = vpop.f32.mrf.mxu0
      %v2726 = vadd.f32 %v2637, %v2725
      %v2727 = vpop.f32.mrf.mxu0
      %v2728 = vadd.f32 %v2639, %v2727
      %2729 = vmatmul.bf16.gmra.mxu0 %v1501
      %v2730 = vpop.f32.mrf.mxu0
      %v2731 = vadd.f32 %v2642, %v2730
      %v2732 = vpop.f32.mrf.mxu0
      %v2733 = vadd.f32 %v2644, %v2732
      %2734 = vmatmul.bf16.gmra.mxu0 %v1542
      %v2735 = vpop.f32.mrf.mxu0
      %v2736 = vadd.f32 %v2647, %v2735
      %v2737 = vpop.f32.mrf.mxu0
      %v2738 = vadd.f32 %v2649, %v2737
      %2739 = vmatmul.bf16.gmra.mxu0 %v1583
      %v2740 = vpop.f32.mrf.mxu0
      %v2741 = vadd.f32 %v2652, %v2740
      %v2742 = vpop.f32.mrf.mxu0
      %v2743 = vadd.f32 %v2654, %v2742
      %2744 = vmatmul.bf16.gmra.mxu0 %v1624
      %v2745 = vpop.f32.mrf.mxu0
      %v2746 = vadd.f32 %v2657, %v2745
      %v2747 = vpop.f32.mrf.mxu0
      %v2748 = vadd.f32 %v2659, %v2747
      %2749 = vmatmul.bf16.gmra.mxu0 %v1665
      %v2750 = vpop.f32.mrf.mxu0
      %v2751 = vadd.f32 %v2662, %v2750
      %v2752 = vpop.f32.mrf.mxu0
      %v2753 = vadd.f32 %v2664, %v2752
      %2754 = vmatmul.bf16.gmra.mxu0 %v1706
      %v2755 = vpop.f32.mrf.mxu0
      %v2756 = vadd.f32 %v2667, %v2755
      %v2757 = vpop.f32.mrf.mxu0
      %v2758 = vadd.f32 %v2669, %v2757
      %2759 = vmatmul.bf16.gmra.mxu0 %v1747
      %v2760 = vpop.f32.mrf.mxu0
      %v2761 = vadd.f32 %v2672, %v2760
      %v2762 = vpop.f32.mrf.mxu0
      %v2763 = vadd.f32 %v2674, %v2762
      %2764 = vdwg.mxu0
      %2765 = vmatpush.bf16.msra.mxu0 %v2304
      %2766 = vmatpush.bf16.msra.mxu0 %v2303
      %2767 = vmatpush.bf16.msra.mxu0 %v2302
      %2768 = vmatpush.bf16.msra.mxu0 %v2301
      %2769 = vmatpush.bf16.msra.mxu0 %v2300
      %2770 = vmatpush.bf16.msra.mxu0 %v2299
      %2771 = vmatpush.bf16.msra.mxu0 %v2298
      %2772 = vmatpush.bf16.msra.mxu0 %v2297
      %2773 = vmatmul.bf16.gmra.mxu0 %v1149
      %v2774 = vpop.f32.mrf.mxu0
      %v2775 = vadd.f32 %v2686, %v2774
      %v2776 = vpop.f32.mrf.mxu0
      %v2777 = vadd.f32 %v2688, %v2776
      %2778 = vmatmul.bf16.gmra.mxu0 %v1190
      %v2779 = vpop.f32.mrf.mxu0
      %v2780 = vadd.f32 %v2691, %v2779
      %v2781 = vpop.f32.mrf.mxu0
      %v2782 = vadd.f32 %v2693, %v2781
      %2783 = vmatmul.bf16.gmra.mxu0 %v1231
      %v2784 = vpop.f32.mrf.mxu0
      %v2785 = vadd.f32 %v2696, %v2784
      %v2786 = vpop.f32.mrf.mxu0
      %v2787 = vadd.f32 %v2698, %v2786
      %2788 = vmatmul.bf16.gmra.mxu0 %v1272
      %v2789 = vpop.f32.mrf.mxu0
      %v2790 = vadd.f32 %v2701, %v2789
      %v2791 = vpop.f32.mrf.mxu0
      %v2792 = vadd.f32 %v2703, %v2791
      %2793 = vmatmul.bf16.gmra.mxu0 %v1313
      %v2794 = vpop.f32.mrf.mxu0
      %v2795 = vadd.f32 %v2706, %v2794
      %v2796 = vpop.f32.mrf.mxu0
      %v2797 = vadd.f32 %v2708, %v2796
      %2798 = vmatmul.bf16.gmra.mxu0 %v1354
      %v2799 = vpop.f32.mrf.mxu0
      %v2800 = vadd.f32 %v2711, %v2799
      %v2801 = vpop.f32.mrf.mxu0
      %v2802 = vadd.f32 %v2713, %v2801
      %2803 = vmatmul.bf16.gmra.mxu0 %v1395
      %v2804 = vpop.f32.mrf.mxu0
      %v2805 = vadd.f32 %v2716, %v2804
      %v2806 = vpop.f32.mrf.mxu0
      %v2807 = vadd.f32 %v2718, %v2806
      %2808 = vmatmul.bf16.gmra.mxu0 %v1436
      %v2809 = vpop.f32.mrf.mxu0
      %v2810 = vadd.f32 %v2721, %v2809
      %v2811 = vpop.f32.mrf.mxu0
      %v2812 = vadd.f32 %v2723, %v2811
      %2813 = vmatmul.bf16.gmra.mxu0 %v1477
      %v2814 = vpop.f32.mrf.mxu0
      %v2815 = vadd.f32 %v2726, %v2814
      %v2816 = vpop.f32.mrf.mxu0
      %v2817 = vadd.f32 %v2728, %v2816
      %2818 = vmatmul.bf16.gmra.mxu0 %v1518
      %v2819 = vpop.f32.mrf.mxu0
      %v2820 = vadd.f32 %v2731, %v2819
      %v2821 = vpop.f32.mrf.mxu0
      %v2822 = vadd.f32 %v2733, %v2821
      %2823 = vmatmul.bf16.gmra.mxu0 %v1559
      %v2824 = vpop.f32.mrf.mxu0
      %v2825 = vadd.f32 %v2736, %v2824
      %v2826 = vpop.f32.mrf.mxu0
      %v2827 = vadd.f32 %v2738, %v2826
      %2828 = vmatmul.bf16.gmra.mxu0 %v1600
      %v2829 = vpop.f32.mrf.mxu0
      %v2830 = vadd.f32 %v2741, %v2829
      %v2831 = vpop.f32.mrf.mxu0
      %v2832 = vadd.f32 %v2743, %v2831
      %2833 = vmatmul.bf16.gmra.mxu0 %v1641
      %v2834 = vpop.f32.mrf.mxu0
      %v2835 = vadd.f32 %v2746, %v2834
      %v2836 = vpop.f32.mrf.mxu0
      %v2837 = vadd.f32 %v2748, %v2836
      %2838 = vmatmul.bf16.gmra.mxu0 %v1682
      %v2839 = vpop.f32.mrf.mxu0
      %v2840 = vadd.f32 %v2751, %v2839
      %v2841 = vpop.f32.mrf.mxu0
      %v2842 = vadd.f32 %v2753, %v2841
      %2843 = vmatmul.bf16.gmra.mxu0 %v1723
      %v2844 = vpop.f32.mrf.mxu0
      %v2845 = vadd.f32 %v2756, %v2844
      %v2846 = vpop.f32.mrf.mxu0
      %v2847 = vadd.f32 %v2758, %v2846
      %2848 = vmatmul.bf16.gmra.mxu0 %v1764
      %v2849 = vpop.f32.mrf.mxu0
      %v2850 = vadd.f32 %v2761, %v2849
      %v2851 = vpop.f32.mrf.mxu0
      %v2852 = vadd.f32 %v2763, %v2851
      %2853 = vdwg.mxu0
      %2854 = vmatpush.bf16.msra.mxu0 %v2312
      %2855 = vmatpush.bf16.msra.mxu0 %v2311
      %2856 = vmatpush.bf16.msra.mxu0 %v2310
      %2857 = vmatpush.bf16.msra.mxu0 %v2309
      %2858 = vmatpush.bf16.msra.mxu0 %v2308
      %2859 = vmatpush.bf16.msra.mxu0 %v2307
      %2860 = vmatpush.bf16.msra.mxu0 %v2306
      %2861 = vmatpush.bf16.msra.mxu0 %v2305
      %2862 = vmatmul.bf16.gmra.mxu0 %v1166
      %v2863 = vpop.f32.mrf.mxu0
      %v2864 = vadd.f32 %v2775, %v2863
      %v2865 = vpop.f32.mrf.mxu0
      %v2866 = vadd.f32 %v2777, %v2865
      %2867 = vmatmul.bf16.gmra.mxu0 %v1207
      %v2868 = vpop.f32.mrf.mxu0
      %v2869 = vadd.f32 %v2780, %v2868
      %v2870 = vpop.f32.mrf.mxu0
      %v2871 = vadd.f32 %v2782, %v2870
      %2872 = vmatmul.bf16.gmra.mxu0 %v1248
      %v2873 = vpop.f32.mrf.mxu0
      %v2874 = vadd.f32 %v2785, %v2873
      %v2875 = vpop.f32.mrf.mxu0
      %v2876 = vadd.f32 %v2787, %v2875
      %2877 = vmatmul.bf16.gmra.mxu0 %v1289
      %v2878 = vpop.f32.mrf.mxu0
      %v2879 = vadd.f32 %v2790, %v2878
      %v2880 = vpop.f32.mrf.mxu0
      %v2881 = vadd.f32 %v2792, %v2880
      %2882 = vmatmul.bf16.gmra.mxu0 %v1330
      %v2883 = vpop.f32.mrf.mxu0
      %v2884 = vadd.f32 %v2795, %v2883
      %v2885 = vpop.f32.mrf.mxu0
      %v2886 = vadd.f32 %v2797, %v2885
      %2887 = vmatmul.bf16.gmra.mxu0 %v1371
      %v2888 = vpop.f32.mrf.mxu0
      %v2889 = vadd.f32 %v2800, %v2888
      %v2890 = vpop.f32.mrf.mxu0
      %v2891 = vadd.f32 %v2802, %v2890
      %2892 = vmatmul.bf16.gmra.mxu0 %v1412
      %v2893 = vpop.f32.mrf.mxu0
      %v2894 = vadd.f32 %v2805, %v2893
      %v2895 = vpop.f32.mrf.mxu0
      %v2896 = vadd.f32 %v2807, %v2895
      %2897 = vmatmul.bf16.gmra.mxu0 %v1453
      %v2898 = vpop.f32.mrf.mxu0
      %v2899 = vadd.f32 %v2810, %v2898
      %v2900 = vpop.f32.mrf.mxu0
      %v2901 = vadd.f32 %v2812, %v2900
      %2902 = vmatmul.bf16.gmra.mxu0 %v1494
      %v2903 = vpop.f32.mrf.mxu0
      %v2904 = vadd.f32 %v2815, %v2903
      %v2905 = vpop.f32.mrf.mxu0
      %v2906 = vadd.f32 %v2817, %v2905
      %2907 = vmatmul.bf16.gmra.mxu0 %v1535
      %v2908 = vpop.f32.mrf.mxu0
      %v2909 = vadd.f32 %v2820, %v2908
      %v2910 = vpop.f32.mrf.mxu0
      %v2911 = vadd.f32 %v2822, %v2910
      %2912 = vmatmul.bf16.gmra.mxu0 %v1576
      %v2913 = vpop.f32.mrf.mxu0
      %v2914 = vadd.f32 %v2825, %v2913
      %v2915 = vpop.f32.mrf.mxu0
      %v2916 = vadd.f32 %v2827, %v2915
      %2917 = vmatmul.bf16.gmra.mxu0 %v1617
      %v2918 = vpop.f32.mrf.mxu0
      %v2919 = vadd.f32 %v2830, %v2918
      %v2920 = vpop.f32.mrf.mxu0
      %v2921 = vadd.f32 %v2832, %v2920
      %2922 = vmatmul.bf16.gmra.mxu0 %v1658
      %v2923 = vpop.f32.mrf.mxu0
      %v2924 = vadd.f32 %v2835, %v2923
      %v2925 = vpop.f32.mrf.mxu0
      %v2926 = vadd.f32 %v2837, %v2925
      %2927 = vmatmul.bf16.gmra.mxu0 %v1699
      %v2928 = vpop.f32.mrf.mxu0
      %v2929 = vadd.f32 %v2840, %v2928
      %v2930 = vpop.f32.mrf.mxu0
      %v2931 = vadd.f32 %v2842, %v2930
      %2932 = vmatmul.bf16.gmra.mxu0 %v1740
      %v2933 = vpop.f32.mrf.mxu0
      %v2934 = vadd.f32 %v2845, %v2933
      %v2935 = vpop.f32.mrf.mxu0
      %v2936 = vadd.f32 %v2847, %v2935
      %2937 = vmatmul.bf16.gmra.mxu0 %v1781
      %v2938 = vpop.f32.mrf.mxu0
      %v2939 = vadd.f32 %v2850, %v2938
      %v2940 = vpop.f32.mrf.mxu0
      %v2941 = vadd.f32 %v2852, %v2940
      %2942 = vdwg.mxu0
      %2943 = vmatpush.bf16.msra.mxu0 %v2320
      %2944 = vmatpush.bf16.msra.mxu0 %v2319
      %2945 = vmatpush.bf16.msra.mxu0 %v2318
      %2946 = vmatpush.bf16.msra.mxu0 %v2317
      %2947 = vmatpush.bf16.msra.mxu0 %v2316
      %2948 = vmatpush.bf16.msra.mxu0 %v2315
      %2949 = vmatpush.bf16.msra.mxu0 %v2314
      %2950 = vmatpush.bf16.msra.mxu0 %v2313
      %2951 = vmatmul.bf16.gmra.mxu0 %v1173
      %v2952 = vpop.f32.mrf.mxu0
      %v2953 = vadd.f32 %v2864, %v2952
      %v2954 = vpop.f32.mrf.mxu0
      %v2955 = vadd.f32 %v2866, %v2954
      %2956 = vmatmul.bf16.gmra.mxu0 %v1214
      %v2957 = vpop.f32.mrf.mxu0
      %v2958 = vadd.f32 %v2869, %v2957
      %v2959 = vpop.f32.mrf.mxu0
      %v2960 = vadd.f32 %v2871, %v2959
      %2961 = vmatmul.bf16.gmra.mxu0 %v1255
      %v2962 = vpop.f32.mrf.mxu0
      %v2963 = vadd.f32 %v2874, %v2962
      %v2964 = vpop.f32.mrf.mxu0
      %v2965 = vadd.f32 %v2876, %v2964
      %2966 = vmatmul.bf16.gmra.mxu0 %v1296
      %v2967 = vpop.f32.mrf.mxu0
      %v2968 = vadd.f32 %v2879, %v2967
      %v2969 = vpop.f32.mrf.mxu0
      %v2970 = vadd.f32 %v2881, %v2969
      %2971 = vmatmul.bf16.gmra.mxu0 %v1337
      %v2972 = vpop.f32.mrf.mxu0
      %v2973 = vadd.f32 %v2884, %v2972
      %v2974 = vpop.f32.mrf.mxu0
      %v2975 = vadd.f32 %v2886, %v2974
      %2976 = vmatmul.bf16.gmra.mxu0 %v1378
      %v2977 = vpop.f32.mrf.mxu0
      %v2978 = vadd.f32 %v2889, %v2977
      %v2979 = vpop.f32.mrf.mxu0
      %v2980 = vadd.f32 %v2891, %v2979
      %2981 = vmatmul.bf16.gmra.mxu0 %v1419
      %v2982 = vpop.f32.mrf.mxu0
      %v2983 = vadd.f32 %v2894, %v2982
      %v2984 = vpop.f32.mrf.mxu0
      %v2985 = vadd.f32 %v2896, %v2984
      %2986 = vmatmul.bf16.gmra.mxu0 %v1460
      %v2987 = vpop.f32.mrf.mxu0
      %v2988 = vadd.f32 %v2899, %v2987
      %v2989 = vpop.f32.mrf.mxu0
      %v2990 = vadd.f32 %v2901, %v2989
      %2991 = vmatmul.bf16.gmra.mxu0 %v1501
      %v2992 = vpop.f32.mrf.mxu0
      %v2993 = vadd.f32 %v2904, %v2992
      %v2994 = vpop.f32.mrf.mxu0
      %v2995 = vadd.f32 %v2906, %v2994
      %2996 = vmatmul.bf16.gmra.mxu0 %v1542
      %v2997 = vpop.f32.mrf.mxu0
      %v2998 = vadd.f32 %v2909, %v2997
      %v2999 = vpop.f32.mrf.mxu0
      %v3000 = vadd.f32 %v2911, %v2999
      %3001 = vmatmul.bf16.gmra.mxu0 %v1583
      %v3002 = vpop.f32.mrf.mxu0
      %v3003 = vadd.f32 %v2914, %v3002
      %v3004 = vpop.f32.mrf.mxu0
      %v3005 = vadd.f32 %v2916, %v3004
      %3006 = vmatmul.bf16.gmra.mxu0 %v1624
      %v3007 = vpop.f32.mrf.mxu0
      %v3008 = vadd.f32 %v2919, %v3007
      %v3009 = vpop.f32.mrf.mxu0
      %v3010 = vadd.f32 %v2921, %v3009
      %3011 = vmatmul.bf16.gmra.mxu0 %v1665
      %v3012 = vpop.f32.mrf.mxu0
      %v3013 = vadd.f32 %v2924, %v3012
      %v3014 = vpop.f32.mrf.mxu0
      %v3015 = vadd.f32 %v2926, %v3014
      %3016 = vmatmul.bf16.gmra.mxu0 %v1706
      %v3017 = vpop.f32.mrf.mxu0
      %v3018 = vadd.f32 %v2929, %v3017
      %v3019 = vpop.f32.mrf.mxu0
      %v3020 = vadd.f32 %v2931, %v3019
      %3021 = vmatmul.bf16.gmra.mxu0 %v1747
      %v3022 = vpop.f32.mrf.mxu0
      %v3023 = vadd.f32 %v2934, %v3022
      %v3024 = vpop.f32.mrf.mxu0
      %v3025 = vadd.f32 %v2936, %v3024
      %3026 = vmatmul.bf16.gmra.mxu0 %v1091
      %v3027 = vpop.f32.mrf.mxu0
      %v3028 = vadd.f32 %v2939, %v3027
      %v3029 = vpop.f32.mrf.mxu0
      %v3030 = vadd.f32 %v2941, %v3029
      %3031 = vdwg.mxu0
      %3032 = vmatpush.bf16.msra.mxu0 %v2328
      %3033 = vmatpush.bf16.msra.mxu0 %v2327
      %3034 = vmatpush.bf16.msra.mxu0 %v2326
      %3035 = vmatpush.bf16.msra.mxu0 %v2325
      %3036 = vmatpush.bf16.msra.mxu0 %v2324
      %3037 = vmatpush.bf16.msra.mxu0 %v2323
      %3038 = vmatpush.bf16.msra.mxu0 %v2322
      %3039 = vmatpush.bf16.msra.mxu0 %v2321
      %3040 = vmatmul.bf16.gmra.mxu0 %v1190
      %v3041 = vpop.f32.mrf.mxu0
      %v3042 = vadd.f32 %v2953, %v3041
      %v3043 = vpop.f32.mrf.mxu0
      %v3044 = vadd.f32 %v2955, %v3043
      %3045 = vmatmul.bf16.gmra.mxu0 %v1231
      %v3046 = vpop.f32.mrf.mxu0
      %v3047 = vadd.f32 %v2958, %v3046
      %v3048 = vpop.f32.mrf.mxu0
      %v3049 = vadd.f32 %v2960, %v3048
      %3050 = vmatmul.bf16.gmra.mxu0 %v1272
      %v3051 = vpop.f32.mrf.mxu0
      %v3052 = vadd.f32 %v2963, %v3051
      %v3053 = vpop.f32.mrf.mxu0
      %v3054 = vadd.f32 %v2965, %v3053
      %3055 = vmatmul.bf16.gmra.mxu0 %v1313
      %v3056 = vpop.f32.mrf.mxu0
      %v3057 = vadd.f32 %v2968, %v3056
      %v3058 = vpop.f32.mrf.mxu0
      %v3059 = vadd.f32 %v2970, %v3058
      %3060 = vmatmul.bf16.gmra.mxu0 %v1354
      %v3061 = vpop.f32.mrf.mxu0
      %v3062 = vadd.f32 %v2973, %v3061
      %v3063 = vpop.f32.mrf.mxu0
      %v3064 = vadd.f32 %v2975, %v3063
      %3065 = vmatmul.bf16.gmra.mxu0 %v1395
      %v3066 = vpop.f32.mrf.mxu0
      %v3067 = vadd.f32 %v2978, %v3066
      %v3068 = vpop.f32.mrf.mxu0
      %v3069 = vadd.f32 %v2980, %v3068
      %3070 = vmatmul.bf16.gmra.mxu0 %v1436
      %v3071 = vpop.f32.mrf.mxu0
      %v3072 = vadd.f32 %v2983, %v3071
      %v3073 = vpop.f32.mrf.mxu0
      %v3074 = vadd.f32 %v2985, %v3073
      %3075 = vmatmul.bf16.gmra.mxu0 %v1477
      %v3076 = vpop.f32.mrf.mxu0
      %v3077 = vadd.f32 %v2988, %v3076
      %v3078 = vpop.f32.mrf.mxu0
      %v3079 = vadd.f32 %v2990, %v3078
      %3080 = vmatmul.bf16.gmra.mxu0 %v1518
      %v3081 = vpop.f32.mrf.mxu0
      %v3082 = vadd.f32 %v2993, %v3081
      %v3083 = vpop.f32.mrf.mxu0
      %v3084 = vadd.f32 %v2995, %v3083
      %3085 = vmatmul.bf16.gmra.mxu0 %v1559
      %v3086 = vpop.f32.mrf.mxu0
      %v3087 = vadd.f32 %v2998, %v3086
      %v3088 = vpop.f32.mrf.mxu0
      %v3089 = vadd.f32 %v3000, %v3088
      %3090 = vmatmul.bf16.gmra.mxu0 %v1600
      %v3091 = vpop.f32.mrf.mxu0
      %v3092 = vadd.f32 %v3003, %v3091
      %v3093 = vpop.f32.mrf.mxu0
      %v3094 = vadd.f32 %v3005, %v3093
      %3095 = vmatmul.bf16.gmra.mxu0 %v1641
      %v3096 = vpop.f32.mrf.mxu0
      %v3097 = vadd.f32 %v3008, %v3096
      %v3098 = vpop.f32.mrf.mxu0
      %v3099 = vadd.f32 %v3010, %v3098
      %3100 = vmatmul.bf16.gmra.mxu0 %v1682
      %v3101 = vpop.f32.mrf.mxu0
      %v3102 = vadd.f32 %v3013, %v3101
      %v3103 = vpop.f32.mrf.mxu0
      %v3104 = vadd.f32 %v3015, %v3103
      %3105 = vmatmul.bf16.gmra.mxu0 %v1723
      %v3106 = vpop.f32.mrf.mxu0
      %v3107 = vadd.f32 %v3018, %v3106
      %v3108 = vpop.f32.mrf.mxu0
      %v3109 = vadd.f32 %v3020, %v3108
      %3110 = vmatmul.bf16.gmra.mxu0 %v1764
      %v3111 = vpop.f32.mrf.mxu0
      %v3112 = vadd.f32 %v3023, %v3111
      %v3113 = vpop.f32.mrf.mxu0
      %v3114 = vadd.f32 %v3025, %v3113
      %3115 = vmatmul.bf16.gmra.mxu0 %v1108
      %v3116 = vpop.f32.mrf.mxu0
      %v3117 = vadd.f32 %v3028, %v3116
      %v3118 = vpop.f32.mrf.mxu0
      %v3119 = vadd.f32 %v3030, %v3118
      %3120 = vdwg.mxu0
      %3121 = vmatpush.bf16.msra.mxu0 %v2336
      %3122 = vmatpush.bf16.msra.mxu0 %v2335
      %3123 = vmatpush.bf16.msra.mxu0 %v2334
      %3124 = vmatpush.bf16.msra.mxu0 %v2333
      %3125 = vmatpush.bf16.msra.mxu0 %v2332
      %3126 = vmatpush.bf16.msra.mxu0 %v2331
      %3127 = vmatpush.bf16.msra.mxu0 %v2330
      %3128 = vmatpush.bf16.msra.mxu0 %v2329
      %3129 = vmatmul.bf16.gmra.mxu0 %v1207
      %v3130 = vpop.f32.mrf.mxu0
      %v3131 = vadd.f32 %v3042, %v3130
      %v3132 = vpop.f32.mrf.mxu0
      %v3133 = vadd.f32 %v3044, %v3132
      %3134 = vmatmul.bf16.gmra.mxu0 %v1248
      %v3135 = vpop.f32.mrf.mxu0
      %v3136 = vadd.f32 %v3047, %v3135
      %v3137 = vpop.f32.mrf.mxu0
      %v3138 = vadd.f32 %v3049, %v3137
      %3139 = vmatmul.bf16.gmra.mxu0 %v1289
      %v3140 = vpop.f32.mrf.mxu0
      %v3141 = vadd.f32 %v3052, %v3140
      %v3142 = vpop.f32.mrf.mxu0
      %v3143 = vadd.f32 %v3054, %v3142
      %3144 = vmatmul.bf16.gmra.mxu0 %v1330
      %v3145 = vpop.f32.mrf.mxu0
      %v3146 = vadd.f32 %v3057, %v3145
      %v3147 = vpop.f32.mrf.mxu0
      %v3148 = vadd.f32 %v3059, %v3147
      %3149 = vmatmul.bf16.gmra.mxu0 %v1371
      %v3150 = vpop.f32.mrf.mxu0
      %v3151 = vadd.f32 %v3062, %v3150
      %v3152 = vpop.f32.mrf.mxu0
      %v3153 = vadd.f32 %v3064, %v3152
      %3154 = vmatmul.bf16.gmra.mxu0 %v1412
      %v3155 = vpop.f32.mrf.mxu0
      %v3156 = vadd.f32 %v3067, %v3155
      %v3157 = vpop.f32.mrf.mxu0
      %v3158 = vadd.f32 %v3069, %v3157
      %3159 = vmatmul.bf16.gmra.mxu0 %v1453
      %v3160 = vpop.f32.mrf.mxu0
      %v3161 = vadd.f32 %v3072, %v3160
      %v3162 = vpop.f32.mrf.mxu0
      %v3163 = vadd.f32 %v3074, %v3162
      %3164 = vmatmul.bf16.gmra.mxu0 %v1494
      %v3165 = vpop.f32.mrf.mxu0
      %v3166 = vadd.f32 %v3077, %v3165
      %v3167 = vpop.f32.mrf.mxu0
      %v3168 = vadd.f32 %v3079, %v3167
      %3169 = vmatmul.bf16.gmra.mxu0 %v1535
      %v3170 = vpop.f32.mrf.mxu0
      %v3171 = vadd.f32 %v3082, %v3170
      %v3172 = vpop.f32.mrf.mxu0
      %v3173 = vadd.f32 %v3084, %v3172
      %3174 = vmatmul.bf16.gmra.mxu0 %v1576
      %v3175 = vpop.f32.mrf.mxu0
      %v3176 = vadd.f32 %v3087, %v3175
      %v3177 = vpop.f32.mrf.mxu0
      %v3178 = vadd.f32 %v3089, %v3177
      %3179 = vmatmul.bf16.gmra.mxu0 %v1617
      %v3180 = vpop.f32.mrf.mxu0
      %v3181 = vadd.f32 %v3092, %v3180
      %v3182 = vpop.f32.mrf.mxu0
      %v3183 = vadd.f32 %v3094, %v3182
      %3184 = vmatmul.bf16.gmra.mxu0 %v1658
      %v3185 = vpop.f32.mrf.mxu0
      %v3186 = vadd.f32 %v3097, %v3185
      %v3187 = vpop.f32.mrf.mxu0
      %v3188 = vadd.f32 %v3099, %v3187
      %3189 = vmatmul.bf16.gmra.mxu0 %v1699
      %v3190 = vpop.f32.mrf.mxu0
      %v3191 = vadd.f32 %v3102, %v3190
      %v3192 = vpop.f32.mrf.mxu0
      %v3193 = vadd.f32 %v3104, %v3192
      %3194 = vmatmul.bf16.gmra.mxu0 %v1740
      %v3195 = vpop.f32.mrf.mxu0
      %v3196 = vadd.f32 %v3107, %v3195
      %v3197 = vpop.f32.mrf.mxu0
      %v3198 = vadd.f32 %v3109, %v3197
      %3199 = vmatmul.bf16.gmra.mxu0 %v1781
      %v3200 = vpop.f32.mrf.mxu0
      %v3201 = vadd.f32 %v3112, %v3200
      %v3202 = vpop.f32.mrf.mxu0
      %v3203 = vadd.f32 %v3114, %v3202
      %3204 = vmatmul.bf16.gmra.mxu0 %v1125
      %v3205 = vpop.f32.mrf.mxu0
      %v3206 = vadd.f32 %v3117, %v3205
      %v3207 = vpop.f32.mrf.mxu0
      %v3208 = vadd.f32 %v3119, %v3207
      %3209 = vdwg.mxu0
      %v3210 = vmax.f32 %v3131, 0.0
      %v3211 = vmax.f32 %v3133, 0.0
      %v3212 = vmax.f32 %v3136, 0.0
      %v3213 = vmax.f32 %v3138, 0.0
      %v3214 = vmax.f32 %v3141, 0.0
      %v3215 = vmax.f32 %v3143, 0.0
      %v3216 = vmax.f32 %v3146, 0.0
      %v3217 = vmax.f32 %v3148, 0.0
      %v3218 = vmax.f32 %v3151, 0.0
      %v3219 = vmax.f32 %v3153, 0.0
      %v3220 = vmax.f32 %v3156, 0.0
      %v3221 = vmax.f32 %v3158, 0.0
      %v3222 = vmax.f32 %v3161, 0.0
      %v3223 = vmax.f32 %v3163, 0.0
      %v3224 = vmax.f32 %v3166, 0.0
      %v3225 = vmax.f32 %v3168, 0.0
      %v3226 = vmax.f32 %v3171, 0.0
      %v3227 = vmax.f32 %v3173, 0.0
      %v3228 = vmax.f32 %v3176, 0.0
      %v3229 = vmax.f32 %v3178, 0.0
      %v3230 = vmax.f32 %v3181, 0.0
      %v3231 = vmax.f32 %v3183, 0.0
      %v3232 = vmax.f32 %v3186, 0.0
      %v3233 = vmax.f32 %v3188, 0.0
      %v3234 = vmax.f32 %v3191, 0.0
      %v3235 = vmax.f32 %v3193, 0.0
      %v3236 = vmax.f32 %v3196, 0.0
      %v3237 = vmax.f32 %v3198, 0.0
      %v3238 = vmax.f32 %v3201, 0.0
      %v3239 = vmax.f32 %v3203, 0.0
      %v3240 = vmax.f32 %v3206, 0.0
      %v3241 = vmax.f32 %v3208, 0.0
      %v3242 = vld [vmem:[%s4] sm:$0x1]
      %v3244 = vperm.slane %v3242, 0
      %v3246 = vmul.f32 %v3210, %v3244
      %v3247 = vmul.f32 %v3211, %v3244
      %v3248 = vmul.f32 %v3212, %v3244
      %v3249 = vmul.f32 %v3213, %v3244
      %v3250 = vmul.f32 %v3214, %v3244
      %v3251 = vmul.f32 %v3215, %v3244
      %v3252 = vmul.f32 %v3216, %v3244
      %v3253 = vmul.f32 %v3217, %v3244
      %v3254 = vmul.f32 %v3218, %v3244
      %v3255 = vmul.f32 %v3219, %v3244
      %v3256 = vmul.f32 %v3220, %v3244
      %v3257 = vmul.f32 %v3221, %v3244
      %v3258 = vmul.f32 %v3222, %v3244
      %v3259 = vmul.f32 %v3223, %v3244
      %v3260 = vmul.f32 %v3224, %v3244
      %v3261 = vmul.f32 %v3225, %v3244
      %v3262 = vmul.f32 %v3226, %v3244
      %v3263 = vmul.f32 %v3227, %v3244
      %v3264 = vmul.f32 %v3228, %v3244
      %v3265 = vmul.f32 %v3229, %v3244
      %v3266 = vmul.f32 %v3230, %v3244
      %v3267 = vmul.f32 %v3231, %v3244
      %v3268 = vmul.f32 %v3232, %v3244
      %v3269 = vmul.f32 %v3233, %v3244
      %v3270 = vmul.f32 %v3234, %v3244
      %v3271 = vmul.f32 %v3235, %v3244
      %v3272 = vmul.f32 %v3236, %v3244
      %v3273 = vmul.f32 %v3237, %v3244
      %v3274 = vmul.f32 %v3238, %v3244
      %v3275 = vmul.f32 %v3239, %v3244
      %v3276 = vmul.f32 %v3240, %v3244
      %v3277 = vmul.f32 %v3241, %v3244
      %v3278 = vld [vmem:[%s5] sm:$0x1]
      %v3280 = vperm.slane %v3278, 0
      %v3282 = vadd.f32 %v3246, %v3280
      %v3283 = vadd.f32 %v3247, %v3280
      %v3284 = vadd.f32 %v3248, %v3280
      %v3285 = vadd.f32 %v3249, %v3280
      %v3286 = vadd.f32 %v3250, %v3280
      %v3287 = vadd.f32 %v3251, %v3280
      %v3288 = vadd.f32 %v3252, %v3280
      %v3289 = vadd.f32 %v3253, %v3280
      %v3290 = vadd.f32 %v3254, %v3280
      %v3291 = vadd.f32 %v3255, %v3280
      %v3292 = vadd.f32 %v3256, %v3280
      %v3293 = vadd.f32 %v3257, %v3280
      %v3294 = vadd.f32 %v3258, %v3280
      %v3295 = vadd.f32 %v3259, %v3280
      %v3296 = vadd.f32 %v3260, %v3280
      %v3297 = vadd.f32 %v3261, %v3280
      %v3298 = vadd.f32 %v3262, %v3280
      %v3299 = vadd.f32 %v3263, %v3280
      %v3300 = vadd.f32 %v3264, %v3280
      %v3301 = vadd.f32 %v3265, %v3280
      %v3302 = vadd.f32 %v3266, %v3280
      %v3303 = vadd.f32 %v3267, %v3280
      %v3304 = vadd.f32 %v3268, %v3280
      %v3305 = vadd.f32 %v3269, %v3280
      %v3306 = vadd.f32 %v3270, %v3280
      %v3307 = vadd.f32 %v3271, %v3280
      %v3308 = vadd.f32 %v3272, %v3280
      %v3309 = vadd.f32 %v3273, %v3280
      %v3310 = vadd.f32 %v3274, %v3280
      %v3311 = vadd.f32 %v3275, %v3280
      %v3312 = vadd.f32 %v3276, %v3280
      %v3313 = vadd.f32 %v3277, %v3280
      %vm3314 = vcmp.gt.f32.partialorder %v3282, 0.0
      %vm3315 = vcmp.gt.f32.partialorder %v3283, 0.0
      %vm3316 = vcmp.gt.f32.partialorder %v3284, 0.0
      %vm3317 = vcmp.gt.f32.partialorder %v3285, 0.0
      %vm3318 = vcmp.gt.f32.partialorder %v3286, 0.0
      %vm3319 = vcmp.gt.f32.partialorder %v3287, 0.0
      %vm3320 = vcmp.gt.f32.partialorder %v3288, 0.0
      %vm3321 = vcmp.gt.f32.partialorder %v3289, 0.0
      %vm3322 = vcmp.gt.f32.partialorder %v3290, 0.0
      %vm3323 = vcmp.gt.f32.partialorder %v3291, 0.0
      %vm3324 = vcmp.gt.f32.partialorder %v3292, 0.0
      %vm3325 = vcmp.gt.f32.partialorder %v3293, 0.0
      %vm3326 = vcmp.gt.f32.partialorder %v3294, 0.0
      %vm3327 = vcmp.gt.f32.partialorder %v3295, 0.0
      %vm3328 = vcmp.gt.f32.partialorder %v3296, 0.0
      %vm3329 = vcmp.gt.f32.partialorder %v3297, 0.0
      %vm3330 = vcmp.gt.f32.partialorder %v3298, 0.0
      %vm3331 = vcmp.gt.f32.partialorder %v3299, 0.0
      %vm3332 = vcmp.gt.f32.partialorder %v3300, 0.0
      %vm3333 = vcmp.gt.f32.partialorder %v3301, 0.0
      %vm3334 = vcmp.gt.f32.partialorder %v3302, 0.0
      %vm3335 = vcmp.gt.f32.partialorder %v3303, 0.0
      %vm3336 = vcmp.gt.f32.partialorder %v3304, 0.0
      %vm3337 = vcmp.gt.f32.partialorder %v3305, 0.0
      %vm3338 = vcmp.gt.f32.partialorder %v3306, 0.0
      %vm3339 = vcmp.gt.f32.partialorder %v3307, 0.0
      %vm3340 = vcmp.gt.f32.partialorder %v3308, 0.0
      %vm3341 = vcmp.gt.f32.partialorder %v3309, 0.0
      %vm3342 = vcmp.gt.f32.partialorder %v3310, 0.0
      %vm3343 = vcmp.gt.f32.partialorder %v3311, 0.0
      %vm3344 = vcmp.gt.f32.partialorder %v3312, 0.0
      %vm3345 = vcmp.gt.f32.partialorder %v3313, 0.0
      %vm3346 = vcmp.lt.f32.partialorder %v3282, 0.0
      %vm3347 = vcmp.lt.f32.partialorder %v3283, 0.0
      %vm3348 = vcmp.lt.f32.partialorder %v3284, 0.0
      %vm3349 = vcmp.lt.f32.partialorder %v3285, 0.0
      %vm3350 = vcmp.lt.f32.partialorder %v3286, 0.0
      %vm3351 = vcmp.lt.f32.partialorder %v3287, 0.0
      %vm3352 = vcmp.lt.f32.partialorder %v3288, 0.0
      %vm3353 = vcmp.lt.f32.partialorder %v3289, 0.0
      %vm3354 = vcmp.lt.f32.partialorder %v3290, 0.0
      %vm3355 = vcmp.lt.f32.partialorder %v3291, 0.0
      %vm3356 = vcmp.lt.f32.partialorder %v3292, 0.0
      %vm3357 = vcmp.lt.f32.partialorder %v3293, 0.0
      %vm3358 = vcmp.lt.f32.partialorder %v3294, 0.0
      %vm3359 = vcmp.lt.f32.partialorder %v3295, 0.0
      %vm3360 = vcmp.lt.f32.partialorder %v3296, 0.0
      %vm3361 = vcmp.lt.f32.partialorder %v3297, 0.0
      %vm3362 = vcmp.lt.f32.partialorder %v3298, 0.0
      %vm3363 = vcmp.lt.f32.partialorder %v3299, 0.0
      %vm3364 = vcmp.lt.f32.partialorder %v3300, 0.0
      %vm3365 = vcmp.lt.f32.partialorder %v3301, 0.0
      %vm3366 = vcmp.lt.f32.partialorder %v3302, 0.0
      %vm3367 = vcmp.lt.f32.partialorder %v3303, 0.0
      %vm3368 = vcmp.lt.f32.partialorder %v3304, 0.0
      %vm3369 = vcmp.lt.f32.partialorder %v3305, 0.0
      %vm3370 = vcmp.lt.f32.partialorder %v3306, 0.0
      %vm3371 = vcmp.lt.f32.partialorder %v3307, 0.0
      %vm3372 = vcmp.lt.f32.partialorder %v3308, 0.0
      %vm3373 = vcmp.lt.f32.partialorder %v3309, 0.0
      %vm3374 = vcmp.lt.f32.partialorder %v3310, 0.0
      %vm3375 = vcmp.lt.f32.partialorder %v3311, 0.0
      %vm3376 = vcmp.lt.f32.partialorder %v3312, 0.0
      %vm3377 = vcmp.lt.f32.partialorder %v3313, 0.0
      %v3378 = vsel %vm3346, -1.0, 0.0
      %v3379 = vsel %vm3347, -1.0, 0.0
      %v3380 = vsel %vm3348, -1.0, 0.0
      %v3381 = vsel %vm3349, -1.0, 0.0
      %v3382 = vsel %vm3350, -1.0, 0.0
      %v3383 = vsel %vm3351, -1.0, 0.0
      %v3384 = vsel %vm3352, -1.0, 0.0
      %v3385 = vsel %vm3353, -1.0, 0.0
      %v3386 = vsel %vm3354, -1.0, 0.0
      %v3387 = vsel %vm3355, -1.0, 0.0
      %v3388 = vsel %vm3356, -1.0, 0.0
      %v3389 = vsel %vm3357, -1.0, 0.0
      %v3390 = vsel %vm3358, -1.0, 0.0
      %v3391 = vsel %vm3359, -1.0, 0.0
      %v3392 = vsel %vm3360, -1.0, 0.0
      %v3393 = vsel %vm3361, -1.0, 0.0
      %v3394 = vsel %vm3362, -1.0, 0.0
      %v3395 = vsel %vm3363, -1.0, 0.0
      %v3396 = vsel %vm3364, -1.0, 0.0
      %v3397 = vsel %vm3365, -1.0, 0.0
      %v3398 = vsel %vm3366, -1.0, 0.0
      %v3399 = vsel %vm3367, -1.0, 0.0
      %v3400 = vsel %vm3368, -1.0, 0.0
      %v3401 = vsel %vm3369, -1.0, 0.0
      %v3402 = vsel %vm3370, -1.0, 0.0
      %v3403 = vsel %vm3371, -1.0, 0.0
      %v3404 = vsel %vm3372, -1.0, 0.0
      %v3405 = vsel %vm3373, -1.0, 0.0
      %v3406 = vsel %vm3374, -1.0, 0.0
      %v3407 = vsel %vm3375, -1.0, 0.0
      %v3408 = vsel %vm3376, -1.0, 0.0
      %v3409 = vsel %vm3377, -1.0, 0.0
      %v3410 = vsel %vm3314, 1.0, %v3378
      %v3411 = vsel %vm3315, 1.0, %v3379
      %v3412 = vsel %vm3316, 1.0, %v3380
      %v3413 = vsel %vm3317, 1.0, %v3381
      %v3414 = vsel %vm3318, 1.0, %v3382
      %v3415 = vsel %vm3319, 1.0, %v3383
      %v3416 = vsel %vm3320, 1.0, %v3384
      %v3417 = vsel %vm3321, 1.0, %v3385
      %v3418 = vsel %vm3322, 1.0, %v3386
      %v3419 = vsel %vm3323, 1.0, %v3387
      %v3420 = vsel %vm3324, 1.0, %v3388
      %v3421 = vsel %vm3325, 1.0, %v3389
      %v3422 = vsel %vm3326, 1.0, %v3390
      %v3423 = vsel %vm3327, 1.0, %v3391
      %v3424 = vsel %vm3328, 1.0, %v3392
      %v3425 = vsel %vm3329, 1.0, %v3393
      %v3426 = vsel %vm3330, 1.0, %v3394
      %v3427 = vsel %vm3331, 1.0, %v3395
      %v3428 = vsel %vm3332, 1.0, %v3396
      %v3429 = vsel %vm3333, 1.0, %v3397
      %v3430 = vsel %vm3334, 1.0, %v3398
      %v3431 = vsel %vm3335, 1.0, %v3399
      %v3432 = vsel %vm3336, 1.0, %v3400
      %v3433 = vsel %vm3337, 1.0, %v3401
      %v3434 = vsel %vm3338, 1.0, %v3402
      %v3435 = vsel %vm3339, 1.0, %v3403
      %v3436 = vsel %vm3340, 1.0, %v3404
      %v3437 = vsel %vm3341, 1.0, %v3405
      %v3438 = vsel %vm3342, 1.0, %v3406
      %v3439 = vsel %vm3343, 1.0, %v3407
      %v3440 = vsel %vm3344, 1.0, %v3408
      %v3441 = vsel %vm3345, 1.0, %v3409
      %v3442 = vpack.c.bf16 %v3410, %v3410
      %v3443 = vpack.c.bf16 %v3411, %v3411
      %v3444 = vpack.c.bf16 %v3412, %v3412
      %v3445 = vpack.c.bf16 %v3413, %v3413
      %v3446 = vpack.c.bf16 %v3414, %v3414
      %v3447 = vpack.c.bf16 %v3415, %v3415
      %v3448 = vpack.c.bf16 %v3416, %v3416
      %v3449 = vpack.c.bf16 %v3417, %v3417
      %v3450 = vpack.c.bf16 %v3418, %v3418
      %v3451 = vpack.c.bf16 %v3419, %v3419
      %v3452 = vpack.c.bf16 %v3420, %v3420
      %v3453 = vpack.c.bf16 %v3421, %v3421
      %v3454 = vpack.c.bf16 %v3422, %v3422
      %v3455 = vpack.c.bf16 %v3423, %v3423
      %v3456 = vpack.c.bf16 %v3424, %v3424
      %v3457 = vpack.c.bf16 %v3425, %v3425
      %v3458 = vpack.c.bf16 %v3426, %v3426
      %v3459 = vpack.c.bf16 %v3427, %v3427
      %v3460 = vpack.c.bf16 %v3428, %v3428
      %v3461 = vpack.c.bf16 %v3429, %v3429
      %v3462 = vpack.c.bf16 %v3430, %v3430
      %v3463 = vpack.c.bf16 %v3431, %v3431
      %v3464 = vpack.c.bf16 %v3432, %v3432
      %v3465 = vpack.c.bf16 %v3433, %v3433
      %v3466 = vpack.c.bf16 %v3434, %v3434
      %v3467 = vpack.c.bf16 %v3435, %v3435
      %v3468 = vpack.c.bf16 %v3436, %v3436
      %v3469 = vpack.c.bf16 %v3437, %v3437
      %v3470 = vpack.c.bf16 %v3438, %v3438
      %v3471 = vpack.c.bf16 %v3439, %v3439
      %v3472 = vpack.c.bf16 %v3440, %v3440
      %v3473 = vpack.c.bf16 %v3441, %v3441
      %v3506 = vunpack.c.l.b16 %v3442
      %v3507 = vunpack.c.l.b16 %v3443
      %v3508 = vunpack.c.l.b16 %v3444
      %v3509 = vunpack.c.l.b16 %v3445
      %v3510 = vunpack.c.l.b16 %v3446
      %v3511 = vunpack.c.l.b16 %v3447
      %v3512 = vunpack.c.l.b16 %v3448
      %v3513 = vunpack.c.l.b16 %v3449
      %v3514 = vunpack.c.l.b16 %v3450
      %v3515 = vunpack.c.l.b16 %v3451
      %v3516 = vunpack.c.l.b16 %v3452
      %v3517 = vunpack.c.l.b16 %v3453
      %v3518 = vunpack.c.l.b16 %v3454
      %v3519 = vunpack.c.l.b16 %v3455
      %v3520 = vunpack.c.l.b16 %v3456
      %v3521 = vunpack.c.l.b16 %v3457
      %v3522 = vunpack.c.l.b16 %v3458
      %v3523 = vunpack.c.l.b16 %v3459
      %v3524 = vunpack.c.l.b16 %v3460
      %v3525 = vunpack.c.l.b16 %v3461
      %v3526 = vunpack.c.l.b16 %v3462
      %v3527 = vunpack.c.l.b16 %v3463
      %v3528 = vunpack.c.l.b16 %v3464
      %v3529 = vunpack.c.l.b16 %v3465
      %v3530 = vunpack.c.l.b16 %v3466
      %v3531 = vunpack.c.l.b16 %v3467
      %v3532 = vunpack.c.l.b16 %v3468
      %v3533 = vunpack.c.l.b16 %v3469
      %v3534 = vunpack.c.l.b16 %v3470
      %v3535 = vunpack.c.l.b16 %v3471
      %v3536 = vunpack.c.l.b16 %v3472
      %v3537 = vunpack.c.l.b16 %v3473
      %v3538 = vpack.c.b16 %v3507, %v3506
      %v3539 = vpack.c.b16 %v3509, %v3508
      %v3540 = vpack.c.b16 %v3511, %v3510
      %v3541 = vpack.c.b16 %v3513, %v3512
      %v3542 = vpack.c.b16 %v3515, %v3514
      %v3543 = vpack.c.b16 %v3517, %v3516
      %v3544 = vpack.c.b16 %v3519, %v3518
      %v3545 = vpack.c.b16 %v3521, %v3520
      %v3546 = vpack.c.b16 %v3523, %v3522
      %v3547 = vpack.c.b16 %v3525, %v3524
      %v3548 = vpack.c.b16 %v3527, %v3526
      %v3549 = vpack.c.b16 %v3529, %v3528
      %v3550 = vpack.c.b16 %v3531, %v3530
      %v3551 = vpack.c.b16 %v3533, %v3532
      %v3552 = vpack.c.b16 %v3535, %v3534
      %v3553 = vpack.c.b16 %v3537, %v3536
      %v3554 = vrot.slane %v3538, 4
      %v3555 = vrot.slane %v3539, 4
      %v3556 = vrot.slane %v3540, 4
      %v3557 = vrot.slane %v3541, 4
      %v3558 = vrot.slane %v3542, 4
      %v3559 = vrot.slane %v3543, 4
      %v3560 = vrot.slane %v3544, 4
      %v3561 = vrot.slane %v3545, 4
      %v3562 = vrot.slane %v3546, 4
      %v3563 = vrot.slane %v3547, 4
      %v3564 = vrot.slane %v3548, 4
      %v3565 = vrot.slane %v3549, 4
      %v3566 = vrot.slane %v3550, 4
      %v3567 = vrot.slane %v3551, 4
      %v3568 = vrot.slane %v3552, 4
      %v3569 = vrot.slane %v3553, 4
      %v3571 = vsel %vm723, 0, %v3554
      %v3573 = vsel %vm723, 0, %v3555
      %v3575 = vsel %vm723, 0, %v3556
      %v3577 = vsel %vm723, 0, %v3557
      %v3579 = vsel %vm723, 0, %v3558
      %v3581 = vsel %vm723, 0, %v3559
      %v3583 = vsel %vm723, 0, %v3560
      %v3585 = vsel %vm723, 0, %v3561
      %v3587 = vsel %vm723, 0, %v3562
      %v3589 = vsel %vm723, 0, %v3563
      %v3591 = vsel %vm723, 0, %v3564
      %v3593 = vsel %vm723, 0, %v3565
      %v3595 = vsel %vm723, 0, %v3566
      %v3597 = vsel %vm723, 0, %v3567
      %v3599 = vsel %vm723, 0, %v3568
      %v3601 = vsel %vm723, 0, %v3569
      %v3602 = vsel %vm723, %v3554, 0
      %v3603 = vsel %vm723, %v3555, 0
      %v3604 = vsel %vm723, %v3556, 0
      %v3605 = vsel %vm723, %v3557, 0
      %v3606 = vsel %vm723, %v3558, 0
      %v3607 = vsel %vm723, %v3559, 0
      %v3608 = vsel %vm723, %v3560, 0
      %v3609 = vsel %vm723, %v3561, 0
      %v3610 = vsel %vm723, %v3562, 0
      %v3611 = vsel %vm723, %v3563, 0
      %v3612 = vsel %vm723, %v3564, 0
      %v3613 = vsel %vm723, %v3565, 0
      %v3614 = vsel %vm723, %v3566, 0
      %v3615 = vsel %vm723, %v3567, 0
      %v3616 = vsel %vm723, %v3568, 0
      %v3617 = vsel %vm723, %v3569, 0
      %v3618 = vshrl.u32 %v3571, 16
      %v3620 = vshll.u32 %v3571, 16
      %v3622 = vrot.slane %v3620, 1
      %v3623 = vor.u32 %v3618, %v3622
      %v3624 = vshll.u32 %v3602, 16
      %v3626 = vrot.slane %v3624, 1
      %v3627 = vsel %vm776, %v3623, %v3626
      %v3628 = vshrl.u32 %v3602, 16
      %v3630 = vor.u32 %v3628, %v3626
      %v3631 = vshrl.u32 %v3573, 16
      %v3633 = vshll.u32 %v3573, 16
      %v3635 = vrot.slane %v3633, 1
      %v3636 = vor.u32 %v3631, %v3635
      %v3637 = vshll.u32 %v3603, 16
      %v3639 = vrot.slane %v3637, 1
      %v3640 = vsel %vm776, %v3636, %v3639
      %v3641 = vshrl.u32 %v3603, 16
      %v3643 = vor.u32 %v3641, %v3639
      %v3644 = vshrl.u32 %v3575, 16
      %v3646 = vshll.u32 %v3575, 16
      %v3648 = vrot.slane %v3646, 1
      %v3649 = vor.u32 %v3644, %v3648
      %v3650 = vshll.u32 %v3604, 16
      %v3652 = vrot.slane %v3650, 1
      %v3653 = vsel %vm776, %v3649, %v3652
      %v3654 = vshrl.u32 %v3604, 16
      %v3656 = vor.u32 %v3654, %v3652
      %v3657 = vshrl.u32 %v3577, 16
      %v3659 = vshll.u32 %v3577, 16
      %v3661 = vrot.slane %v3659, 1
      %v3662 = vor.u32 %v3657, %v3661
      %v3663 = vshll.u32 %v3605, 16
      %v3665 = vrot.slane %v3663, 1
      %v3666 = vsel %vm776, %v3662, %v3665
      %v3667 = vshrl.u32 %v3605, 16
      %v3669 = vor.u32 %v3667, %v3665
      %v3670 = vshrl.u32 %v3579, 16
      %v3672 = vshll.u32 %v3579, 16
      %v3674 = vrot.slane %v3672, 1
      %v3675 = vor.u32 %v3670, %v3674
      %v3676 = vshll.u32 %v3606, 16
      %v3678 = vrot.slane %v3676, 1
      %v3679 = vsel %vm776, %v3675, %v3678
      %v3680 = vshrl.u32 %v3606, 16
      %v3682 = vor.u32 %v3680, %v3678
      %v3683 = vshrl.u32 %v3581, 16
      %v3685 = vshll.u32 %v3581, 16
      %v3687 = vrot.slane %v3685, 1
      %v3688 = vor.u32 %v3683, %v3687
      %v3689 = vshll.u32 %v3607, 16
      %v3691 = vrot.slane %v3689, 1
      %v3692 = vsel %vm776, %v3688, %v3691
      %v3693 = vshrl.u32 %v3607, 16
      %v3695 = vor.u32 %v3693, %v3691
      %v3696 = vshrl.u32 %v3583, 16
      %v3698 = vshll.u32 %v3583, 16
      %v3700 = vrot.slane %v3698, 1
      %v3701 = vor.u32 %v3696, %v3700
      %v3702 = vshll.u32 %v3608, 16
      %v3704 = vrot.slane %v3702, 1
      %v3705 = vsel %vm776, %v3701, %v3704
      %v3706 = vshrl.u32 %v3608, 16
      %v3708 = vor.u32 %v3706, %v3704
      %v3709 = vshrl.u32 %v3585, 16
      %v3711 = vshll.u32 %v3585, 16
      %v3713 = vrot.slane %v3711, 1
      %v3714 = vor.u32 %v3709, %v3713
      %v3715 = vshll.u32 %v3609, 16
      %v3717 = vrot.slane %v3715, 1
      %v3718 = vsel %vm776, %v3714, %v3717
      %v3719 = vshrl.u32 %v3609, 16
      %v3721 = vor.u32 %v3719, %v3717
      %v3722 = vshrl.u32 %v3587, 16
      %v3724 = vshll.u32 %v3587, 16
      %v3726 = vrot.slane %v3724, 1
      %v3727 = vor.u32 %v3722, %v3726
      %v3728 = vshll.u32 %v3610, 16
      %v3730 = vrot.slane %v3728, 1
      %v3731 = vsel %vm776, %v3727, %v3730
      %v3732 = vshrl.u32 %v3610, 16
      %v3734 = vor.u32 %v3732, %v3730
      %v3735 = vshrl.u32 %v3589, 16
      %v3737 = vshll.u32 %v3589, 16
      %v3739 = vrot.slane %v3737, 1
      %v3740 = vor.u32 %v3735, %v3739
      %v3741 = vshll.u32 %v3611, 16
      %v3743 = vrot.slane %v3741, 1
      %v3744 = vsel %vm776, %v3740, %v3743
      %v3745 = vshrl.u32 %v3611, 16
      %v3747 = vor.u32 %v3745, %v3743
      %v3748 = vshrl.u32 %v3591, 16
      %v3750 = vshll.u32 %v3591, 16
      %v3752 = vrot.slane %v3750, 1
      %v3753 = vor.u32 %v3748, %v3752
      %v3754 = vshll.u32 %v3612, 16
      %v3756 = vrot.slane %v3754, 1
      %v3757 = vsel %vm776, %v3753, %v3756
      %v3758 = vshrl.u32 %v3612, 16
      %v3760 = vor.u32 %v3758, %v3756
      %v3761 = vshrl.u32 %v3593, 16
      %v3763 = vshll.u32 %v3593, 16
      %v3765 = vrot.slane %v3763, 1
      %v3766 = vor.u32 %v3761, %v3765
      %v3767 = vshll.u32 %v3613, 16
      %v3769 = vrot.slane %v3767, 1
      %v3770 = vsel %vm776, %v3766, %v3769
      %v3771 = vshrl.u32 %v3613, 16
      %v3773 = vor.u32 %v3771, %v3769
      %v3774 = vshrl.u32 %v3595, 16
      %v3776 = vshll.u32 %v3595, 16
      %v3778 = vrot.slane %v3776, 1
      %v3779 = vor.u32 %v3774, %v3778
      %v3780 = vshll.u32 %v3614, 16
      %v3782 = vrot.slane %v3780, 1
      %v3783 = vsel %vm776, %v3779, %v3782
      %v3784 = vshrl.u32 %v3614, 16
      %v3786 = vor.u32 %v3784, %v3782
      %v3787 = vshrl.u32 %v3597, 16
      %v3789 = vshll.u32 %v3597, 16
      %v3791 = vrot.slane %v3789, 1
      %v3792 = vor.u32 %v3787, %v3791
      %v3793 = vshll.u32 %v3615, 16
      %v3795 = vrot.slane %v3793, 1
      %v3796 = vsel %vm776, %v3792, %v3795
      %v3797 = vshrl.u32 %v3615, 16
      %v3799 = vor.u32 %v3797, %v3795
      %v3800 = vshrl.u32 %v3599, 16
      %v3802 = vshll.u32 %v3599, 16
      %v3804 = vrot.slane %v3802, 1
      %v3805 = vor.u32 %v3800, %v3804
      %v3806 = vshll.u32 %v3616, 16
      %v3808 = vrot.slane %v3806, 1
      %v3809 = vsel %vm776, %v3805, %v3808
      %v3810 = vshrl.u32 %v3616, 16
      %v3812 = vor.u32 %v3810, %v3808
      %v3843 = vrot.slane %v3571, 1
      %v3844 = vrot.slane %v3602, 1
      %v3845 = vsel %vm1017, %v3843, %v3844
      %v3846 = vrot.slane %v3573, 1
      %v3847 = vrot.slane %v3603, 1
      %v3848 = vsel %vm1017, %v3846, %v3847
      %v3849 = vrot.slane %v3575, 1
      %v3850 = vrot.slane %v3604, 1
      %v3851 = vsel %vm1017, %v3849, %v3850
      %v3852 = vrot.slane %v3577, 1
      %v3853 = vrot.slane %v3605, 1
      %v3854 = vsel %vm1017, %v3852, %v3853
      %v3855 = vrot.slane %v3579, 1
      %v3856 = vrot.slane %v3606, 1
      %v3857 = vsel %vm1017, %v3855, %v3856
      %v3858 = vrot.slane %v3581, 1
      %v3859 = vrot.slane %v3607, 1
      %v3860 = vsel %vm1017, %v3858, %v3859
      %v3861 = vrot.slane %v3583, 1
      %v3862 = vrot.slane %v3608, 1
      %v3863 = vsel %vm1017, %v3861, %v3862
      %v3864 = vrot.slane %v3585, 1
      %v3865 = vrot.slane %v3609, 1
      %v3866 = vsel %vm1017, %v3864, %v3865
      %v3867 = vrot.slane %v3587, 1
      %v3868 = vrot.slane %v3610, 1
      %v3869 = vsel %vm1017, %v3867, %v3868
      %v3870 = vrot.slane %v3589, 1
      %v3871 = vrot.slane %v3611, 1
      %v3872 = vsel %vm1017, %v3870, %v3871
      %v3873 = vrot.slane %v3591, 1
      %v3874 = vrot.slane %v3612, 1
      %v3875 = vsel %vm1017, %v3873, %v3874
      %v3876 = vrot.slane %v3593, 1
      %v3877 = vrot.slane %v3613, 1
      %v3878 = vsel %vm1017, %v3876, %v3877
      %v3879 = vrot.slane %v3595, 1
      %v3880 = vrot.slane %v3614, 1
      %v3881 = vsel %vm1017, %v3879, %v3880
      %v3882 = vrot.slane %v3597, 1
      %v3883 = vrot.slane %v3615, 1
      %v3884 = vsel %vm1017, %v3882, %v3883
      %v3885 = vrot.slane %v3599, 1
      %v3886 = vrot.slane %v3616, 1
      %v3887 = vsel %vm1017, %v3885, %v3886
      %v3888 = vshrl.u32 %v3601, 16
      %v3890 = vshll.u32 %v3601, 16
      %v3892 = vrot.slane %v3890, 1
      %v3893 = vor.u32 %v3888, %v3892
      %v3894 = vshll.u32 %v3617, 16
      %v3896 = vrot.slane %v3894, 1
      %v3897 = vsel %vm776, %v3893, %v3896
      %v3898 = vshrl.u32 %v3617, 16
      %v3900 = vor.u32 %v3898, %v3896
      %v3903 = vrot.slane %v3601, 1
      %v3904 = vrot.slane %v3617, 1
      %v3905 = vsel %vm1017, %v3903, %v3904
      %v3906 = vrot.slane %v3618, 3
      %v3907 = vrot.slane %v3620, 4
      %v3908 = vor.u32 %v3906, %v3907
      %v3909 = vrot.slane %v3628, 3
      %v3910 = vrot.slane %v3624, 4
      %v3911 = vor.u32 %v3909, %v3910
      %v3912 = vsel %vm1084, %v3908, %v3911
      %v3914 = vshrl.u32 %v3627, 16
      %v3916 = vrot.slane %v3914, 3
      %v3917 = vshll.u32 %v3627, 16
      %v3919 = vrot.slane %v3917, 4
      %v3920 = vor.u32 %v3916, %v3919
      %v3922 = vshrl.u32 %v3630, 16
      %v3924 = vrot.slane %v3922, 3
      %v3925 = vshll.u32 %v3630, 16
      %v3927 = vrot.slane %v3925, 4
      %v3928 = vor.u32 %v3924, %v3927
      %v3929 = vsel %vm1084, %v3920, %v3928
      %v3931 = vshrl.u32 %v3845, 16
      %v3933 = vrot.slane %v3931, 3
      %v3934 = vshll.u32 %v3845, 16
      %v3936 = vrot.slane %v3934, 4
      %v3937 = vor.u32 %v3933, %v3936
      %v3939 = vshrl.u32 %v3844, 16
      %v3941 = vrot.slane %v3939, 3
      %v3942 = vshll.u32 %v3844, 16
      %v3944 = vrot.slane %v3942, 4
      %v3945 = vor.u32 %v3941, %v3944
      %v3946 = vsel %vm1084, %v3937, %v3945
      %v3947 = vrot.slane %v3631, 3
      %v3948 = vrot.slane %v3633, 4
      %v3949 = vor.u32 %v3947, %v3948
      %v3950 = vrot.slane %v3641, 3
      %v3951 = vrot.slane %v3637, 4
      %v3952 = vor.u32 %v3950, %v3951
      %v3953 = vsel %vm1084, %v3949, %v3952
      %v3955 = vshrl.u32 %v3640, 16
      %v3957 = vrot.slane %v3955, 3
      %v3958 = vshll.u32 %v3640, 16
      %v3960 = vrot.slane %v3958, 4
      %v3961 = vor.u32 %v3957, %v3960
      %v3963 = vshrl.u32 %v3643, 16
      %v3965 = vrot.slane %v3963, 3
      %v3966 = vshll.u32 %v3643, 16
      %v3968 = vrot.slane %v3966, 4
      %v3969 = vor.u32 %v3965, %v3968
      %v3970 = vsel %vm1084, %v3961, %v3969
      %v3972 = vshrl.u32 %v3848, 16
      %v3974 = vrot.slane %v3972, 3
      %v3975 = vshll.u32 %v3848, 16
      %v3977 = vrot.slane %v3975, 4
      %v3978 = vor.u32 %v3974, %v3977
      %v3980 = vshrl.u32 %v3847, 16
      %v3982 = vrot.slane %v3980, 3
      %v3983 = vshll.u32 %v3847, 16
      %v3985 = vrot.slane %v3983, 4
      %v3986 = vor.u32 %v3982, %v3985
      %v3987 = vsel %vm1084, %v3978, %v3986
      %v3988 = vrot.slane %v3644, 3
      %v3989 = vrot.slane %v3646, 4
      %v3990 = vor.u32 %v3988, %v3989
      %v3991 = vrot.slane %v3654, 3
      %v3992 = vrot.slane %v3650, 4
      %v3993 = vor.u32 %v3991, %v3992
      %v3994 = vsel %vm1084, %v3990, %v3993
      %v3996 = vshrl.u32 %v3653, 16
      %v3998 = vrot.slane %v3996, 3
      %v3999 = vshll.u32 %v3653, 16
      %v4001 = vrot.slane %v3999, 4
      %v4002 = vor.u32 %v3998, %v4001
      %v4004 = vshrl.u32 %v3656, 16
      %v4006 = vrot.slane %v4004, 3
      %v4007 = vshll.u32 %v3656, 16
      %v4009 = vrot.slane %v4007, 4
      %v4010 = vor.u32 %v4006, %v4009
      %v4011 = vsel %vm1084, %v4002, %v4010
      %v4013 = vshrl.u32 %v3851, 16
      %v4015 = vrot.slane %v4013, 3
      %v4016 = vshll.u32 %v3851, 16
      %v4018 = vrot.slane %v4016, 4
      %v4019 = vor.u32 %v4015, %v4018
      %v4021 = vshrl.u32 %v3850, 16
      %v4023 = vrot.slane %v4021, 3
      %v4024 = vshll.u32 %v3850, 16
      %v4026 = vrot.slane %v4024, 4
      %v4027 = vor.u32 %v4023, %v4026
      %v4028 = vsel %vm1084, %v4019, %v4027
      %v4029 = vrot.slane %v3657, 3
      %v4030 = vrot.slane %v3659, 4
      %v4031 = vor.u32 %v4029, %v4030
      %v4032 = vrot.slane %v3667, 3
      %v4033 = vrot.slane %v3663, 4
      %v4034 = vor.u32 %v4032, %v4033
      %v4035 = vsel %vm1084, %v4031, %v4034
      %v4037 = vshrl.u32 %v3666, 16
      %v4039 = vrot.slane %v4037, 3
      %v4040 = vshll.u32 %v3666, 16
      %v4042 = vrot.slane %v4040, 4
      %v4043 = vor.u32 %v4039, %v4042
      %v4045 = vshrl.u32 %v3669, 16
      %v4047 = vrot.slane %v4045, 3
      %v4048 = vshll.u32 %v3669, 16
      %v4050 = vrot.slane %v4048, 4
      %v4051 = vor.u32 %v4047, %v4050
      %v4052 = vsel %vm1084, %v4043, %v4051
      %v4054 = vshrl.u32 %v3854, 16
      %v4056 = vrot.slane %v4054, 3
      %v4057 = vshll.u32 %v3854, 16
      %v4059 = vrot.slane %v4057, 4
      %v4060 = vor.u32 %v4056, %v4059
      %v4062 = vshrl.u32 %v3853, 16
      %v4064 = vrot.slane %v4062, 3
      %v4065 = vshll.u32 %v3853, 16
      %v4067 = vrot.slane %v4065, 4
      %v4068 = vor.u32 %v4064, %v4067
      %v4069 = vsel %vm1084, %v4060, %v4068
      %v4070 = vrot.slane %v3670, 3
      %v4071 = vrot.slane %v3672, 4
      %v4072 = vor.u32 %v4070, %v4071
      %v4073 = vrot.slane %v3680, 3
      %v4074 = vrot.slane %v3676, 4
      %v4075 = vor.u32 %v4073, %v4074
      %v4076 = vsel %vm1084, %v4072, %v4075
      %v4078 = vshrl.u32 %v3679, 16
      %v4080 = vrot.slane %v4078, 3
      %v4081 = vshll.u32 %v3679, 16
      %v4083 = vrot.slane %v4081, 4
      %v4084 = vor.u32 %v4080, %v4083
      %v4086 = vshrl.u32 %v3682, 16
      %v4088 = vrot.slane %v4086, 3
      %v4089 = vshll.u32 %v3682, 16
      %v4091 = vrot.slane %v4089, 4
      %v4092 = vor.u32 %v4088, %v4091
      %v4093 = vsel %vm1084, %v4084, %v4092
      %v4095 = vshrl.u32 %v3857, 16
      %v4097 = vrot.slane %v4095, 3
      %v4098 = vshll.u32 %v3857, 16
      %v4100 = vrot.slane %v4098, 4
      %v4101 = vor.u32 %v4097, %v4100
      %v4103 = vshrl.u32 %v3856, 16
      %v4105 = vrot.slane %v4103, 3
      %v4106 = vshll.u32 %v3856, 16
      %v4108 = vrot.slane %v4106, 4
      %v4109 = vor.u32 %v4105, %v4108
      %v4110 = vsel %vm1084, %v4101, %v4109
      %v4111 = vrot.slane %v3683, 3
      %v4112 = vrot.slane %v3685, 4
      %v4113 = vor.u32 %v4111, %v4112
      %v4114 = vrot.slane %v3693, 3
      %v4115 = vrot.slane %v3689, 4
      %v4116 = vor.u32 %v4114, %v4115
      %v4117 = vsel %vm1084, %v4113, %v4116
      %v4119 = vshrl.u32 %v3692, 16
      %v4121 = vrot.slane %v4119, 3
      %v4122 = vshll.u32 %v3692, 16
      %v4124 = vrot.slane %v4122, 4
      %v4125 = vor.u32 %v4121, %v4124
      %v4127 = vshrl.u32 %v3695, 16
      %v4129 = vrot.slane %v4127, 3
      %v4130 = vshll.u32 %v3695, 16
      %v4132 = vrot.slane %v4130, 4
      %v4133 = vor.u32 %v4129, %v4132
      %v4134 = vsel %vm1084, %v4125, %v4133
      %v4136 = vshrl.u32 %v3860, 16
      %v4138 = vrot.slane %v4136, 3
      %v4139 = vshll.u32 %v3860, 16
      %v4141 = vrot.slane %v4139, 4
      %v4142 = vor.u32 %v4138, %v4141
      %v4144 = vshrl.u32 %v3859, 16
      %v4146 = vrot.slane %v4144, 3
      %v4147 = vshll.u32 %v3859, 16
      %v4149 = vrot.slane %v4147, 4
      %v4150 = vor.u32 %v4146, %v4149
      %v4151 = vsel %vm1084, %v4142, %v4150
      %v4152 = vrot.slane %v3696, 3
      %v4153 = vrot.slane %v3698, 4
      %v4154 = vor.u32 %v4152, %v4153
      %v4155 = vrot.slane %v3706, 3
      %v4156 = vrot.slane %v3702, 4
      %v4157 = vor.u32 %v4155, %v4156
      %v4158 = vsel %vm1084, %v4154, %v4157
      %v4160 = vshrl.u32 %v3705, 16
      %v4162 = vrot.slane %v4160, 3
      %v4163 = vshll.u32 %v3705, 16
      %v4165 = vrot.slane %v4163, 4
      %v4166 = vor.u32 %v4162, %v4165
      %v4168 = vshrl.u32 %v3708, 16
      %v4170 = vrot.slane %v4168, 3
      %v4171 = vshll.u32 %v3708, 16
      %v4173 = vrot.slane %v4171, 4
      %v4174 = vor.u32 %v4170, %v4173
      %v4175 = vsel %vm1084, %v4166, %v4174
      %v4177 = vshrl.u32 %v3863, 16
      %v4179 = vrot.slane %v4177, 3
      %v4180 = vshll.u32 %v3863, 16
      %v4182 = vrot.slane %v4180, 4
      %v4183 = vor.u32 %v4179, %v4182
      %v4185 = vshrl.u32 %v3862, 16
      %v4187 = vrot.slane %v4185, 3
      %v4188 = vshll.u32 %v3862, 16
      %v4190 = vrot.slane %v4188, 4
      %v4191 = vor.u32 %v4187, %v4190
      %v4192 = vsel %vm1084, %v4183, %v4191
      %v4193 = vrot.slane %v3709, 3
      %v4194 = vrot.slane %v3711, 4
      %v4195 = vor.u32 %v4193, %v4194
      %v4196 = vrot.slane %v3719, 3
      %v4197 = vrot.slane %v3715, 4
      %v4198 = vor.u32 %v4196, %v4197
      %v4199 = vsel %vm1084, %v4195, %v4198
      %v4201 = vshrl.u32 %v3718, 16
      %v4203 = vrot.slane %v4201, 3
      %v4204 = vshll.u32 %v3718, 16
      %v4206 = vrot.slane %v4204, 4
      %v4207 = vor.u32 %v4203, %v4206
      %v4209 = vshrl.u32 %v3721, 16
      %v4211 = vrot.slane %v4209, 3
      %v4212 = vshll.u32 %v3721, 16
      %v4214 = vrot.slane %v4212, 4
      %v4215 = vor.u32 %v4211, %v4214
      %v4216 = vsel %vm1084, %v4207, %v4215
      %v4218 = vshrl.u32 %v3866, 16
      %v4220 = vrot.slane %v4218, 3
      %v4221 = vshll.u32 %v3866, 16
      %v4223 = vrot.slane %v4221, 4
      %v4224 = vor.u32 %v4220, %v4223
      %v4226 = vshrl.u32 %v3865, 16
      %v4228 = vrot.slane %v4226, 3
      %v4229 = vshll.u32 %v3865, 16
      %v4231 = vrot.slane %v4229, 4
      %v4232 = vor.u32 %v4228, %v4231
      %v4233 = vsel %vm1084, %v4224, %v4232
      %v4234 = vrot.slane %v3722, 3
      %v4235 = vrot.slane %v3724, 4
      %v4236 = vor.u32 %v4234, %v4235
      %v4237 = vrot.slane %v3732, 3
      %v4238 = vrot.slane %v3728, 4
      %v4239 = vor.u32 %v4237, %v4238
      %v4240 = vsel %vm1084, %v4236, %v4239
      %v4242 = vshrl.u32 %v3731, 16
      %v4244 = vrot.slane %v4242, 3
      %v4245 = vshll.u32 %v3731, 16
      %v4247 = vrot.slane %v4245, 4
      %v4248 = vor.u32 %v4244, %v4247
      %v4250 = vshrl.u32 %v3734, 16
      %v4252 = vrot.slane %v4250, 3
      %v4253 = vshll.u32 %v3734, 16
      %v4255 = vrot.slane %v4253, 4
      %v4256 = vor.u32 %v4252, %v4255
      %v4257 = vsel %vm1084, %v4248, %v4256
      %v4259 = vshrl.u32 %v3869, 16
      %v4261 = vrot.slane %v4259, 3
      %v4262 = vshll.u32 %v3869, 16
      %v4264 = vrot.slane %v4262, 4
      %v4265 = vor.u32 %v4261, %v4264
      %v4267 = vshrl.u32 %v3868, 16
      %v4269 = vrot.slane %v4267, 3
      %v4270 = vshll.u32 %v3868, 16
      %v4272 = vrot.slane %v4270, 4
      %v4273 = vor.u32 %v4269, %v4272
      %v4274 = vsel %vm1084, %v4265, %v4273
      %v4275 = vrot.slane %v3735, 3
      %v4276 = vrot.slane %v3737, 4
      %v4277 = vor.u32 %v4275, %v4276
      %v4278 = vrot.slane %v3745, 3
      %v4279 = vrot.slane %v3741, 4
      %v4280 = vor.u32 %v4278, %v4279
      %v4281 = vsel %vm1084, %v4277, %v4280
      %v4283 = vshrl.u32 %v3744, 16
      %v4285 = vrot.slane %v4283, 3
      %v4286 = vshll.u32 %v3744, 16
      %v4288 = vrot.slane %v4286, 4
      %v4289 = vor.u32 %v4285, %v4288
      %v4291 = vshrl.u32 %v3747, 16
      %v4293 = vrot.slane %v4291, 3
      %v4294 = vshll.u32 %v3747, 16
      %v4296 = vrot.slane %v4294, 4
      %v4297 = vor.u32 %v4293, %v4296
      %v4298 = vsel %vm1084, %v4289, %v4297
      %v4300 = vshrl.u32 %v3872, 16
      %v4302 = vrot.slane %v4300, 3
      %v4303 = vshll.u32 %v3872, 16
      %v4305 = vrot.slane %v4303, 4
      %v4306 = vor.u32 %v4302, %v4305
      %v4308 = vshrl.u32 %v3871, 16
      %v4310 = vrot.slane %v4308, 3
      %v4311 = vshll.u32 %v3871, 16
      %v4313 = vrot.slane %v4311, 4
      %v4314 = vor.u32 %v4310, %v4313
      %v4315 = vsel %vm1084, %v4306, %v4314
      %v4316 = vrot.slane %v3748, 3
      %v4317 = vrot.slane %v3750, 4
      %v4318 = vor.u32 %v4316, %v4317
      %v4319 = vrot.slane %v3758, 3
      %v4320 = vrot.slane %v3754, 4
      %v4321 = vor.u32 %v4319, %v4320
      %v4322 = vsel %vm1084, %v4318, %v4321
      %v4324 = vshrl.u32 %v3757, 16
      %v4326 = vrot.slane %v4324, 3
      %v4327 = vshll.u32 %v3757, 16
      %v4329 = vrot.slane %v4327, 4
      %v4330 = vor.u32 %v4326, %v4329
      %v4332 = vshrl.u32 %v3760, 16
      %v4334 = vrot.slane %v4332, 3
      %v4335 = vshll.u32 %v3760, 16
      %v4337 = vrot.slane %v4335, 4
      %v4338 = vor.u32 %v4334, %v4337
      %v4339 = vsel %vm1084, %v4330, %v4338
      %v4341 = vshrl.u32 %v3875, 16
      %v4343 = vrot.slane %v4341, 3
      %v4344 = vshll.u32 %v3875, 16
      %v4346 = vrot.slane %v4344, 4
      %v4347 = vor.u32 %v4343, %v4346
      %v4349 = vshrl.u32 %v3874, 16
      %v4351 = vrot.slane %v4349, 3
      %v4352 = vshll.u32 %v3874, 16
      %v4354 = vrot.slane %v4352, 4
      %v4355 = vor.u32 %v4351, %v4354
      %v4356 = vsel %vm1084, %v4347, %v4355
      %v4357 = vrot.slane %v3761, 3
      %v4358 = vrot.slane %v3763, 4
      %v4359 = vor.u32 %v4357, %v4358
      %v4360 = vrot.slane %v3771, 3
      %v4361 = vrot.slane %v3767, 4
      %v4362 = vor.u32 %v4360, %v4361
      %v4363 = vsel %vm1084, %v4359, %v4362
      %v4365 = vshrl.u32 %v3770, 16
      %v4367 = vrot.slane %v4365, 3
      %v4368 = vshll.u32 %v3770, 16
      %v4370 = vrot.slane %v4368, 4
      %v4371 = vor.u32 %v4367, %v4370
      %v4373 = vshrl.u32 %v3773, 16
      %v4375 = vrot.slane %v4373, 3
      %v4376 = vshll.u32 %v3773, 16
      %v4378 = vrot.slane %v4376, 4
      %v4379 = vor.u32 %v4375, %v4378
      %v4380 = vsel %vm1084, %v4371, %v4379
      %v4382 = vshrl.u32 %v3878, 16
      %v4384 = vrot.slane %v4382, 3
      %v4385 = vshll.u32 %v3878, 16
      %v4387 = vrot.slane %v4385, 4
      %v4388 = vor.u32 %v4384, %v4387
      %v4390 = vshrl.u32 %v3877, 16
      %v4392 = vrot.slane %v4390, 3
      %v4393 = vshll.u32 %v3877, 16
      %v4395 = vrot.slane %v4393, 4
      %v4396 = vor.u32 %v4392, %v4395
      %v4397 = vsel %vm1084, %v4388, %v4396
      %v4398 = vrot.slane %v3774, 3
      %v4399 = vrot.slane %v3776, 4
      %v4400 = vor.u32 %v4398, %v4399
      %v4401 = vrot.slane %v3784, 3
      %v4402 = vrot.slane %v3780, 4
      %v4403 = vor.u32 %v4401, %v4402
      %v4404 = vsel %vm1084, %v4400, %v4403
      %v4406 = vshrl.u32 %v3783, 16
      %v4408 = vrot.slane %v4406, 3
      %v4409 = vshll.u32 %v3783, 16
      %v4411 = vrot.slane %v4409, 4
      %v4412 = vor.u32 %v4408, %v4411
      %v4414 = vshrl.u32 %v3786, 16
      %v4416 = vrot.slane %v4414, 3
      %v4417 = vshll.u32 %v3786, 16
      %v4419 = vrot.slane %v4417, 4
      %v4420 = vor.u32 %v4416, %v4419
      %v4421 = vsel %vm1084, %v4412, %v4420
      %v4423 = vshrl.u32 %v3881, 16
      %v4425 = vrot.slane %v4423, 3
      %v4426 = vshll.u32 %v3881, 16
      %v4428 = vrot.slane %v4426, 4
      %v4429 = vor.u32 %v4425, %v4428
      %v4431 = vshrl.u32 %v3880, 16
      %v4433 = vrot.slane %v4431, 3
      %v4434 = vshll.u32 %v3880, 16
      %v4436 = vrot.slane %v4434, 4
      %v4437 = vor.u32 %v4433, %v4436
      %v4438 = vsel %vm1084, %v4429, %v4437
      %v4439 = vrot.slane %v3787, 3
      %v4440 = vrot.slane %v3789, 4
      %v4441 = vor.u32 %v4439, %v4440
      %v4442 = vrot.slane %v3797, 3
      %v4443 = vrot.slane %v3793, 4
      %v4444 = vor.u32 %v4442, %v4443
      %v4445 = vsel %vm1084, %v4441, %v4444
      %v4447 = vshrl.u32 %v3796, 16
      %v4449 = vrot.slane %v4447, 3
      %v4450 = vshll.u32 %v3796, 16
      %v4452 = vrot.slane %v4450, 4
      %v4453 = vor.u32 %v4449, %v4452
      %v4455 = vshrl.u32 %v3799, 16
      %v4457 = vrot.slane %v4455, 3
      %v4458 = vshll.u32 %v3799, 16
      %v4460 = vrot.slane %v4458, 4
      %v4461 = vor.u32 %v4457, %v4460
      %v4462 = vsel %vm1084, %v4453, %v4461
      %v4464 = vshrl.u32 %v3884, 16
      %v4466 = vrot.slane %v4464, 3
      %v4467 = vshll.u32 %v3884, 16
      %v4469 = vrot.slane %v4467, 4
      %v4470 = vor.u32 %v4466, %v4469
      %v4472 = vshrl.u32 %v3883, 16
      %v4474 = vrot.slane %v4472, 3
      %v4475 = vshll.u32 %v3883, 16
      %v4477 = vrot.slane %v4475, 4
      %v4478 = vor.u32 %v4474, %v4477
      %v4479 = vsel %vm1084, %v4470, %v4478
      %v4480 = vrot.slane %v3800, 3
      %v4481 = vrot.slane %v3802, 4
      %v4482 = vor.u32 %v4480, %v4481
      %v4483 = vrot.slane %v3810, 3
      %v4484 = vrot.slane %v3806, 4
      %v4485 = vor.u32 %v4483, %v4484
      %v4486 = vsel %vm1084, %v4482, %v4485
      %v4488 = vshrl.u32 %v3809, 16
      %v4490 = vrot.slane %v4488, 3
      %v4491 = vshll.u32 %v3809, 16
      %v4493 = vrot.slane %v4491, 4
      %v4494 = vor.u32 %v4490, %v4493
      %v4496 = vshrl.u32 %v3812, 16
      %v4498 = vrot.slane %v4496, 3
      %v4499 = vshll.u32 %v3812, 16
      %v4501 = vrot.slane %v4499, 4
      %v4502 = vor.u32 %v4498, %v4501
      %v4503 = vsel %vm1084, %v4494, %v4502
      %v4505 = vshrl.u32 %v3887, 16
      %v4507 = vrot.slane %v4505, 3
      %v4508 = vshll.u32 %v3887, 16
      %v4510 = vrot.slane %v4508, 4
      %v4511 = vor.u32 %v4507, %v4510
      %v4513 = vshrl.u32 %v3886, 16
      %v4515 = vrot.slane %v4513, 3
      %v4516 = vshll.u32 %v3886, 16
      %v4518 = vrot.slane %v4516, 4
      %v4519 = vor.u32 %v4515, %v4518
      %v4520 = vsel %vm1084, %v4511, %v4519
      %v4521 = vrot.slane %v3888, 3
      %v4522 = vrot.slane %v3890, 4
      %v4523 = vor.u32 %v4521, %v4522
      %v4524 = vrot.slane %v3898, 3
      %v4525 = vrot.slane %v3894, 4
      %v4526 = vor.u32 %v4524, %v4525
      %v4527 = vsel %vm1084, %v4523, %v4526
      %v4529 = vshrl.u32 %v3897, 16
      %v4531 = vrot.slane %v4529, 3
      %v4532 = vshll.u32 %v3897, 16
      %v4534 = vrot.slane %v4532, 4
      %v4535 = vor.u32 %v4531, %v4534
      %v4537 = vshrl.u32 %v3900, 16
      %v4539 = vrot.slane %v4537, 3
      %v4540 = vshll.u32 %v3900, 16
      %v4542 = vrot.slane %v4540, 4
      %v4543 = vor.u32 %v4539, %v4542
      %v4544 = vsel %vm1084, %v4535, %v4543
      %v4546 = vshrl.u32 %v3905, 16
      %v4548 = vrot.slane %v4546, 3
      %v4549 = vshll.u32 %v3905, 16
      %v4551 = vrot.slane %v4549, 4
      %v4552 = vor.u32 %v4548, %v4551
      %v4554 = vshrl.u32 %v3904, 16
      %v4556 = vrot.slane %v4554, 3
      %v4557 = vshll.u32 %v3904, 16
      %v4559 = vrot.slane %v4557, 4
      %v4560 = vor.u32 %v4556, %v4559
      %v4561 = vsel %vm1084, %v4552, %v4560
      %v4610 = vld [vmem:[%s6] sm:$0xf]
      %v4611 = vld [vmem:[%s6 + $0x4] sm:$0xf]
      %v4612 = vld [vmem:[%s6 + $0x8] sm:$0xf]
      %v4613 = vld [vmem:[%s6 + $0xc] sm:$0xf]
      %v4614 = vld [vmem:[%s6 + $0x10] sm:$0xf]
      %v4615 = vld [vmem:[%s6 + $0x14] sm:$0xf]
      %v4616 = vld [vmem:[%s6 + $0x18] sm:$0xf]
      %v4617 = vld [vmem:[%s6 + $0x1c] sm:$0xf]
      %v4618 = vld [vmem:[%s6 + $0x20] sm:$0xf]
      %v4619 = vld [vmem:[%s6 + $0x24] sm:$0xf]
      %v4620 = vld [vmem:[%s6 + $0x28] sm:$0xf]
      %v4621 = vld [vmem:[%s6 + $0x2c] sm:$0xf]
      %v4622 = vld [vmem:[%s6 + $0x30] sm:$0xf]
      %v4623 = vld [vmem:[%s6 + $0x34] sm:$0xf]
      %v4624 = vld [vmem:[%s6 + $0x38] sm:$0xf]
      %v4625 = vld [vmem:[%s6 + $0x3c] sm:$0xf]
      %v4626 = vld [vmem:[%s6 + $0x40] sm:$0xf]
      %v4627 = vld [vmem:[%s6 + $0x44] sm:$0xf]
      %v4628 = vld [vmem:[%s6 + $0x48] sm:$0xf]
      %v4629 = vld [vmem:[%s6 + $0x4c] sm:$0xf]
      %v4630 = vld [vmem:[%s6 + $0x50] sm:$0xf]
      %v4631 = vld [vmem:[%s6 + $0x54] sm:$0xf]
      %v4632 = vld [vmem:[%s6 + $0x58] sm:$0xf]
      %v4633 = vld [vmem:[%s6 + $0x5c] sm:$0xf]
      %v4634 = vld [vmem:[%s6 + $0x60] sm:$0xf]
      %v4635 = vld [vmem:[%s6 + $0x64] sm:$0xf]
      %v4636 = vld [vmem:[%s6 + $0x68] sm:$0xf]
      %v4637 = vld [vmem:[%s6 + $0x6c] sm:$0xf]
      %v4638 = vld [vmem:[%s6 + $0x70] sm:$0xf]
      %v4639 = vld [vmem:[%s6 + $0x74] sm:$0xf]
      %v4640 = vld [vmem:[%s6 + $0x78] sm:$0xf]
      %v4641 = vld [vmem:[%s6 + $0x7c] sm:$0xf]
      %v4642 = vld [vmem:[%s6 + $0x80] sm:$0xf]
      %v4643 = vld [vmem:[%s6 + $0x84] sm:$0xf]
      %v4644 = vld [vmem:[%s6 + $0x88] sm:$0xf]
      %v4645 = vld [vmem:[%s6 + $0x8c] sm:$0xf]
      %v4646 = vld [vmem:[%s6 + $0x90] sm:$0xf]
      %v4647 = vld [vmem:[%s6 + $0x94] sm:$0xf]
      %v4648 = vld [vmem:[%s6 + $0x98] sm:$0xf]
      %v4649 = vld [vmem:[%s6 + $0x9c] sm:$0xf]
      %v4650 = vld [vmem:[%s6 + $0xa0] sm:$0xf]
      %v4651 = vld [vmem:[%s6 + $0xa4] sm:$0xf]
      %v4652 = vld [vmem:[%s6 + $0xa8] sm:$0xf]
      %v4653 = vld [vmem:[%s6 + $0xac] sm:$0xf]
      %v4654 = vld [vmem:[%s6 + $0xb0] sm:$0xf]
      %v4655 = vld [vmem:[%s6 + $0xb4] sm:$0xf]
      %v4656 = vld [vmem:[%s6 + $0xb8] sm:$0xf]
      %v4657 = vld [vmem:[%s6 + $0xbc] sm:$0xf]
      %v4658 = vld [vmem:[%s6 + $0xc0] sm:$0xf]
      %v4659 = vld [vmem:[%s6 + $0xc4] sm:$0xf]
      %v4660 = vld [vmem:[%s6 + $0xc8] sm:$0xf]
      %v4661 = vld [vmem:[%s6 + $0xcc] sm:$0xf]
      %v4662 = vld [vmem:[%s6 + $0xd0] sm:$0xf]
      %v4663 = vld [vmem:[%s6 + $0xd4] sm:$0xf]
      %v4664 = vld [vmem:[%s6 + $0xd8] sm:$0xf]
      %v4665 = vld [vmem:[%s6 + $0xdc] sm:$0xf]
      %v4666 = vld [vmem:[%s6 + $0xe0] sm:$0xf]
      %v4667 = vld [vmem:[%s6 + $0xe4] sm:$0xf]
      %v4668 = vld [vmem:[%s6 + $0xe8] sm:$0xf]
      %v4669 = vld [vmem:[%s6 + $0xec] sm:$0xf]
      %v4670 = vld [vmem:[%s6 + $0xf0] sm:$0xf]
      %v4671 = vld [vmem:[%s6 + $0xf4] sm:$0xf]
      %v4672 = vld [vmem:[%s6 + $0xf8] sm:$0xf]
      %v4673 = vld [vmem:[%s6 + $0xfc] sm:$0xf]
      %v4674 = vld [vmem:[%s6 + $0x100] sm:$0xf]
      %v4675 = vld [vmem:[%s6 + $0x104] sm:$0xf]
      %v4676 = vld [vmem:[%s6 + $0x108] sm:$0xf]
      %v4677 = vld [vmem:[%s6 + $0x10c] sm:$0xf]
      %v4678 = vld [vmem:[%s6 + $0x110] sm:$0xf]
      %v4679 = vld [vmem:[%s6 + $0x114] sm:$0xf]
      %v4680 = vld [vmem:[%s6 + $0x118] sm:$0xf]
      %v4681 = vld [vmem:[%s6 + $0x11c] sm:$0xf]
      %v4682 = vld [vmem:[%s6 + $0x120] sm:$0xf]
      %v4683 = vld [vmem:[%s6 + $0x124] sm:$0xf]
      %v4684 = vld [vmem:[%s6 + $0x128] sm:$0xf]
      %v4685 = vld [vmem:[%s6 + $0x12c] sm:$0xf]
      %v4686 = vld [vmem:[%s6 + $0x130] sm:$0xf]
      %v4687 = vld [vmem:[%s6 + $0x134] sm:$0xf]
      %v4688 = vld [vmem:[%s6 + $0x138] sm:$0xf]
      %v4689 = vld [vmem:[%s6 + $0x13c] sm:$0xf]
      %v4690 = vld [vmem:[%s6 + $0x140] sm:$0xf]
      %v4691 = vld [vmem:[%s6 + $0x144] sm:$0xf]
      %v4692 = vld [vmem:[%s6 + $0x148] sm:$0xf]
      %v4693 = vld [vmem:[%s6 + $0x14c] sm:$0xf]
      %v4694 = vld [vmem:[%s6 + $0x150] sm:$0xf]
      %v4695 = vld [vmem:[%s6 + $0x154] sm:$0xf]
      %v4696 = vld [vmem:[%s6 + $0x158] sm:$0xf]
      %v4697 = vld [vmem:[%s6 + $0x15c] sm:$0xf]
      %v4698 = vld [vmem:[%s6 + $0x160] sm:$0xf]
      %v4699 = vld [vmem:[%s6 + $0x164] sm:$0xf]
      %v4700 = vld [vmem:[%s6 + $0x168] sm:$0xf]
      %v4701 = vld [vmem:[%s6 + $0x16c] sm:$0xf]
      %v4702 = vld [vmem:[%s6 + $0x170] sm:$0xf]
      %v4703 = vld [vmem:[%s6 + $0x174] sm:$0xf]
      %v4704 = vld [vmem:[%s6 + $0x178] sm:$0xf]
      %v4705 = vld [vmem:[%s6 + $0x17c] sm:$0xf]
      %v4706 = vld [vmem:[%s6 + $0x180] sm:$0xf]
      %v4707 = vld [vmem:[%s6 + $0x184] sm:$0xf]
      %v4708 = vld [vmem:[%s6 + $0x188] sm:$0xf]
      %v4709 = vld [vmem:[%s6 + $0x18c] sm:$0xf]
      %v4710 = vld [vmem:[%s6 + $0x190] sm:$0xf]
      %v4711 = vld [vmem:[%s6 + $0x194] sm:$0xf]
      %v4712 = vld [vmem:[%s6 + $0x198] sm:$0xf]
      %v4713 = vld [vmem:[%s6 + $0x19c] sm:$0xf]
      %v4714 = vld [vmem:[%s6 + $0x1a0] sm:$0xf]
      %v4715 = vld [vmem:[%s6 + $0x1a4] sm:$0xf]
      %v4716 = vld [vmem:[%s6 + $0x1a8] sm:$0xf]
      %v4717 = vld [vmem:[%s6 + $0x1ac] sm:$0xf]
      %v4718 = vld [vmem:[%s6 + $0x1b0] sm:$0xf]
      %v4719 = vld [vmem:[%s6 + $0x1b4] sm:$0xf]
      %v4720 = vld [vmem:[%s6 + $0x1b8] sm:$0xf]
      %v4721 = vld [vmem:[%s6 + $0x1bc] sm:$0xf]
      %v4722 = vld [vmem:[%s6 + $0x1c0] sm:$0xf]
      %v4723 = vld [vmem:[%s6 + $0x1c4] sm:$0xf]
      %v4724 = vld [vmem:[%s6 + $0x1c8] sm:$0xf]
      %v4725 = vld [vmem:[%s6 + $0x1cc] sm:$0xf]
      %v4726 = vld [vmem:[%s6 + $0x1d0] sm:$0xf]
      %v4727 = vld [vmem:[%s6 + $0x1d4] sm:$0xf]
      %v4728 = vld [vmem:[%s6 + $0x1d8] sm:$0xf]
      %v4729 = vld [vmem:[%s6 + $0x1dc] sm:$0xf]
      %v4730 = vld [vmem:[%s6 + $0x1e0] sm:$0xf]
      %v4731 = vld [vmem:[%s6 + $0x1e4] sm:$0xf]
      %v4732 = vld [vmem:[%s6 + $0x1e8] sm:$0xf]
      %v4733 = vld [vmem:[%s6 + $0x1ec] sm:$0xf]
      %v4734 = vld [vmem:[%s6 + $0x1f0] sm:$0xf]
      %v4735 = vld [vmem:[%s6 + $0x1f4] sm:$0xf]
      %v4736 = vld [vmem:[%s6 + $0x1f8] sm:$0xf]
      %v4737 = vld [vmem:[%s6 + $0x1fc] sm:$0xf]
      %v4738 = vld [vmem:[%s6 + $0x200] sm:$0xf]
      %v4739 = vld [vmem:[%s6 + $0x204] sm:$0xf]
      %v4740 = vld [vmem:[%s6 + $0x208] sm:$0xf]
      %v4741 = vld [vmem:[%s6 + $0x20c] sm:$0xf]
      %v4742 = vld [vmem:[%s6 + $0x210] sm:$0xf]
      %v4743 = vld [vmem:[%s6 + $0x214] sm:$0xf]
      %v4744 = vld [vmem:[%s6 + $0x218] sm:$0xf]
      %v4745 = vld [vmem:[%s6 + $0x21c] sm:$0xf]
      %v4746 = vld [vmem:[%s6 + $0x220] sm:$0xf]
      %v4747 = vld [vmem:[%s6 + $0x224] sm:$0xf]
      %v4748 = vld [vmem:[%s6 + $0x228] sm:$0xf]
      %v4749 = vld [vmem:[%s6 + $0x22c] sm:$0xf]
      %v4750 = vld [vmem:[%s6 + $0x230] sm:$0xf]
      %v4751 = vld [vmem:[%s6 + $0x234] sm:$0xf]
      %v4752 = vld [vmem:[%s6 + $0x238] sm:$0xf]
      %v4753 = vld [vmem:[%s6 + $0x23c] sm:$0xf]
      %v4754 = vld [vmem:[%s7] sm:$0x1]
      %v4756 = vperm.slane %v4754, 0
      %v4758 = vmul.f32 %v361, %v4756
      %v4759 = vmul.f32 %v362, %v4756
      %v4760 = vmul.f32 %v363, %v4756
      %v4761 = vmul.f32 %v364, %v4756
      %v4762 = vmul.f32 %v365, %v4756
      %v4763 = vmul.f32 %v366, %v4756
      %v4764 = vmul.f32 %v367, %v4756
      %v4765 = vmul.f32 %v368, %v4756
      %v4766 = vmul.f32 %v369, %v4756
      %v4767 = vmul.f32 %v370, %v4756
      %v4768 = vmul.f32 %v371, %v4756
      %v4769 = vmul.f32 %v372, %v4756
      %v4770 = vmul.f32 %v373, %v4756
      %v4771 = vmul.f32 %v374, %v4756
      %v4772 = vmul.f32 %v375, %v4756
      %v4773 = vmul.f32 %v376, %v4756
      %v4774 = vmul.f32 %v377, %v4756
      %v4775 = vmul.f32 %v378, %v4756
      %v4776 = vmul.f32 %v379, %v4756
      %v4777 = vmul.f32 %v380, %v4756
      %v4778 = vmul.f32 %v381, %v4756
      %v4779 = vmul.f32 %v382, %v4756
      %v4780 = vmul.f32 %v383, %v4756
      %v4781 = vmul.f32 %v384, %v4756
      %v4782 = vmul.f32 %v385, %v4756
      %v4783 = vmul.f32 %v386, %v4756
      %v4784 = vmul.f32 %v387, %v4756
      %v4785 = vmul.f32 %v388, %v4756
      %v4786 = vmul.f32 %v389, %v4756
      %v4787 = vmul.f32 %v390, %v4756
      %v4788 = vmul.f32 %v391, %v4756
      %v4789 = vmul.f32 %v392, %v4756
      %v4790 = vld [vmem:[%s8] sm:$0x1]
      %v4792 = vperm.slane %v4790, 0
      %v4794 = vadd.f32 %v4758, %v4792
      %v4795 = vadd.f32 %v4759, %v4792
      %v4796 = vadd.f32 %v4760, %v4792
      %v4797 = vadd.f32 %v4761, %v4792
      %v4798 = vadd.f32 %v4762, %v4792
      %v4799 = vadd.f32 %v4763, %v4792
      %v4800 = vadd.f32 %v4764, %v4792
      %v4801 = vadd.f32 %v4765, %v4792
      %v4802 = vadd.f32 %v4766, %v4792
      %v4803 = vadd.f32 %v4767, %v4792
      %v4804 = vadd.f32 %v4768, %v4792
      %v4805 = vadd.f32 %v4769, %v4792
      %v4806 = vadd.f32 %v4770, %v4792
      %v4807 = vadd.f32 %v4771, %v4792
      %v4808 = vadd.f32 %v4772, %v4792
      %v4809 = vadd.f32 %v4773, %v4792
      %v4810 = vadd.f32 %v4774, %v4792
      %v4811 = vadd.f32 %v4775, %v4792
      %v4812 = vadd.f32 %v4776, %v4792
      %v4813 = vadd.f32 %v4777, %v4792
      %v4814 = vadd.f32 %v4778, %v4792
      %v4815 = vadd.f32 %v4779, %v4792
      %v4816 = vadd.f32 %v4780, %v4792
      %v4817 = vadd.f32 %v4781, %v4792
      %v4818 = vadd.f32 %v4782, %v4792
      %v4819 = vadd.f32 %v4783, %v4792
      %v4820 = vadd.f32 %v4784, %v4792
      %v4821 = vadd.f32 %v4785, %v4792
      %v4822 = vadd.f32 %v4786, %v4792
      %v4823 = vadd.f32 %v4787, %v4792
      %v4824 = vadd.f32 %v4788, %v4792
      %v4825 = vadd.f32 %v4789, %v4792
      %vm4826 = vcmp.gt.f32.partialorder %v4794, 0.0
      %vm4827 = vcmp.gt.f32.partialorder %v4795, 0.0
      %vm4828 = vcmp.gt.f32.partialorder %v4796, 0.0
      %vm4829 = vcmp.gt.f32.partialorder %v4797, 0.0
      %vm4830 = vcmp.gt.f32.partialorder %v4798, 0.0
      %vm4831 = vcmp.gt.f32.partialorder %v4799, 0.0
      %vm4832 = vcmp.gt.f32.partialorder %v4800, 0.0
      %vm4833 = vcmp.gt.f32.partialorder %v4801, 0.0
      %vm4834 = vcmp.gt.f32.partialorder %v4802, 0.0
      %vm4835 = vcmp.gt.f32.partialorder %v4803, 0.0
      %vm4836 = vcmp.gt.f32.partialorder %v4804, 0.0
      %vm4837 = vcmp.gt.f32.partialorder %v4805, 0.0
      %vm4838 = vcmp.gt.f32.partialorder %v4806, 0.0
      %vm4839 = vcmp.gt.f32.partialorder %v4807, 0.0
      %vm4840 = vcmp.gt.f32.partialorder %v4808, 0.0
      %vm4841 = vcmp.gt.f32.partialorder %v4809, 0.0
      %vm4842 = vcmp.gt.f32.partialorder %v4810, 0.0
      %vm4843 = vcmp.gt.f32.partialorder %v4811, 0.0
      %vm4844 = vcmp.gt.f32.partialorder %v4812, 0.0
      %vm4845 = vcmp.gt.f32.partialorder %v4813, 0.0
      %vm4846 = vcmp.gt.f32.partialorder %v4814, 0.0
      %vm4847 = vcmp.gt.f32.partialorder %v4815, 0.0
      %vm4848 = vcmp.gt.f32.partialorder %v4816, 0.0
      %vm4849 = vcmp.gt.f32.partialorder %v4817, 0.0
      %vm4850 = vcmp.gt.f32.partialorder %v4818, 0.0
      %vm4851 = vcmp.gt.f32.partialorder %v4819, 0.0
      %vm4852 = vcmp.gt.f32.partialorder %v4820, 0.0
      %vm4853 = vcmp.gt.f32.partialorder %v4821, 0.0
      %vm4854 = vcmp.gt.f32.partialorder %v4822, 0.0
      %vm4855 = vcmp.gt.f32.partialorder %v4823, 0.0
      %vm4856 = vcmp.gt.f32.partialorder %v4824, 0.0
      %vm4857 = vcmp.gt.f32.partialorder %v4825, 0.0
      %vm4858 = vcmp.lt.f32.partialorder %v4794, 0.0
      %vm4859 = vcmp.lt.f32.partialorder %v4795, 0.0
      %vm4860 = vcmp.lt.f32.partialorder %v4796, 0.0
      %vm4861 = vcmp.lt.f32.partialorder %v4797, 0.0
      %vm4862 = vcmp.lt.f32.partialorder %v4798, 0.0
      %vm4863 = vcmp.lt.f32.partialorder %v4799, 0.0
      %vm4864 = vcmp.lt.f32.partialorder %v4800, 0.0
      %vm4865 = vcmp.lt.f32.partialorder %v4801, 0.0
      %vm4866 = vcmp.lt.f32.partialorder %v4802, 0.0
      %vm4867 = vcmp.lt.f32.partialorder %v4803, 0.0
      %vm4868 = vcmp.lt.f32.partialorder %v4804, 0.0
      %vm4869 = vcmp.lt.f32.partialorder %v4805, 0.0
      %vm4870 = vcmp.lt.f32.partialorder %v4806, 0.0
      %vm4871 = vcmp.lt.f32.partialorder %v4807, 0.0
      %vm4872 = vcmp.lt.f32.partialorder %v4808, 0.0
      %vm4873 = vcmp.lt.f32.partialorder %v4809, 0.0
      %vm4874 = vcmp.lt.f32.partialorder %v4810, 0.0
      %vm4875 = vcmp.lt.f32.partialorder %v4811, 0.0
      %vm4876 = vcmp.lt.f32.partialorder %v4812, 0.0
      %vm4877 = vcmp.lt.f32.partialorder %v4813, 0.0
      %vm4878 = vcmp.lt.f32.partialorder %v4814, 0.0
      %vm4879 = vcmp.lt.f32.partialorder %v4815, 0.0
      %vm4880 = vcmp.lt.f32.partialorder %v4816, 0.0
      %vm4881 = vcmp.lt.f32.partialorder %v4817, 0.0
      %vm4882 = vcmp.lt.f32.partialorder %v4818, 0.0
      %vm4883 = vcmp.lt.f32.partialorder %v4819, 0.0
      %vm4884 = vcmp.lt.f32.partialorder %v4820, 0.0
      %vm4885 = vcmp.lt.f32.partialorder %v4821, 0.0
      %vm4886 = vcmp.lt.f32.partialorder %v4822, 0.0
      %vm4887 = vcmp.lt.f32.partialorder %v4823, 0.0
      %vm4888 = vcmp.lt.f32.partialorder %v4824, 0.0
      %vm4889 = vcmp.lt.f32.partialorder %v4825, 0.0
      %v4890 = vsel %vm4858, -1.0, 0.0
      %v4891 = vsel %vm4859, -1.0, 0.0
      %v4892 = vsel %vm4860, -1.0, 0.0
      %v4893 = vsel %vm4861, -1.0, 0.0
      %v4894 = vsel %vm4862, -1.0, 0.0
      %v4895 = vsel %vm4863, -1.0, 0.0
      %v4896 = vsel %vm4864, -1.0, 0.0
      %v4897 = vsel %vm4865, -1.0, 0.0
      %v4898 = vsel %vm4866, -1.0, 0.0
      %v4899 = vsel %vm4867, -1.0, 0.0
      %v4900 = vsel %vm4868, -1.0, 0.0
      %v4901 = vsel %vm4869, -1.0, 0.0
      %v4902 = vsel %vm4870, -1.0, 0.0
      %v4903 = vsel %vm4871, -1.0, 0.0
      %v4904 = vsel %vm4872, -1.0, 0.0
      %v4905 = vsel %vm4873, -1.0, 0.0
      %v4906 = vsel %vm4874, -1.0, 0.0
      %v4907 = vsel %vm4875, -1.0, 0.0
      %v4908 = vsel %vm4876, -1.0, 0.0
      %v4909 = vsel %vm4877, -1.0, 0.0
      %v4910 = vsel %vm4878, -1.0, 0.0
      %v4911 = vsel %vm4879, -1.0, 0.0
      %v4912 = vsel %vm4880, -1.0, 0.0
      %v4913 = vsel %vm4881, -1.0, 0.0
      %v4914 = vsel %vm4882, -1.0, 0.0
      %v4915 = vsel %vm4883, -1.0, 0.0
      %v4916 = vsel %vm4884, -1.0, 0.0
      %v4917 = vsel %vm4885, -1.0, 0.0
      %v4918 = vsel %vm4886, -1.0, 0.0
      %v4919 = vsel %vm4887, -1.0, 0.0
      %v4920 = vsel %vm4888, -1.0, 0.0
      %v4921 = vsel %vm4889, -1.0, 0.0
      %v4922 = vsel %vm4826, 1.0, %v4890
      %v4923 = vsel %vm4827, 1.0, %v4891
      %v4924 = vsel %vm4828, 1.0, %v4892
      %v4925 = vsel %vm4829, 1.0, %v4893
      %v4926 = vsel %vm4830, 1.0, %v4894
      %v4927 = vsel %vm4831, 1.0, %v4895
      %v4928 = vsel %vm4832, 1.0, %v4896
      %v4929 = vsel %vm4833, 1.0, %v4897
      %v4930 = vsel %vm4834, 1.0, %v4898
      %v4931 = vsel %vm4835, 1.0, %v4899
      %v4932 = vsel %vm4836, 1.0, %v4900
      %v4933 = vsel %vm4837, 1.0, %v4901
      %v4934 = vsel %vm4838, 1.0, %v4902
      %v4935 = vsel %vm4839, 1.0, %v4903
      %v4936 = vsel %vm4840, 1.0, %v4904
      %v4937 = vsel %vm4841, 1.0, %v4905
      %v4938 = vsel %vm4842, 1.0, %v4906
      %v4939 = vsel %vm4843, 1.0, %v4907
      %v4940 = vsel %vm4844, 1.0, %v4908
      %v4941 = vsel %vm4845, 1.0, %v4909
      %v4942 = vsel %vm4846, 1.0, %v4910
      %v4943 = vsel %vm4847, 1.0, %v4911
      %v4944 = vsel %vm4848, 1.0, %v4912
      %v4945 = vsel %vm4849, 1.0, %v4913
      %v4946 = vsel %vm4850, 1.0, %v4914
      %v4947 = vsel %vm4851, 1.0, %v4915
      %v4948 = vsel %vm4852, 1.0, %v4916
      %v4949 = vsel %vm4853, 1.0, %v4917
      %v4950 = vsel %vm4854, 1.0, %v4918
      %v4951 = vsel %vm4855, 1.0, %v4919
      %v4952 = vsel %vm4856, 1.0, %v4920
      %v4953 = vsel %vm4857, 1.0, %v4921
      %v4954 = vpack.c.bf16 %v4922, %v4922
      %v4955 = vpack.c.bf16 %v4923, %v4923
      %v4956 = vpack.c.bf16 %v4924, %v4924
      %v4957 = vpack.c.bf16 %v4925, %v4925
      %v4958 = vpack.c.bf16 %v4926, %v4926
      %v4959 = vpack.c.bf16 %v4927, %v4927
      %v4960 = vpack.c.bf16 %v4928, %v4928
      %v4961 = vpack.c.bf16 %v4929, %v4929
      %v4962 = vpack.c.bf16 %v4930, %v4930
      %v4963 = vpack.c.bf16 %v4931, %v4931
      %v4964 = vpack.c.bf16 %v4932, %v4932
      %v4965 = vpack.c.bf16 %v4933, %v4933
      %v4966 = vpack.c.bf16 %v4934, %v4934
      %v4967 = vpack.c.bf16 %v4935, %v4935
      %v4968 = vpack.c.bf16 %v4936, %v4936
      %v4969 = vpack.c.bf16 %v4937, %v4937
      %v4970 = vpack.c.bf16 %v4938, %v4938
      %v4971 = vpack.c.bf16 %v4939, %v4939
      %v4972 = vpack.c.bf16 %v4940, %v4940
      %v4973 = vpack.c.bf16 %v4941, %v4941
      %v4974 = vpack.c.bf16 %v4942, %v4942
      %v4975 = vpack.c.bf16 %v4943, %v4943
      %v4976 = vpack.c.bf16 %v4944, %v4944
      %v4977 = vpack.c.bf16 %v4945, %v4945
      %v4978 = vpack.c.bf16 %v4946, %v4946
      %v4979 = vpack.c.bf16 %v4947, %v4947
      %v4980 = vpack.c.bf16 %v4948, %v4948
      %v4981 = vpack.c.bf16 %v4949, %v4949
      %v4982 = vpack.c.bf16 %v4950, %v4950
      %v4983 = vpack.c.bf16 %v4951, %v4951
      %v4984 = vpack.c.bf16 %v4952, %v4952
      %v4985 = vpack.c.bf16 %v4953, %v4953
      %v4986 = vld [vmem:[%s9] sm:$0xf]
      %v4987 = vld [vmem:[%s9 + $0x4] sm:$0xf]
      %v4988 = vld [vmem:[%s9 + $0x8] sm:$0xf]
      %v4989 = vld [vmem:[%s9 + $0xc] sm:$0xf]
      %v4990 = vld [vmem:[%s9 + $0x10] sm:$0xf]
      %v4991 = vld [vmem:[%s9 + $0x14] sm:$0xf]
      %v4992 = vld [vmem:[%s9 + $0x18] sm:$0xf]
      %v4993 = vld [vmem:[%s9 + $0x1c] sm:$0xf]
      %v4994 = vld [vmem:[%s9 + $0x20] sm:$0xf]
      %v4995 = vld [vmem:[%s9 + $0x24] sm:$0xf]
      %v4996 = vld [vmem:[%s9 + $0x28] sm:$0xf]
      %v4997 = vld [vmem:[%s9 + $0x2c] sm:$0xf]
      %v4998 = vld [vmem:[%s9 + $0x30] sm:$0xf]
      %v4999 = vld [vmem:[%s9 + $0x34] sm:$0xf]
      %v5000 = vld [vmem:[%s9 + $0x38] sm:$0xf]
      %v5001 = vld [vmem:[%s9 + $0x3c] sm:$0xf]
      %v5034 = vunpack.c.l.b16 %v4954
      %v5035 = vunpack.c.l.b16 %v4955
      %v5036 = vunpack.c.l.b16 %v4956
      %v5037 = vunpack.c.l.b16 %v4957
      %v5038 = vunpack.c.l.b16 %v4958
      %v5039 = vunpack.c.l.b16 %v4959
      %v5040 = vunpack.c.l.b16 %v4960
      %v5041 = vunpack.c.l.b16 %v4961
      %v5042 = vunpack.c.l.b16 %v4962
      %v5043 = vunpack.c.l.b16 %v4963
      %v5044 = vunpack.c.l.b16 %v4964
      %v5045 = vunpack.c.l.b16 %v4965
      %v5046 = vunpack.c.l.b16 %v4966
      %v5047 = vunpack.c.l.b16 %v4967
      %v5048 = vunpack.c.l.b16 %v4968
      %v5049 = vunpack.c.l.b16 %v4969
      %v5050 = vunpack.c.l.b16 %v4970
      %v5051 = vunpack.c.l.b16 %v4971
      %v5052 = vunpack.c.l.b16 %v4972
      %v5053 = vunpack.c.l.b16 %v4973
      %v5054 = vunpack.c.l.b16 %v4974
      %v5055 = vunpack.c.l.b16 %v4975
      %v5056 = vunpack.c.l.b16 %v4976
      %v5057 = vunpack.c.l.b16 %v4977
      %v5058 = vunpack.c.l.b16 %v4978
      %v5059 = vunpack.c.l.b16 %v4979
      %v5060 = vunpack.c.l.b16 %v4980
      %v5061 = vunpack.c.l.b16 %v4981
      %v5062 = vunpack.c.l.b16 %v4982
      %v5063 = vunpack.c.l.b16 %v4983
      %v5064 = vunpack.c.l.b16 %v4984
      %v5065 = vunpack.c.l.b16 %v4985
      %v5066 = vpack.c.b16 %v5035, %v5034
      %v5067 = vpack.c.b16 %v5037, %v5036
      %v5068 = vpack.c.b16 %v5039, %v5038
      %v5069 = vpack.c.b16 %v5041, %v5040
      %v5070 = vpack.c.b16 %v5043, %v5042
      %v5071 = vpack.c.b16 %v5045, %v5044
      %v5072 = vpack.c.b16 %v5047, %v5046
      %v5073 = vpack.c.b16 %v5049, %v5048
      %v5074 = vpack.c.b16 %v5051, %v5050
      %v5075 = vpack.c.b16 %v5053, %v5052
      %v5076 = vpack.c.b16 %v5055, %v5054
      %v5077 = vpack.c.b16 %v5057, %v5056
      %v5078 = vpack.c.b16 %v5059, %v5058
      %v5079 = vpack.c.b16 %v5061, %v5060
      %v5080 = vpack.c.b16 %v5063, %v5062
      %v5081 = vpack.c.b16 %v5065, %v5064
      %v5114 = vunpack.c.l.b16 %v4986
      %v5115 = vunpack.c.l.b16 %v4987
      %v5116 = vunpack.c.l.b16 %v4988
      %v5117 = vunpack.c.l.b16 %v4989
      %v5118 = vunpack.c.l.b16 %v4990
      %v5119 = vunpack.c.l.b16 %v4991
      %v5120 = vunpack.c.l.b16 %v4992
      %v5121 = vunpack.c.l.b16 %v4993
      %v5122 = vunpack.c.l.b16 %v4994
      %v5123 = vunpack.c.l.b16 %v4995
      %v5124 = vunpack.c.l.b16 %v4996
      %v5125 = vunpack.c.l.b16 %v4997
      %v5126 = vunpack.c.l.b16 %v4998
      %v5127 = vunpack.c.l.b16 %v4999
      %v5128 = vunpack.c.l.b16 %v5000
      %v5129 = vunpack.c.l.b16 %v5001
      %v5130 = vpack.c.b16 %v5115, %v5114
      %v5131 = vpack.c.b16 %v5117, %v5116
      %v5132 = vpack.c.b16 %v5119, %v5118
      %v5133 = vpack.c.b16 %v5121, %v5120
      %v5134 = vpack.c.b16 %v5123, %v5122
      %v5135 = vpack.c.b16 %v5125, %v5124
      %v5136 = vpack.c.b16 %v5127, %v5126
      %v5137 = vpack.c.b16 %v5129, %v5128
      %5146 = vmatpush.bf16.msra.mxu0 %v5137
      %5147 = vmatpush.bf16.msra.mxu0 %v5136
      %5148 = vmatpush.bf16.msra.mxu0 %v5135
      %5149 = vmatpush.bf16.msra.mxu0 %v5134
      %5150 = vmatpush.bf16.msra.mxu0 %v5133
      %5151 = vmatpush.bf16.msra.mxu0 %v5132
      %5152 = vmatpush.bf16.msra.mxu0 %v5131
      %5153 = vmatpush.bf16.msra.mxu0 %v5130
      %5154 = vmatmul.bf16.gmra.mxu0 %v5066
      %v5155 = vpop.f32.mrf.mxu0
      %v5156 = vadd.f32 0.0, %v5155
      %v5157 = vpop.f32.mrf.mxu0
      %v5158 = vadd.f32 0.0, %v5157
      %5159 = vmatmul.bf16.gmra.mxu0 %v5067
      %v5160 = vpop.f32.mrf.mxu0
      %v5161 = vadd.f32 0.0, %v5160
      %v5162 = vpop.f32.mrf.mxu0
      %v5163 = vadd.f32 0.0, %v5162
      %5164 = vmatmul.bf16.gmra.mxu0 %v5068
      %v5165 = vpop.f32.mrf.mxu0
      %v5166 = vadd.f32 0.0, %v5165
      %v5167 = vpop.f32.mrf.mxu0
      %v5168 = vadd.f32 0.0, %v5167
      %5169 = vmatmul.bf16.gmra.mxu0 %v5069
      %v5170 = vpop.f32.mrf.mxu0
      %v5171 = vadd.f32 0.0, %v5170
      %v5172 = vpop.f32.mrf.mxu0
      %v5173 = vadd.f32 0.0, %v5172
      %5174 = vmatmul.bf16.gmra.mxu0 %v5070
      %v5175 = vpop.f32.mrf.mxu0
      %v5176 = vadd.f32 0.0, %v5175
      %v5177 = vpop.f32.mrf.mxu0
      %v5178 = vadd.f32 0.0, %v5177
      %5179 = vmatmul.bf16.gmra.mxu0 %v5071
      %v5180 = vpop.f32.mrf.mxu0
      %v5181 = vadd.f32 0.0, %v5180
      %v5182 = vpop.f32.mrf.mxu0
      %v5183 = vadd.f32 0.0, %v5182
      %5184 = vmatmul.bf16.gmra.mxu0 %v5072
      %v5185 = vpop.f32.mrf.mxu0
      %v5186 = vadd.f32 0.0, %v5185
      %v5187 = vpop.f32.mrf.mxu0
      %v5188 = vadd.f32 0.0, %v5187
      %5189 = vmatmul.bf16.gmra.mxu0 %v5073
      %v5190 = vpop.f32.mrf.mxu0
      %v5191 = vadd.f32 0.0, %v5190
      %v5192 = vpop.f32.mrf.mxu0
      %v5193 = vadd.f32 0.0, %v5192
      %5194 = vmatmul.bf16.gmra.mxu0 %v5074
      %v5195 = vpop.f32.mrf.mxu0
      %v5196 = vadd.f32 0.0, %v5195
      %v5197 = vpop.f32.mrf.mxu0
      %v5198 = vadd.f32 0.0, %v5197
      %5199 = vmatmul.bf16.gmra.mxu0 %v5075
      %v5200 = vpop.f32.mrf.mxu0
      %v5201 = vadd.f32 0.0, %v5200
      %v5202 = vpop.f32.mrf.mxu0
      %v5203 = vadd.f32 0.0, %v5202
      %5204 = vmatmul.bf16.gmra.mxu0 %v5076
      %v5205 = vpop.f32.mrf.mxu0
      %v5206 = vadd.f32 0.0, %v5205
      %v5207 = vpop.f32.mrf.mxu0
      %v5208 = vadd.f32 0.0, %v5207
      %5209 = vmatmul.bf16.gmra.mxu0 %v5077
      %v5210 = vpop.f32.mrf.mxu0
      %v5211 = vadd.f32 0.0, %v5210
      %v5212 = vpop.f32.mrf.mxu0
      %v5213 = vadd.f32 0.0, %v5212
      %5214 = vmatmul.bf16.gmra.mxu0 %v5078
      %v5215 = vpop.f32.mrf.mxu0
      %v5216 = vadd.f32 0.0, %v5215
      %v5217 = vpop.f32.mrf.mxu0
      %v5218 = vadd.f32 0.0, %v5217
      %5219 = vmatmul.bf16.gmra.mxu0 %v5079
      %v5220 = vpop.f32.mrf.mxu0
      %v5221 = vadd.f32 0.0, %v5220
      %v5222 = vpop.f32.mrf.mxu0
      %v5223 = vadd.f32 0.0, %v5222
      %5224 = vmatmul.bf16.gmra.mxu0 %v5080
      %v5225 = vpop.f32.mrf.mxu0
      %v5226 = vadd.f32 0.0, %v5225
      %v5227 = vpop.f32.mrf.mxu0
      %v5228 = vadd.f32 0.0, %v5227
      %5229 = vmatmul.bf16.gmra.mxu0 %v5081
      %v5230 = vpop.f32.mrf.mxu0
      %v5231 = vadd.f32 0.0, %v5230
      %v5232 = vpop.f32.mrf.mxu0
      %v5233 = vadd.f32 0.0, %v5232
      %5234 = vdwg.mxu0
      %v5379 = vunpack.c.l.b16 %v4610
      %v5380 = vunpack.c.l.b16 %v4611
      %v5381 = vunpack.c.l.b16 %v4612
      %v5382 = vunpack.c.l.b16 %v4613
      %v5383 = vunpack.c.l.b16 %v4614
      %v5384 = vunpack.c.l.b16 %v4615
      %v5385 = vunpack.c.l.b16 %v4616
      %v5386 = vunpack.c.l.b16 %v4617
      %v5387 = vunpack.c.l.b16 %v4618
      %v5388 = vunpack.c.l.b16 %v4619
      %v5389 = vunpack.c.l.b16 %v4620
      %v5390 = vunpack.c.l.b16 %v4621
      %v5391 = vunpack.c.l.b16 %v4622
      %v5392 = vunpack.c.l.b16 %v4623
      %v5393 = vunpack.c.l.b16 %v4624
      %v5394 = vunpack.c.l.b16 %v4625
      %v5395 = vunpack.c.l.b16 %v4626
      %v5396 = vunpack.c.l.b16 %v4627
      %v5397 = vunpack.c.l.b16 %v4628
      %v5398 = vunpack.c.l.b16 %v4629
      %v5399 = vunpack.c.l.b16 %v4630
      %v5400 = vunpack.c.l.b16 %v4631
      %v5401 = vunpack.c.l.b16 %v4632
      %v5402 = vunpack.c.l.b16 %v4633
      %v5403 = vunpack.c.l.b16 %v4634
      %v5404 = vunpack.c.l.b16 %v4635
      %v5405 = vunpack.c.l.b16 %v4636
      %v5406 = vunpack.c.l.b16 %v4637
      %v5407 = vunpack.c.l.b16 %v4638
      %v5408 = vunpack.c.l.b16 %v4639
      %v5409 = vunpack.c.l.b16 %v4640
      %v5410 = vunpack.c.l.b16 %v4641
      %v5411 = vunpack.c.l.b16 %v4642
      %v5412 = vunpack.c.l.b16 %v4643
      %v5413 = vunpack.c.l.b16 %v4644
      %v5414 = vunpack.c.l.b16 %v4645
      %v5415 = vunpack.c.l.b16 %v4646
      %v5416 = vunpack.c.l.b16 %v4647
      %v5417 = vunpack.c.l.b16 %v4648
      %v5418 = vunpack.c.l.b16 %v4649
      %v5419 = vunpack.c.l.b16 %v4650
      %v5420 = vunpack.c.l.b16 %v4651
      %v5421 = vunpack.c.l.b16 %v4652
      %v5422 = vunpack.c.l.b16 %v4653
      %v5423 = vunpack.c.l.b16 %v4654
      %v5424 = vunpack.c.l.b16 %v4655
      %v5425 = vunpack.c.l.b16 %v4656
      %v5426 = vunpack.c.l.b16 %v4657
      %v5427 = vunpack.c.l.b16 %v4658
      %v5428 = vunpack.c.l.b16 %v4659
      %v5429 = vunpack.c.l.b16 %v4660
      %v5430 = vunpack.c.l.b16 %v4661
      %v5431 = vunpack.c.l.b16 %v4662
      %v5432 = vunpack.c.l.b16 %v4663
      %v5433 = vunpack.c.l.b16 %v4664
      %v5434 = vunpack.c.l.b16 %v4665
      %v5435 = vunpack.c.l.b16 %v4666
      %v5436 = vunpack.c.l.b16 %v4667
      %v5437 = vunpack.c.l.b16 %v4668
      %v5438 = vunpack.c.l.b16 %v4669
      %v5439 = vunpack.c.l.b16 %v4670
      %v5440 = vunpack.c.l.b16 %v4671
      %v5441 = vunpack.c.l.b16 %v4672
      %v5442 = vunpack.c.l.b16 %v4673
      %v5443 = vunpack.c.l.b16 %v4674
      %v5444 = vunpack.c.l.b16 %v4675
      %v5445 = vunpack.c.l.b16 %v4676
      %v5446 = vunpack.c.l.b16 %v4677
      %v5447 = vunpack.c.l.b16 %v4678
      %v5448 = vunpack.c.l.b16 %v4679
      %v5449 = vunpack.c.l.b16 %v4680
      %v5450 = vunpack.c.l.b16 %v4681
      %v5451 = vunpack.c.l.b16 %v4682
      %v5452 = vunpack.c.l.b16 %v4683
      %v5453 = vunpack.c.l.b16 %v4684
      %v5454 = vunpack.c.l.b16 %v4685
      %v5455 = vunpack.c.l.b16 %v4686
      %v5456 = vunpack.c.l.b16 %v4687
      %v5457 = vunpack.c.l.b16 %v4688
      %v5458 = vunpack.c.l.b16 %v4689
      %v5459 = vunpack.c.l.b16 %v4690
      %v5460 = vunpack.c.l.b16 %v4691
      %v5461 = vunpack.c.l.b16 %v4692
      %v5462 = vunpack.c.l.b16 %v4693
      %v5463 = vunpack.c.l.b16 %v4694
      %v5464 = vunpack.c.l.b16 %v4695
      %v5465 = vunpack.c.l.b16 %v4696
      %v5466 = vunpack.c.l.b16 %v4697
      %v5467 = vunpack.c.l.b16 %v4698
      %v5468 = vunpack.c.l.b16 %v4699
      %v5469 = vunpack.c.l.b16 %v4700
      %v5470 = vunpack.c.l.b16 %v4701
      %v5471 = vunpack.c.l.b16 %v4702
      %v5472 = vunpack.c.l.b16 %v4703
      %v5473 = vunpack.c.l.b16 %v4704
      %v5474 = vunpack.c.l.b16 %v4705
      %v5475 = vunpack.c.l.b16 %v4706
      %v5476 = vunpack.c.l.b16 %v4707
      %v5477 = vunpack.c.l.b16 %v4708
      %v5478 = vunpack.c.l.b16 %v4709
      %v5479 = vunpack.c.l.b16 %v4710
      %v5480 = vunpack.c.l.b16 %v4711
      %v5481 = vunpack.c.l.b16 %v4712
      %v5482 = vunpack.c.l.b16 %v4713
      %v5483 = vunpack.c.l.b16 %v4714
      %v5484 = vunpack.c.l.b16 %v4715
      %v5485 = vunpack.c.l.b16 %v4716
      %v5486 = vunpack.c.l.b16 %v4717
      %v5487 = vunpack.c.l.b16 %v4718
      %v5488 = vunpack.c.l.b16 %v4719
      %v5489 = vunpack.c.l.b16 %v4720
      %v5490 = vunpack.c.l.b16 %v4721
      %v5491 = vunpack.c.l.b16 %v4722
      %v5492 = vunpack.c.l.b16 %v4723
      %v5493 = vunpack.c.l.b16 %v4724
      %v5494 = vunpack.c.l.b16 %v4725
      %v5495 = vunpack.c.l.b16 %v4726
      %v5496 = vunpack.c.l.b16 %v4727
      %v5497 = vunpack.c.l.b16 %v4728
      %v5498 = vunpack.c.l.b16 %v4729
      %v5499 = vunpack.c.l.b16 %v4730
      %v5500 = vunpack.c.l.b16 %v4731
      %v5501 = vunpack.c.l.b16 %v4732
      %v5502 = vunpack.c.l.b16 %v4733
      %v5503 = vunpack.c.l.b16 %v4734
      %v5504 = vunpack.c.l.b16 %v4735
      %v5505 = vunpack.c.l.b16 %v4736
      %v5506 = vunpack.c.l.b16 %v4737
      %v5507 = vunpack.c.l.b16 %v4738
      %v5508 = vunpack.c.l.b16 %v4739
      %v5509 = vunpack.c.l.b16 %v4740
      %v5510 = vunpack.c.l.b16 %v4741
      %v5511 = vunpack.c.l.b16 %v4742
      %v5512 = vunpack.c.l.b16 %v4743
      %v5513 = vunpack.c.l.b16 %v4744
      %v5514 = vunpack.c.l.b16 %v4745
      %v5515 = vunpack.c.l.b16 %v4746
      %v5516 = vunpack.c.l.b16 %v4747
      %v5517 = vunpack.c.l.b16 %v4748
      %v5518 = vunpack.c.l.b16 %v4749
      %v5519 = vunpack.c.l.b16 %v4750
      %v5520 = vunpack.c.l.b16 %v4751
      %v5521 = vunpack.c.l.b16 %v4752
      %v5522 = vunpack.c.l.b16 %v4753
      %v5523 = vpack.c.b16 %v5380, %v5379
      %v5524 = vpack.c.b16 %v5382, %v5381
      %v5525 = vpack.c.b16 %v5384, %v5383
      %v5526 = vpack.c.b16 %v5386, %v5385
      %v5527 = vpack.c.b16 %v5388, %v5387
      %v5528 = vpack.c.b16 %v5390, %v5389
      %v5529 = vpack.c.b16 %v5392, %v5391
      %v5530 = vpack.c.b16 %v5394, %v5393
      %v5531 = vpack.c.b16 %v5396, %v5395
      %v5532 = vpack.c.b16 %v5398, %v5397
      %v5533 = vpack.c.b16 %v5400, %v5399
      %v5534 = vpack.c.b16 %v5402, %v5401
      %v5535 = vpack.c.b16 %v5404, %v5403
      %v5536 = vpack.c.b16 %v5406, %v5405
      %v5537 = vpack.c.b16 %v5408, %v5407
      %v5538 = vpack.c.b16 %v5410, %v5409
      %v5539 = vpack.c.b16 %v5412, %v5411
      %v5540 = vpack.c.b16 %v5414, %v5413
      %v5541 = vpack.c.b16 %v5416, %v5415
      %v5542 = vpack.c.b16 %v5418, %v5417
      %v5543 = vpack.c.b16 %v5420, %v5419
      %v5544 = vpack.c.b16 %v5422, %v5421
      %v5545 = vpack.c.b16 %v5424, %v5423
      %v5546 = vpack.c.b16 %v5426, %v5425
      %v5547 = vpack.c.b16 %v5428, %v5427
      %v5548 = vpack.c.b16 %v5430, %v5429
      %v5549 = vpack.c.b16 %v5432, %v5431
      %v5550 = vpack.c.b16 %v5434, %v5433
      %v5551 = vpack.c.b16 %v5436, %v5435
      %v5552 = vpack.c.b16 %v5438, %v5437
      %v5553 = vpack.c.b16 %v5440, %v5439
      %v5554 = vpack.c.b16 %v5442, %v5441
      %v5555 = vpack.c.b16 %v5444, %v5443
      %v5556 = vpack.c.b16 %v5446, %v5445
      %v5557 = vpack.c.b16 %v5448, %v5447
      %v5558 = vpack.c.b16 %v5450, %v5449
      %v5559 = vpack.c.b16 %v5452, %v5451
      %v5560 = vpack.c.b16 %v5454, %v5453
      %v5561 = vpack.c.b16 %v5456, %v5455
      %v5562 = vpack.c.b16 %v5458, %v5457
      %v5563 = vpack.c.b16 %v5460, %v5459
      %v5564 = vpack.c.b16 %v5462, %v5461
      %v5565 = vpack.c.b16 %v5464, %v5463
      %v5566 = vpack.c.b16 %v5466, %v5465
      %v5567 = vpack.c.b16 %v5468, %v5467
      %v5568 = vpack.c.b16 %v5470, %v5469
      %v5569 = vpack.c.b16 %v5472, %v5471
      %v5570 = vpack.c.b16 %v5474, %v5473
      %v5571 = vpack.c.b16 %v5476, %v5475
      %v5572 = vpack.c.b16 %v5478, %v5477
      %v5573 = vpack.c.b16 %v5480, %v5479
      %v5574 = vpack.c.b16 %v5482, %v5481
      %v5575 = vpack.c.b16 %v5484, %v5483
      %v5576 = vpack.c.b16 %v5486, %v5485
      %v5577 = vpack.c.b16 %v5488, %v5487
      %v5578 = vpack.c.b16 %v5490, %v5489
      %v5579 = vpack.c.b16 %v5492, %v5491
      %v5580 = vpack.c.b16 %v5494, %v5493
      %v5581 = vpack.c.b16 %v5496, %v5495
      %v5582 = vpack.c.b16 %v5498, %v5497
      %v5583 = vpack.c.b16 %v5500, %v5499
      %v5584 = vpack.c.b16 %v5502, %v5501
      %v5585 = vpack.c.b16 %v5504, %v5503
      %v5586 = vpack.c.b16 %v5506, %v5505
      %v5587 = vpack.c.b16 %v5508, %v5507
      %v5588 = vpack.c.b16 %v5510, %v5509
      %v5589 = vpack.c.b16 %v5512, %v5511
      %v5590 = vpack.c.b16 %v5514, %v5513
      %v5591 = vpack.c.b16 %v5516, %v5515
      %v5592 = vpack.c.b16 %v5518, %v5517
      %v5593 = vpack.c.b16 %v5520, %v5519
      %v5594 = vpack.c.b16 %v5522, %v5521
      %5667 = vmatpush.bf16.msra.mxu0 %v5530
      %5668 = vmatpush.bf16.msra.mxu0 %v5529
      %5669 = vmatpush.bf16.msra.mxu0 %v5528
      %5670 = vmatpush.bf16.msra.mxu0 %v5527
      %5671 = vmatpush.bf16.msra.mxu0 %v5526
      %5672 = vmatpush.bf16.msra.mxu0 %v5525
      %5673 = vmatpush.bf16.msra.mxu0 %v5524
      %5674 = vmatpush.bf16.msra.mxu0 %v5523
      %5675 = vmatmul.bf16.gmra.mxu0 %v1091
      %v5676 = vpop.f32.mrf.mxu0
      %v5677 = vadd.f32 %v5156, %v5676
      %v5678 = vpop.f32.mrf.mxu0
      %v5679 = vadd.f32 %v5158, %v5678
      %5680 = vmatmul.bf16.gmra.mxu0 %v3912
      %v5681 = vpop.f32.mrf.mxu0
      %v5682 = vadd.f32 %v5161, %v5681
      %v5683 = vpop.f32.mrf.mxu0
      %v5684 = vadd.f32 %v5163, %v5683
      %5685 = vmatmul.bf16.gmra.mxu0 %v3953
      %v5686 = vpop.f32.mrf.mxu0
      %v5687 = vadd.f32 %v5166, %v5686
      %v5688 = vpop.f32.mrf.mxu0
      %v5689 = vadd.f32 %v5168, %v5688
      %5690 = vmatmul.bf16.gmra.mxu0 %v3994
      %v5691 = vpop.f32.mrf.mxu0
      %v5692 = vadd.f32 %v5171, %v5691
      %v5693 = vpop.f32.mrf.mxu0
      %v5694 = vadd.f32 %v5173, %v5693
      %5695 = vmatmul.bf16.gmra.mxu0 %v4035
      %v5696 = vpop.f32.mrf.mxu0
      %v5697 = vadd.f32 %v5176, %v5696
      %v5698 = vpop.f32.mrf.mxu0
      %v5699 = vadd.f32 %v5178, %v5698
      %5700 = vmatmul.bf16.gmra.mxu0 %v4076
      %v5701 = vpop.f32.mrf.mxu0
      %v5702 = vadd.f32 %v5181, %v5701
      %v5703 = vpop.f32.mrf.mxu0
      %v5704 = vadd.f32 %v5183, %v5703
      %5705 = vmatmul.bf16.gmra.mxu0 %v4117
      %v5706 = vpop.f32.mrf.mxu0
      %v5707 = vadd.f32 %v5186, %v5706
      %v5708 = vpop.f32.mrf.mxu0
      %v5709 = vadd.f32 %v5188, %v5708
      %5710 = vmatmul.bf16.gmra.mxu0 %v4158
      %v5711 = vpop.f32.mrf.mxu0
      %v5712 = vadd.f32 %v5191, %v5711
      %v5713 = vpop.f32.mrf.mxu0
      %v5714 = vadd.f32 %v5193, %v5713
      %5715 = vmatmul.bf16.gmra.mxu0 %v4199
      %v5716 = vpop.f32.mrf.mxu0
      %v5717 = vadd.f32 %v5196, %v5716
      %v5718 = vpop.f32.mrf.mxu0
      %v5719 = vadd.f32 %v5198, %v5718
      %5720 = vmatmul.bf16.gmra.mxu0 %v4240
      %v5721 = vpop.f32.mrf.mxu0
      %v5722 = vadd.f32 %v5201, %v5721
      %v5723 = vpop.f32.mrf.mxu0
      %v5724 = vadd.f32 %v5203, %v5723
      %5725 = vmatmul.bf16.gmra.mxu0 %v4281
      %v5726 = vpop.f32.mrf.mxu0
      %v5727 = vadd.f32 %v5206, %v5726
      %v5728 = vpop.f32.mrf.mxu0
      %v5729 = vadd.f32 %v5208, %v5728
      %5730 = vmatmul.bf16.gmra.mxu0 %v4322
      %v5731 = vpop.f32.mrf.mxu0
      %v5732 = vadd.f32 %v5211, %v5731
      %v5733 = vpop.f32.mrf.mxu0
      %v5734 = vadd.f32 %v5213, %v5733
      %5735 = vmatmul.bf16.gmra.mxu0 %v4363
      %v5736 = vpop.f32.mrf.mxu0
      %v5737 = vadd.f32 %v5216, %v5736
      %v5738 = vpop.f32.mrf.mxu0
      %v5739 = vadd.f32 %v5218, %v5738
      %5740 = vmatmul.bf16.gmra.mxu0 %v4404
      %v5741 = vpop.f32.mrf.mxu0
      %v5742 = vadd.f32 %v5221, %v5741
      %v5743 = vpop.f32.mrf.mxu0
      %v5744 = vadd.f32 %v5223, %v5743
      %5745 = vmatmul.bf16.gmra.mxu0 %v4445
      %v5746 = vpop.f32.mrf.mxu0
      %v5747 = vadd.f32 %v5226, %v5746
      %v5748 = vpop.f32.mrf.mxu0
      %v5749 = vadd.f32 %v5228, %v5748
      %5750 = vmatmul.bf16.gmra.mxu0 %v4486
      %v5751 = vpop.f32.mrf.mxu0
      %v5752 = vadd.f32 %v5231, %v5751
      %v5753 = vpop.f32.mrf.mxu0
      %v5754 = vadd.f32 %v5233, %v5753
      %5755 = vdwg.mxu0
      %5756 = vmatpush.bf16.msra.mxu0 %v5538
      %5757 = vmatpush.bf16.msra.mxu0 %v5537
      %5758 = vmatpush.bf16.msra.mxu0 %v5536
      %5759 = vmatpush.bf16.msra.mxu0 %v5535
      %5760 = vmatpush.bf16.msra.mxu0 %v5534
      %5761 = vmatpush.bf16.msra.mxu0 %v5533
      %5762 = vmatpush.bf16.msra.mxu0 %v5532
      %5763 = vmatpush.bf16.msra.mxu0 %v5531
      %5764 = vmatmul.bf16.gmra.mxu0 %v1108
      %v5765 = vpop.f32.mrf.mxu0
      %v5766 = vadd.f32 %v5677, %v5765
      %v5767 = vpop.f32.mrf.mxu0
      %v5768 = vadd.f32 %v5679, %v5767
      %5769 = vmatmul.bf16.gmra.mxu0 %v3929
      %v5770 = vpop.f32.mrf.mxu0
      %v5771 = vadd.f32 %v5682, %v5770
      %v5772 = vpop.f32.mrf.mxu0
      %v5773 = vadd.f32 %v5684, %v5772
      %5774 = vmatmul.bf16.gmra.mxu0 %v3970
      %v5775 = vpop.f32.mrf.mxu0
      %v5776 = vadd.f32 %v5687, %v5775
      %v5777 = vpop.f32.mrf.mxu0
      %v5778 = vadd.f32 %v5689, %v5777
      %5779 = vmatmul.bf16.gmra.mxu0 %v4011
      %v5780 = vpop.f32.mrf.mxu0
      %v5781 = vadd.f32 %v5692, %v5780
      %v5782 = vpop.f32.mrf.mxu0
      %v5783 = vadd.f32 %v5694, %v5782
      %5784 = vmatmul.bf16.gmra.mxu0 %v4052
      %v5785 = vpop.f32.mrf.mxu0
      %v5786 = vadd.f32 %v5697, %v5785
      %v5787 = vpop.f32.mrf.mxu0
      %v5788 = vadd.f32 %v5699, %v5787
      %5789 = vmatmul.bf16.gmra.mxu0 %v4093
      %v5790 = vpop.f32.mrf.mxu0
      %v5791 = vadd.f32 %v5702, %v5790
      %v5792 = vpop.f32.mrf.mxu0
      %v5793 = vadd.f32 %v5704, %v5792
      %5794 = vmatmul.bf16.gmra.mxu0 %v4134
      %v5795 = vpop.f32.mrf.mxu0
      %v5796 = vadd.f32 %v5707, %v5795
      %v5797 = vpop.f32.mrf.mxu0
      %v5798 = vadd.f32 %v5709, %v5797
      %5799 = vmatmul.bf16.gmra.mxu0 %v4175
      %v5800 = vpop.f32.mrf.mxu0
      %v5801 = vadd.f32 %v5712, %v5800
      %v5802 = vpop.f32.mrf.mxu0
      %v5803 = vadd.f32 %v5714, %v5802
      %5804 = vmatmul.bf16.gmra.mxu0 %v4216
      %v5805 = vpop.f32.mrf.mxu0
      %v5806 = vadd.f32 %v5717, %v5805
      %v5807 = vpop.f32.mrf.mxu0
      %v5808 = vadd.f32 %v5719, %v5807
      %5809 = vmatmul.bf16.gmra.mxu0 %v4257
      %v5810 = vpop.f32.mrf.mxu0
      %v5811 = vadd.f32 %v5722, %v5810
      %v5812 = vpop.f32.mrf.mxu0
      %v5813 = vadd.f32 %v5724, %v5812
      %5814 = vmatmul.bf16.gmra.mxu0 %v4298
      %v5815 = vpop.f32.mrf.mxu0
      %v5816 = vadd.f32 %v5727, %v5815
      %v5817 = vpop.f32.mrf.mxu0
      %v5818 = vadd.f32 %v5729, %v5817
      %5819 = vmatmul.bf16.gmra.mxu0 %v4339
      %v5820 = vpop.f32.mrf.mxu0
      %v5821 = vadd.f32 %v5732, %v5820
      %v5822 = vpop.f32.mrf.mxu0
      %v5823 = vadd.f32 %v5734, %v5822
      %5824 = vmatmul.bf16.gmra.mxu0 %v4380
      %v5825 = vpop.f32.mrf.mxu0
      %v5826 = vadd.f32 %v5737, %v5825
      %v5827 = vpop.f32.mrf.mxu0
      %v5828 = vadd.f32 %v5739, %v5827
      %5829 = vmatmul.bf16.gmra.mxu0 %v4421
      %v5830 = vpop.f32.mrf.mxu0
      %v5831 = vadd.f32 %v5742, %v5830
      %v5832 = vpop.f32.mrf.mxu0
      %v5833 = vadd.f32 %v5744, %v5832
      %5834 = vmatmul.bf16.gmra.mxu0 %v4462
      %v5835 = vpop.f32.mrf.mxu0
      %v5836 = vadd.f32 %v5747, %v5835
      %v5837 = vpop.f32.mrf.mxu0
      %v5838 = vadd.f32 %v5749, %v5837
      %5839 = vmatmul.bf16.gmra.mxu0 %v4503
      %v5840 = vpop.f32.mrf.mxu0
      %v5841 = vadd.f32 %v5752, %v5840
      %v5842 = vpop.f32.mrf.mxu0
      %v5843 = vadd.f32 %v5754, %v5842
      %5844 = vdwg.mxu0
      %5845 = vmatpush.bf16.msra.mxu0 %v5546
      %5846 = vmatpush.bf16.msra.mxu0 %v5545
      %5847 = vmatpush.bf16.msra.mxu0 %v5544
      %5848 = vmatpush.bf16.msra.mxu0 %v5543
      %5849 = vmatpush.bf16.msra.mxu0 %v5542
      %5850 = vmatpush.bf16.msra.mxu0 %v5541
      %5851 = vmatpush.bf16.msra.mxu0 %v5540
      %5852 = vmatpush.bf16.msra.mxu0 %v5539
      %5853 = vmatmul.bf16.gmra.mxu0 %v1125
      %v5854 = vpop.f32.mrf.mxu0
      %v5855 = vadd.f32 %v5766, %v5854
      %v5856 = vpop.f32.mrf.mxu0
      %v5857 = vadd.f32 %v5768, %v5856
      %5858 = vmatmul.bf16.gmra.mxu0 %v3946
      %v5859 = vpop.f32.mrf.mxu0
      %v5860 = vadd.f32 %v5771, %v5859
      %v5861 = vpop.f32.mrf.mxu0
      %v5862 = vadd.f32 %v5773, %v5861
      %5863 = vmatmul.bf16.gmra.mxu0 %v3987
      %v5864 = vpop.f32.mrf.mxu0
      %v5865 = vadd.f32 %v5776, %v5864
      %v5866 = vpop.f32.mrf.mxu0
      %v5867 = vadd.f32 %v5778, %v5866
      %5868 = vmatmul.bf16.gmra.mxu0 %v4028
      %v5869 = vpop.f32.mrf.mxu0
      %v5870 = vadd.f32 %v5781, %v5869
      %v5871 = vpop.f32.mrf.mxu0
      %v5872 = vadd.f32 %v5783, %v5871
      %5873 = vmatmul.bf16.gmra.mxu0 %v4069
      %v5874 = vpop.f32.mrf.mxu0
      %v5875 = vadd.f32 %v5786, %v5874
      %v5876 = vpop.f32.mrf.mxu0
      %v5877 = vadd.f32 %v5788, %v5876
      %5878 = vmatmul.bf16.gmra.mxu0 %v4110
      %v5879 = vpop.f32.mrf.mxu0
      %v5880 = vadd.f32 %v5791, %v5879
      %v5881 = vpop.f32.mrf.mxu0
      %v5882 = vadd.f32 %v5793, %v5881
      %5883 = vmatmul.bf16.gmra.mxu0 %v4151
      %v5884 = vpop.f32.mrf.mxu0
      %v5885 = vadd.f32 %v5796, %v5884
      %v5886 = vpop.f32.mrf.mxu0
      %v5887 = vadd.f32 %v5798, %v5886
      %5888 = vmatmul.bf16.gmra.mxu0 %v4192
      %v5889 = vpop.f32.mrf.mxu0
      %v5890 = vadd.f32 %v5801, %v5889
      %v5891 = vpop.f32.mrf.mxu0
      %v5892 = vadd.f32 %v5803, %v5891
      %5893 = vmatmul.bf16.gmra.mxu0 %v4233
      %v5894 = vpop.f32.mrf.mxu0
      %v5895 = vadd.f32 %v5806, %v5894
      %v5896 = vpop.f32.mrf.mxu0
      %v5897 = vadd.f32 %v5808, %v5896
      %5898 = vmatmul.bf16.gmra.mxu0 %v4274
      %v5899 = vpop.f32.mrf.mxu0
      %v5900 = vadd.f32 %v5811, %v5899
      %v5901 = vpop.f32.mrf.mxu0
      %v5902 = vadd.f32 %v5813, %v5901
      %5903 = vmatmul.bf16.gmra.mxu0 %v4315
      %v5904 = vpop.f32.mrf.mxu0
      %v5905 = vadd.f32 %v5816, %v5904
      %v5906 = vpop.f32.mrf.mxu0
      %v5907 = vadd.f32 %v5818, %v5906
      %5908 = vmatmul.bf16.gmra.mxu0 %v4356
      %v5909 = vpop.f32.mrf.mxu0
      %v5910 = vadd.f32 %v5821, %v5909
      %v5911 = vpop.f32.mrf.mxu0
      %v5912 = vadd.f32 %v5823, %v5911
      %5913 = vmatmul.bf16.gmra.mxu0 %v4397
      %v5914 = vpop.f32.mrf.mxu0
      %v5915 = vadd.f32 %v5826, %v5914
      %v5916 = vpop.f32.mrf.mxu0
      %v5917 = vadd.f32 %v5828, %v5916
      %5918 = vmatmul.bf16.gmra.mxu0 %v4438
      %v5919 = vpop.f32.mrf.mxu0
      %v5920 = vadd.f32 %v5831, %v5919
      %v5921 = vpop.f32.mrf.mxu0
      %v5922 = vadd.f32 %v5833, %v5921
      %5923 = vmatmul.bf16.gmra.mxu0 %v4479
      %v5924 = vpop.f32.mrf.mxu0
      %v5925 = vadd.f32 %v5836, %v5924
      %v5926 = vpop.f32.mrf.mxu0
      %v5927 = vadd.f32 %v5838, %v5926
      %5928 = vmatmul.bf16.gmra.mxu0 %v4520
      %v5929 = vpop.f32.mrf.mxu0
      %v5930 = vadd.f32 %v5841, %v5929
      %v5931 = vpop.f32.mrf.mxu0
      %v5932 = vadd.f32 %v5843, %v5931
      %5933 = vdwg.mxu0
      %5934 = vmatpush.bf16.msra.mxu0 %v5554
      %5935 = vmatpush.bf16.msra.mxu0 %v5553
      %5936 = vmatpush.bf16.msra.mxu0 %v5552
      %5937 = vmatpush.bf16.msra.mxu0 %v5551
      %5938 = vmatpush.bf16.msra.mxu0 %v5550
      %5939 = vmatpush.bf16.msra.mxu0 %v5549
      %5940 = vmatpush.bf16.msra.mxu0 %v5548
      %5941 = vmatpush.bf16.msra.mxu0 %v5547
      %5942 = vmatmul.bf16.gmra.mxu0 %v3912
      %v5943 = vpop.f32.mrf.mxu0
      %v5944 = vadd.f32 %v5855, %v5943
      %v5945 = vpop.f32.mrf.mxu0
      %v5946 = vadd.f32 %v5857, %v5945
      %5947 = vmatmul.bf16.gmra.mxu0 %v3953
      %v5948 = vpop.f32.mrf.mxu0
      %v5949 = vadd.f32 %v5860, %v5948
      %v5950 = vpop.f32.mrf.mxu0
      %v5951 = vadd.f32 %v5862, %v5950
      %5952 = vmatmul.bf16.gmra.mxu0 %v3994
      %v5953 = vpop.f32.mrf.mxu0
      %v5954 = vadd.f32 %v5865, %v5953
      %v5955 = vpop.f32.mrf.mxu0
      %v5956 = vadd.f32 %v5867, %v5955
      %5957 = vmatmul.bf16.gmra.mxu0 %v4035
      %v5958 = vpop.f32.mrf.mxu0
      %v5959 = vadd.f32 %v5870, %v5958
      %v5960 = vpop.f32.mrf.mxu0
      %v5961 = vadd.f32 %v5872, %v5960
      %5962 = vmatmul.bf16.gmra.mxu0 %v4076
      %v5963 = vpop.f32.mrf.mxu0
      %v5964 = vadd.f32 %v5875, %v5963
      %v5965 = vpop.f32.mrf.mxu0
      %v5966 = vadd.f32 %v5877, %v5965
      %5967 = vmatmul.bf16.gmra.mxu0 %v4117
      %v5968 = vpop.f32.mrf.mxu0
      %v5969 = vadd.f32 %v5880, %v5968
      %v5970 = vpop.f32.mrf.mxu0
      %v5971 = vadd.f32 %v5882, %v5970
      %5972 = vmatmul.bf16.gmra.mxu0 %v4158
      %v5973 = vpop.f32.mrf.mxu0
      %v5974 = vadd.f32 %v5885, %v5973
      %v5975 = vpop.f32.mrf.mxu0
      %v5976 = vadd.f32 %v5887, %v5975
      %5977 = vmatmul.bf16.gmra.mxu0 %v4199
      %v5978 = vpop.f32.mrf.mxu0
      %v5979 = vadd.f32 %v5890, %v5978
      %v5980 = vpop.f32.mrf.mxu0
      %v5981 = vadd.f32 %v5892, %v5980
      %5982 = vmatmul.bf16.gmra.mxu0 %v4240
      %v5983 = vpop.f32.mrf.mxu0
      %v5984 = vadd.f32 %v5895, %v5983
      %v5985 = vpop.f32.mrf.mxu0
      %v5986 = vadd.f32 %v5897, %v5985
      %5987 = vmatmul.bf16.gmra.mxu0 %v4281
      %v5988 = vpop.f32.mrf.mxu0
      %v5989 = vadd.f32 %v5900, %v5988
      %v5990 = vpop.f32.mrf.mxu0
      %v5991 = vadd.f32 %v5902, %v5990
      %5992 = vmatmul.bf16.gmra.mxu0 %v4322
      %v5993 = vpop.f32.mrf.mxu0
      %v5994 = vadd.f32 %v5905, %v5993
      %v5995 = vpop.f32.mrf.mxu0
      %v5996 = vadd.f32 %v5907, %v5995
      %5997 = vmatmul.bf16.gmra.mxu0 %v4363
      %v5998 = vpop.f32.mrf.mxu0
      %v5999 = vadd.f32 %v5910, %v5998
      %v6000 = vpop.f32.mrf.mxu0
      %v6001 = vadd.f32 %v5912, %v6000
      %6002 = vmatmul.bf16.gmra.mxu0 %v4404
      %v6003 = vpop.f32.mrf.mxu0
      %v6004 = vadd.f32 %v5915, %v6003
      %v6005 = vpop.f32.mrf.mxu0
      %v6006 = vadd.f32 %v5917, %v6005
      %6007 = vmatmul.bf16.gmra.mxu0 %v4445
      %v6008 = vpop.f32.mrf.mxu0
      %v6009 = vadd.f32 %v5920, %v6008
      %v6010 = vpop.f32.mrf.mxu0
      %v6011 = vadd.f32 %v5922, %v6010
      %6012 = vmatmul.bf16.gmra.mxu0 %v4486
      %v6013 = vpop.f32.mrf.mxu0
      %v6014 = vadd.f32 %v5925, %v6013
      %v6015 = vpop.f32.mrf.mxu0
      %v6016 = vadd.f32 %v5927, %v6015
      %6017 = vmatmul.bf16.gmra.mxu0 %v4527
      %v6018 = vpop.f32.mrf.mxu0
      %v6019 = vadd.f32 %v5930, %v6018
      %v6020 = vpop.f32.mrf.mxu0
      %v6021 = vadd.f32 %v5932, %v6020
      %6022 = vdwg.mxu0
      %6023 = vmatpush.bf16.msra.mxu0 %v5562
      %6024 = vmatpush.bf16.msra.mxu0 %v5561
      %6025 = vmatpush.bf16.msra.mxu0 %v5560
      %6026 = vmatpush.bf16.msra.mxu0 %v5559
      %6027 = vmatpush.bf16.msra.mxu0 %v5558
      %6028 = vmatpush.bf16.msra.mxu0 %v5557
      %6029 = vmatpush.bf16.msra.mxu0 %v5556
      %6030 = vmatpush.bf16.msra.mxu0 %v5555
      %6031 = vmatmul.bf16.gmra.mxu0 %v3929
      %v6032 = vpop.f32.mrf.mxu0
      %v6033 = vadd.f32 %v5944, %v6032
      %v6034 = vpop.f32.mrf.mxu0
      %v6035 = vadd.f32 %v5946, %v6034
      %6036 = vmatmul.bf16.gmra.mxu0 %v3970
      %v6037 = vpop.f32.mrf.mxu0
      %v6038 = vadd.f32 %v5949, %v6037
      %v6039 = vpop.f32.mrf.mxu0
      %v6040 = vadd.f32 %v5951, %v6039
      %6041 = vmatmul.bf16.gmra.mxu0 %v4011
      %v6042 = vpop.f32.mrf.mxu0
      %v6043 = vadd.f32 %v5954, %v6042
      %v6044 = vpop.f32.mrf.mxu0
      %v6045 = vadd.f32 %v5956, %v6044
      %6046 = vmatmul.bf16.gmra.mxu0 %v4052
      %v6047 = vpop.f32.mrf.mxu0
      %v6048 = vadd.f32 %v5959, %v6047
      %v6049 = vpop.f32.mrf.mxu0
      %v6050 = vadd.f32 %v5961, %v6049
      %6051 = vmatmul.bf16.gmra.mxu0 %v4093
      %v6052 = vpop.f32.mrf.mxu0
      %v6053 = vadd.f32 %v5964, %v6052
      %v6054 = vpop.f32.mrf.mxu0
      %v6055 = vadd.f32 %v5966, %v6054
      %6056 = vmatmul.bf16.gmra.mxu0 %v4134
      %v6057 = vpop.f32.mrf.mxu0
      %v6058 = vadd.f32 %v5969, %v6057
      %v6059 = vpop.f32.mrf.mxu0
      %v6060 = vadd.f32 %v5971, %v6059
      %6061 = vmatmul.bf16.gmra.mxu0 %v4175
      %v6062 = vpop.f32.mrf.mxu0
      %v6063 = vadd.f32 %v5974, %v6062
      %v6064 = vpop.f32.mrf.mxu0
      %v6065 = vadd.f32 %v5976, %v6064
      %6066 = vmatmul.bf16.gmra.mxu0 %v4216
      %v6067 = vpop.f32.mrf.mxu0
      %v6068 = vadd.f32 %v5979, %v6067
      %v6069 = vpop.f32.mrf.mxu0
      %v6070 = vadd.f32 %v5981, %v6069
      %6071 = vmatmul.bf16.gmra.mxu0 %v4257
      %v6072 = vpop.f32.mrf.mxu0
      %v6073 = vadd.f32 %v5984, %v6072
      %v6074 = vpop.f32.mrf.mxu0
      %v6075 = vadd.f32 %v5986, %v6074
      %6076 = vmatmul.bf16.gmra.mxu0 %v4298
      %v6077 = vpop.f32.mrf.mxu0
      %v6078 = vadd.f32 %v5989, %v6077
      %v6079 = vpop.f32.mrf.mxu0
      %v6080 = vadd.f32 %v5991, %v6079
      %6081 = vmatmul.bf16.gmra.mxu0 %v4339
      %v6082 = vpop.f32.mrf.mxu0
      %v6083 = vadd.f32 %v5994, %v6082
      %v6084 = vpop.f32.mrf.mxu0
      %v6085 = vadd.f32 %v5996, %v6084
      %6086 = vmatmul.bf16.gmra.mxu0 %v4380
      %v6087 = vpop.f32.mrf.mxu0
      %v6088 = vadd.f32 %v5999, %v6087
      %v6089 = vpop.f32.mrf.mxu0
      %v6090 = vadd.f32 %v6001, %v6089
      %6091 = vmatmul.bf16.gmra.mxu0 %v4421
      %v6092 = vpop.f32.mrf.mxu0
      %v6093 = vadd.f32 %v6004, %v6092
      %v6094 = vpop.f32.mrf.mxu0
      %v6095 = vadd.f32 %v6006, %v6094
      %6096 = vmatmul.bf16.gmra.mxu0 %v4462
      %v6097 = vpop.f32.mrf.mxu0
      %v6098 = vadd.f32 %v6009, %v6097
      %v6099 = vpop.f32.mrf.mxu0
      %v6100 = vadd.f32 %v6011, %v6099
      %6101 = vmatmul.bf16.gmra.mxu0 %v4503
      %v6102 = vpop.f32.mrf.mxu0
      %v6103 = vadd.f32 %v6014, %v6102
      %v6104 = vpop.f32.mrf.mxu0
      %v6105 = vadd.f32 %v6016, %v6104
      %6106 = vmatmul.bf16.gmra.mxu0 %v4544
      %v6107 = vpop.f32.mrf.mxu0
      %v6108 = vadd.f32 %v6019, %v6107
      %v6109 = vpop.f32.mrf.mxu0
      %v6110 = vadd.f32 %v6021, %v6109
      %6111 = vdwg.mxu0
      %6112 = vmatpush.bf16.msra.mxu0 %v5570
      %6113 = vmatpush.bf16.msra.mxu0 %v5569
      %6114 = vmatpush.bf16.msra.mxu0 %v5568
      %6115 = vmatpush.bf16.msra.mxu0 %v5567
      %6116 = vmatpush.bf16.msra.mxu0 %v5566
      %6117 = vmatpush.bf16.msra.mxu0 %v5565
      %6118 = vmatpush.bf16.msra.mxu0 %v5564
      %6119 = vmatpush.bf16.msra.mxu0 %v5563
      %6120 = vmatmul.bf16.gmra.mxu0 %v3946
      %v6121 = vpop.f32.mrf.mxu0
      %v6122 = vadd.f32 %v6033, %v6121
      %v6123 = vpop.f32.mrf.mxu0
      %v6124 = vadd.f32 %v6035, %v6123
      %6125 = vmatmul.bf16.gmra.mxu0 %v3987
      %v6126 = vpop.f32.mrf.mxu0
      %v6127 = vadd.f32 %v6038, %v6126
      %v6128 = vpop.f32.mrf.mxu0
      %v6129 = vadd.f32 %v6040, %v6128
      %6130 = vmatmul.bf16.gmra.mxu0 %v4028
      %v6131 = vpop.f32.mrf.mxu0
      %v6132 = vadd.f32 %v6043, %v6131
      %v6133 = vpop.f32.mrf.mxu0
      %v6134 = vadd.f32 %v6045, %v6133
      %6135 = vmatmul.bf16.gmra.mxu0 %v4069
      %v6136 = vpop.f32.mrf.mxu0
      %v6137 = vadd.f32 %v6048, %v6136
      %v6138 = vpop.f32.mrf.mxu0
      %v6139 = vadd.f32 %v6050, %v6138
      %6140 = vmatmul.bf16.gmra.mxu0 %v4110
      %v6141 = vpop.f32.mrf.mxu0
      %v6142 = vadd.f32 %v6053, %v6141
      %v6143 = vpop.f32.mrf.mxu0
      %v6144 = vadd.f32 %v6055, %v6143
      %6145 = vmatmul.bf16.gmra.mxu0 %v4151
      %v6146 = vpop.f32.mrf.mxu0
      %v6147 = vadd.f32 %v6058, %v6146
      %v6148 = vpop.f32.mrf.mxu0
      %v6149 = vadd.f32 %v6060, %v6148
      %6150 = vmatmul.bf16.gmra.mxu0 %v4192
      %v6151 = vpop.f32.mrf.mxu0
      %v6152 = vadd.f32 %v6063, %v6151
      %v6153 = vpop.f32.mrf.mxu0
      %v6154 = vadd.f32 %v6065, %v6153
      %6155 = vmatmul.bf16.gmra.mxu0 %v4233
      %v6156 = vpop.f32.mrf.mxu0
      %v6157 = vadd.f32 %v6068, %v6156
      %v6158 = vpop.f32.mrf.mxu0
      %v6159 = vadd.f32 %v6070, %v6158
      %6160 = vmatmul.bf16.gmra.mxu0 %v4274
      %v6161 = vpop.f32.mrf.mxu0
      %v6162 = vadd.f32 %v6073, %v6161
      %v6163 = vpop.f32.mrf.mxu0
      %v6164 = vadd.f32 %v6075, %v6163
      %6165 = vmatmul.bf16.gmra.mxu0 %v4315
      %v6166 = vpop.f32.mrf.mxu0
      %v6167 = vadd.f32 %v6078, %v6166
      %v6168 = vpop.f32.mrf.mxu0
      %v6169 = vadd.f32 %v6080, %v6168
      %6170 = vmatmul.bf16.gmra.mxu0 %v4356
      %v6171 = vpop.f32.mrf.mxu0
      %v6172 = vadd.f32 %v6083, %v6171
      %v6173 = vpop.f32.mrf.mxu0
      %v6174 = vadd.f32 %v6085, %v6173
      %6175 = vmatmul.bf16.gmra.mxu0 %v4397
      %v6176 = vpop.f32.mrf.mxu0
      %v6177 = vadd.f32 %v6088, %v6176
      %v6178 = vpop.f32.mrf.mxu0
      %v6179 = vadd.f32 %v6090, %v6178
      %6180 = vmatmul.bf16.gmra.mxu0 %v4438
      %v6181 = vpop.f32.mrf.mxu0
      %v6182 = vadd.f32 %v6093, %v6181
      %v6183 = vpop.f32.mrf.mxu0
      %v6184 = vadd.f32 %v6095, %v6183
      %6185 = vmatmul.bf16.gmra.mxu0 %v4479
      %v6186 = vpop.f32.mrf.mxu0
      %v6187 = vadd.f32 %v6098, %v6186
      %v6188 = vpop.f32.mrf.mxu0
      %v6189 = vadd.f32 %v6100, %v6188
      %6190 = vmatmul.bf16.gmra.mxu0 %v4520
      %v6191 = vpop.f32.mrf.mxu0
      %v6192 = vadd.f32 %v6103, %v6191
      %v6193 = vpop.f32.mrf.mxu0
      %v6194 = vadd.f32 %v6105, %v6193
      %6195 = vmatmul.bf16.gmra.mxu0 %v4561
      %v6196 = vpop.f32.mrf.mxu0
      %v6197 = vadd.f32 %v6108, %v6196
      %v6198 = vpop.f32.mrf.mxu0
      %v6199 = vadd.f32 %v6110, %v6198
      %6200 = vdwg.mxu0
      %6201 = vmatpush.bf16.msra.mxu0 %v5578
      %6202 = vmatpush.bf16.msra.mxu0 %v5577
      %6203 = vmatpush.bf16.msra.mxu0 %v5576
      %6204 = vmatpush.bf16.msra.mxu0 %v5575
      %6205 = vmatpush.bf16.msra.mxu0 %v5574
      %6206 = vmatpush.bf16.msra.mxu0 %v5573
      %6207 = vmatpush.bf16.msra.mxu0 %v5572
      %6208 = vmatpush.bf16.msra.mxu0 %v5571
      %6209 = vmatmul.bf16.gmra.mxu0 %v3953
      %v6210 = vpop.f32.mrf.mxu0
      %v6211 = vadd.f32 %v6122, %v6210
      %v6212 = vpop.f32.mrf.mxu0
      %v6213 = vadd.f32 %v6124, %v6212
      %6214 = vmatmul.bf16.gmra.mxu0 %v3994
      %v6215 = vpop.f32.mrf.mxu0
      %v6216 = vadd.f32 %v6127, %v6215
      %v6217 = vpop.f32.mrf.mxu0
      %v6218 = vadd.f32 %v6129, %v6217
      %6219 = vmatmul.bf16.gmra.mxu0 %v4035
      %v6220 = vpop.f32.mrf.mxu0
      %v6221 = vadd.f32 %v6132, %v6220
      %v6222 = vpop.f32.mrf.mxu0
      %v6223 = vadd.f32 %v6134, %v6222
      %6224 = vmatmul.bf16.gmra.mxu0 %v4076
      %v6225 = vpop.f32.mrf.mxu0
      %v6226 = vadd.f32 %v6137, %v6225
      %v6227 = vpop.f32.mrf.mxu0
      %v6228 = vadd.f32 %v6139, %v6227
      %6229 = vmatmul.bf16.gmra.mxu0 %v4117
      %v6230 = vpop.f32.mrf.mxu0
      %v6231 = vadd.f32 %v6142, %v6230
      %v6232 = vpop.f32.mrf.mxu0
      %v6233 = vadd.f32 %v6144, %v6232
      %6234 = vmatmul.bf16.gmra.mxu0 %v4158
      %v6235 = vpop.f32.mrf.mxu0
      %v6236 = vadd.f32 %v6147, %v6235
      %v6237 = vpop.f32.mrf.mxu0
      %v6238 = vadd.f32 %v6149, %v6237
      %6239 = vmatmul.bf16.gmra.mxu0 %v4199
      %v6240 = vpop.f32.mrf.mxu0
      %v6241 = vadd.f32 %v6152, %v6240
      %v6242 = vpop.f32.mrf.mxu0
      %v6243 = vadd.f32 %v6154, %v6242
      %6244 = vmatmul.bf16.gmra.mxu0 %v4240
      %v6245 = vpop.f32.mrf.mxu0
      %v6246 = vadd.f32 %v6157, %v6245
      %v6247 = vpop.f32.mrf.mxu0
      %v6248 = vadd.f32 %v6159, %v6247
      %6249 = vmatmul.bf16.gmra.mxu0 %v4281
      %v6250 = vpop.f32.mrf.mxu0
      %v6251 = vadd.f32 %v6162, %v6250
      %v6252 = vpop.f32.mrf.mxu0
      %v6253 = vadd.f32 %v6164, %v6252
      %6254 = vmatmul.bf16.gmra.mxu0 %v4322
      %v6255 = vpop.f32.mrf.mxu0
      %v6256 = vadd.f32 %v6167, %v6255
      %v6257 = vpop.f32.mrf.mxu0
      %v6258 = vadd.f32 %v6169, %v6257
      %6259 = vmatmul.bf16.gmra.mxu0 %v4363
      %v6260 = vpop.f32.mrf.mxu0
      %v6261 = vadd.f32 %v6172, %v6260
      %v6262 = vpop.f32.mrf.mxu0
      %v6263 = vadd.f32 %v6174, %v6262
      %6264 = vmatmul.bf16.gmra.mxu0 %v4404
      %v6265 = vpop.f32.mrf.mxu0
      %v6266 = vadd.f32 %v6177, %v6265
      %v6267 = vpop.f32.mrf.mxu0
      %v6268 = vadd.f32 %v6179, %v6267
      %6269 = vmatmul.bf16.gmra.mxu0 %v4445
      %v6270 = vpop.f32.mrf.mxu0
      %v6271 = vadd.f32 %v6182, %v6270
      %v6272 = vpop.f32.mrf.mxu0
      %v6273 = vadd.f32 %v6184, %v6272
      %6274 = vmatmul.bf16.gmra.mxu0 %v4486
      %v6275 = vpop.f32.mrf.mxu0
      %v6276 = vadd.f32 %v6187, %v6275
      %v6277 = vpop.f32.mrf.mxu0
      %v6278 = vadd.f32 %v6189, %v6277
      %6279 = vmatmul.bf16.gmra.mxu0 %v4527
      %v6280 = vpop.f32.mrf.mxu0
      %v6281 = vadd.f32 %v6192, %v6280
      %v6282 = vpop.f32.mrf.mxu0
      %v6283 = vadd.f32 %v6194, %v6282
      %6284 = vmatmul.bf16.gmra.mxu0 %v1091
      %v6285 = vpop.f32.mrf.mxu0
      %v6286 = vadd.f32 %v6197, %v6285
      %v6287 = vpop.f32.mrf.mxu0
      %v6288 = vadd.f32 %v6199, %v6287
      %6289 = vdwg.mxu0
      %6290 = vmatpush.bf16.msra.mxu0 %v5586
      %6291 = vmatpush.bf16.msra.mxu0 %v5585
      %6292 = vmatpush.bf16.msra.mxu0 %v5584
      %6293 = vmatpush.bf16.msra.mxu0 %v5583
      %6294 = vmatpush.bf16.msra.mxu0 %v5582
      %6295 = vmatpush.bf16.msra.mxu0 %v5581
      %6296 = vmatpush.bf16.msra.mxu0 %v5580
      %6297 = vmatpush.bf16.msra.mxu0 %v5579
      %6298 = vmatmul.bf16.gmra.mxu0 %v3970
      %v6299 = vpop.f32.mrf.mxu0
      %v6300 = vadd.f32 %v6211, %v6299
      %v6301 = vpop.f32.mrf.mxu0
      %v6302 = vadd.f32 %v6213, %v6301
      %6303 = vmatmul.bf16.gmra.mxu0 %v4011
      %v6304 = vpop.f32.mrf.mxu0
      %v6305 = vadd.f32 %v6216, %v6304
      %v6306 = vpop.f32.mrf.mxu0
      %v6307 = vadd.f32 %v6218, %v6306
      %6308 = vmatmul.bf16.gmra.mxu0 %v4052
      %v6309 = vpop.f32.mrf.mxu0
      %v6310 = vadd.f32 %v6221, %v6309
      %v6311 = vpop.f32.mrf.mxu0
      %v6312 = vadd.f32 %v6223, %v6311
      %6313 = vmatmul.bf16.gmra.mxu0 %v4093
      %v6314 = vpop.f32.mrf.mxu0
      %v6315 = vadd.f32 %v6226, %v6314
      %v6316 = vpop.f32.mrf.mxu0
      %v6317 = vadd.f32 %v6228, %v6316
      %6318 = vmatmul.bf16.gmra.mxu0 %v4134
      %v6319 = vpop.f32.mrf.mxu0
      %v6320 = vadd.f32 %v6231, %v6319
      %v6321 = vpop.f32.mrf.mxu0
      %v6322 = vadd.f32 %v6233, %v6321
      %6323 = vmatmul.bf16.gmra.mxu0 %v4175
      %v6324 = vpop.f32.mrf.mxu0
      %v6325 = vadd.f32 %v6236, %v6324
      %v6326 = vpop.f32.mrf.mxu0
      %v6327 = vadd.f32 %v6238, %v6326
      %6328 = vmatmul.bf16.gmra.mxu0 %v4216
      %v6329 = vpop.f32.mrf.mxu0
      %v6330 = vadd.f32 %v6241, %v6329
      %v6331 = vpop.f32.mrf.mxu0
      %v6332 = vadd.f32 %v6243, %v6331
      %6333 = vmatmul.bf16.gmra.mxu0 %v4257
      %v6334 = vpop.f32.mrf.mxu0
      %v6335 = vadd.f32 %v6246, %v6334
      %v6336 = vpop.f32.mrf.mxu0
      %v6337 = vadd.f32 %v6248, %v6336
      %6338 = vmatmul.bf16.gmra.mxu0 %v4298
      %v6339 = vpop.f32.mrf.mxu0
      %v6340 = vadd.f32 %v6251, %v6339
      %v6341 = vpop.f32.mrf.mxu0
      %v6342 = vadd.f32 %v6253, %v6341
      %6343 = vmatmul.bf16.gmra.mxu0 %v4339
      %v6344 = vpop.f32.mrf.mxu0
      %v6345 = vadd.f32 %v6256, %v6344
      %v6346 = vpop.f32.mrf.mxu0
      %v6347 = vadd.f32 %v6258, %v6346
      %6348 = vmatmul.bf16.gmra.mxu0 %v4380
      %v6349 = vpop.f32.mrf.mxu0
      %v6350 = vadd.f32 %v6261, %v6349
      %v6351 = vpop.f32.mrf.mxu0
      %v6352 = vadd.f32 %v6263, %v6351
      %6353 = vmatmul.bf16.gmra.mxu0 %v4421
      %v6354 = vpop.f32.mrf.mxu0
      %v6355 = vadd.f32 %v6266, %v6354
      %v6356 = vpop.f32.mrf.mxu0
      %v6357 = vadd.f32 %v6268, %v6356
      %6358 = vmatmul.bf16.gmra.mxu0 %v4462
      %v6359 = vpop.f32.mrf.mxu0
      %v6360 = vadd.f32 %v6271, %v6359
      %v6361 = vpop.f32.mrf.mxu0
      %v6362 = vadd.f32 %v6273, %v6361
      %6363 = vmatmul.bf16.gmra.mxu0 %v4503
      %v6364 = vpop.f32.mrf.mxu0
      %v6365 = vadd.f32 %v6276, %v6364
      %v6366 = vpop.f32.mrf.mxu0
      %v6367 = vadd.f32 %v6278, %v6366
      %6368 = vmatmul.bf16.gmra.mxu0 %v4544
      %v6369 = vpop.f32.mrf.mxu0
      %v6370 = vadd.f32 %v6281, %v6369
      %v6371 = vpop.f32.mrf.mxu0
      %v6372 = vadd.f32 %v6283, %v6371
      %6373 = vmatmul.bf16.gmra.mxu0 %v1108
      %v6374 = vpop.f32.mrf.mxu0
      %v6375 = vadd.f32 %v6286, %v6374
      %v6376 = vpop.f32.mrf.mxu0
      %v6377 = vadd.f32 %v6288, %v6376
      %6378 = vdwg.mxu0
      %6379 = vmatpush.bf16.msra.mxu0 %v5594
      %6380 = vmatpush.bf16.msra.mxu0 %v5593
      %6381 = vmatpush.bf16.msra.mxu0 %v5592
      %6382 = vmatpush.bf16.msra.mxu0 %v5591
      %6383 = vmatpush.bf16.msra.mxu0 %v5590
      %6384 = vmatpush.bf16.msra.mxu0 %v5589
      %6385 = vmatpush.bf16.msra.mxu0 %v5588
      %6386 = vmatpush.bf16.msra.mxu0 %v5587
      %6387 = vmatmul.bf16.gmra.mxu0 %v3987
      %v6388 = vpop.f32.mrf.mxu0
      %v6389 = vadd.f32 %v6300, %v6388
      %v6390 = vpop.f32.mrf.mxu0
      %v6391 = vadd.f32 %v6302, %v6390
      %6392 = vmatmul.bf16.gmra.mxu0 %v4028
      %v6393 = vpop.f32.mrf.mxu0
      %v6394 = vadd.f32 %v6305, %v6393
      %v6395 = vpop.f32.mrf.mxu0
      %v6396 = vadd.f32 %v6307, %v6395
      %6397 = vmatmul.bf16.gmra.mxu0 %v4069
      %v6398 = vpop.f32.mrf.mxu0
      %v6399 = vadd.f32 %v6310, %v6398
      %v6400 = vpop.f32.mrf.mxu0
      %v6401 = vadd.f32 %v6312, %v6400
      %6402 = vmatmul.bf16.gmra.mxu0 %v4110
      %v6403 = vpop.f32.mrf.mxu0
      %v6404 = vadd.f32 %v6315, %v6403
      %v6405 = vpop.f32.mrf.mxu0
      %v6406 = vadd.f32 %v6317, %v6405
      %6407 = vmatmul.bf16.gmra.mxu0 %v4151
      %v6408 = vpop.f32.mrf.mxu0
      %v6409 = vadd.f32 %v6320, %v6408
      %v6410 = vpop.f32.mrf.mxu0
      %v6411 = vadd.f32 %v6322, %v6410
      %6412 = vmatmul.bf16.gmra.mxu0 %v4192
      %v6413 = vpop.f32.mrf.mxu0
      %v6414 = vadd.f32 %v6325, %v6413
      %v6415 = vpop.f32.mrf.mxu0
      %v6416 = vadd.f32 %v6327, %v6415
      %6417 = vmatmul.bf16.gmra.mxu0 %v4233
      %v6418 = vpop.f32.mrf.mxu0
      %v6419 = vadd.f32 %v6330, %v6418
      %v6420 = vpop.f32.mrf.mxu0
      %v6421 = vadd.f32 %v6332, %v6420
      %6422 = vmatmul.bf16.gmra.mxu0 %v4274
      %v6423 = vpop.f32.mrf.mxu0
      %v6424 = vadd.f32 %v6335, %v6423
      %v6425 = vpop.f32.mrf.mxu0
      %v6426 = vadd.f32 %v6337, %v6425
      %6427 = vmatmul.bf16.gmra.mxu0 %v4315
      %v6428 = vpop.f32.mrf.mxu0
      %v6429 = vadd.f32 %v6340, %v6428
      %v6430 = vpop.f32.mrf.mxu0
      %v6431 = vadd.f32 %v6342, %v6430
      %6432 = vmatmul.bf16.gmra.mxu0 %v4356
      %v6433 = vpop.f32.mrf.mxu0
      %v6434 = vadd.f32 %v6345, %v6433
      %v6435 = vpop.f32.mrf.mxu0
      %v6436 = vadd.f32 %v6347, %v6435
      %6437 = vmatmul.bf16.gmra.mxu0 %v4397
      %v6438 = vpop.f32.mrf.mxu0
      %v6439 = vadd.f32 %v6350, %v6438
      %v6440 = vpop.f32.mrf.mxu0
      %v6441 = vadd.f32 %v6352, %v6440
      %6442 = vmatmul.bf16.gmra.mxu0 %v4438
      %v6443 = vpop.f32.mrf.mxu0
      %v6444 = vadd.f32 %v6355, %v6443
      %v6445 = vpop.f32.mrf.mxu0
      %v6446 = vadd.f32 %v6357, %v6445
      %6447 = vmatmul.bf16.gmra.mxu0 %v4479
      %v6448 = vpop.f32.mrf.mxu0
      %v6449 = vadd.f32 %v6360, %v6448
      %v6450 = vpop.f32.mrf.mxu0
      %v6451 = vadd.f32 %v6362, %v6450
      %6452 = vmatmul.bf16.gmra.mxu0 %v4520
      %v6453 = vpop.f32.mrf.mxu0
      %v6454 = vadd.f32 %v6365, %v6453
      %v6455 = vpop.f32.mrf.mxu0
      %v6456 = vadd.f32 %v6367, %v6455
      %6457 = vmatmul.bf16.gmra.mxu0 %v4561
      %v6458 = vpop.f32.mrf.mxu0
      %v6459 = vadd.f32 %v6370, %v6458
      %v6460 = vpop.f32.mrf.mxu0
      %v6461 = vadd.f32 %v6372, %v6460
      %6462 = vmatmul.bf16.gmra.mxu0 %v1125
      %v6463 = vpop.f32.mrf.mxu0
      %v6464 = vadd.f32 %v6375, %v6463
      %v6465 = vpop.f32.mrf.mxu0
      %v6466 = vadd.f32 %v6377, %v6465
      %6467 = vdwg.mxu0
      %v6468 = vmax.f32 %v6389, 0.0
      %v6469 = vmax.f32 %v6391, 0.0
      %v6470 = vmax.f32 %v6394, 0.0
      %v6471 = vmax.f32 %v6396, 0.0
      %v6472 = vmax.f32 %v6399, 0.0
      %v6473 = vmax.f32 %v6401, 0.0
      %v6474 = vmax.f32 %v6404, 0.0
      %v6475 = vmax.f32 %v6406, 0.0
      %v6476 = vmax.f32 %v6409, 0.0
      %v6477 = vmax.f32 %v6411, 0.0
      %v6478 = vmax.f32 %v6414, 0.0
      %v6479 = vmax.f32 %v6416, 0.0
      %v6480 = vmax.f32 %v6419, 0.0
      %v6481 = vmax.f32 %v6421, 0.0
      %v6482 = vmax.f32 %v6424, 0.0
      %v6483 = vmax.f32 %v6426, 0.0
      %v6484 = vmax.f32 %v6429, 0.0
      %v6485 = vmax.f32 %v6431, 0.0
      %v6486 = vmax.f32 %v6434, 0.0
      %v6487 = vmax.f32 %v6436, 0.0
      %v6488 = vmax.f32 %v6439, 0.0
      %v6489 = vmax.f32 %v6441, 0.0
      %v6490 = vmax.f32 %v6444, 0.0
      %v6491 = vmax.f32 %v6446, 0.0
      %v6492 = vmax.f32 %v6449, 0.0
      %v6493 = vmax.f32 %v6451, 0.0
      %v6494 = vmax.f32 %v6454, 0.0
      %v6495 = vmax.f32 %v6456, 0.0
      %v6496 = vmax.f32 %v6459, 0.0
      %v6497 = vmax.f32 %v6461, 0.0
      %v6498 = vmax.f32 %v6464, 0.0
      %v6499 = vmax.f32 %v6466, 0.0
      %6500 = vst [vmem:[%s359] sm:$0xff] %v6468
      %6501 = vst [vmem:[%s359 + $0x8] sm:$0xff] %v6469
      %6502 = vst [vmem:[%s359 + $0x10] sm:$0xff] %v6470
      %6503 = vst [vmem:[%s359 + $0x18] sm:$0xff] %v6471
      %6504 = vst [vmem:[%s359 + $0x20] sm:$0xff] %v6472
      %6505 = vst [vmem:[%s359 + $0x28] sm:$0xff] %v6473
      %6506 = vst [vmem:[%s359 + $0x30] sm:$0xff] %v6474
      %6507 = vst [vmem:[%s359 + $0x38] sm:$0xff] %v6475
      %6508 = vst [vmem:[%s359 + $0x40] sm:$0xff] %v6476
      %6509 = vst [vmem:[%s359 + $0x48] sm:$0xff] %v6477
      %6510 = vst [vmem:[%s359 + $0x50] sm:$0xff] %v6478
      %6511 = vst [vmem:[%s359 + $0x58] sm:$0xff] %v6479
      %6512 = vst [vmem:[%s359 + $0x60] sm:$0xff] %v6480
      %6513 = vst [vmem:[%s359 + $0x68] sm:$0xff] %v6481
      %6514 = vst [vmem:[%s359 + $0x70] sm:$0xff] %v6482
      %6515 = vst [vmem:[%s359 + $0x78] sm:$0xff] %v6483
      %6516 = vst [vmem:[%s359 + $0x80] sm:$0xff] %v6484
      %6517 = vst [vmem:[%s359 + $0x88] sm:$0xff] %v6485
      %6518 = vst [vmem:[%s359 + $0x90] sm:$0xff] %v6486
      %6519 = vst [vmem:[%s359 + $0x98] sm:$0xff] %v6487
      %6520 = vst [vmem:[%s359 + $0xa0] sm:$0xff] %v6488
      %6521 = vst [vmem:[%s359 + $0xa8] sm:$0xff] %v6489
      %6522 = vst [vmem:[%s359 + $0xb0] sm:$0xff] %v6490
      %6523 = vst [vmem:[%s359 + $0xb8] sm:$0xff] %v6491
      %6524 = vst [vmem:[%s359 + $0xc0] sm:$0xff] %v6492
      %6525 = vst [vmem:[%s359 + $0xc8] sm:$0xff] %v6493
      %6526 = vst [vmem:[%s359 + $0xd0] sm:$0xff] %v6494
      %6527 = vst [vmem:[%s359 + $0xd8] sm:$0xff] %v6495
      %6528 = vst [vmem:[%s359 + $0xe0] sm:$0xff] %v6496
      %6529 = vst [vmem:[%s359 + $0xe8] sm:$0xff] %v6497
      %6530 = vst [vmem:[%s359 + $0xf0] sm:$0xff] %v6498
      %6531 = vst [vmem:[%s359 + $0xf8] sm:$0xff] %v6499
      %p6532 = scmp.lt.s32.totalorder %s21, 1
      %s6533 = scalar_select %p6532, %s21, 1
      %s6534 = smul.addr %s6533, 32
      %s6535 = smul.addr %s6534, 8
      %s6536 = scalar_lea.vmem %s10, %s6535
      // Predicated region
      $region61: #{bin_basic_block_forward.1} parent=59 // pred_check
        %p6537 = pneg %p254
      $region62: #{bin_basic_block_forward.1} parent=59 // pred_check_branch
        %6539 = sbr.rel (%p6537) target = $region64
      $region63: #{bin_basic_block_forward.1} parent=59 // pred_region
        _
      $region64: #{bin_basic_block_forward.1} parent=59 // pred_fallthru
        _
    $region60: #{bin_basic_block_forward.1} parent=5 // pred_fallthru
      _
    %p6540 = scmp.le.s32.totalorder 2, %s16
    // Predicated region
    $region65: #{bin_basic_block_forward.1} parent=5 // pred_check
      %p6541 = pneg %p6540
    $region66: #{bin_basic_block_forward.1} parent=5 // pred_check_branch
      %6543 = sbr.rel (%p6541) target = $region68
    $region67: #{bin_basic_block_forward.1} parent=5 // pred_region
      %s6544 = ssub.s32 %s16, 2
      // Predicated region
      $region69: #{bin_basic_block_forward.1} parent=67 // pred_check
        %p6545 = pneg %p260
      $region70: #{bin_basic_block_forward.1} parent=67 // pred_check_branch
        %6547 = sbr.rel (%p6545) target = $region72
      $region71: #{bin_basic_block_forward.1} parent=67 // pred_region
        %p6548 = scmp.lt.s32.totalorder %s22, 1
        %s6549 = scalar_select %p6548, %s22, 1
        %s6550 = smul.addr %s6549, 32
        %s6551 = smul.addr %s6550, 8
        %s6552 = scalar_lea.vmem %s10, %s6551
      $region72: #{bin_basic_block_forward.1} parent=67 // pred_fallthru
        _
    $region68: #{bin_basic_block_forward.1} parent=5 // pred_fallthru
      _
  $region6: #{bin_basic_block_forward.1} parent=0 // loop_footer
    %s20 = sadd.s32 1, %s16
  $region7: #{bin_basic_block_forward.1} parent=0 // loop_footer_branch
    %15 = sbr.rel target = $region3
  $region8: #{bin_basic_block_forward.1} parent=0 // loop_exit
    _

</llo_original>
